<compile_context>
chip_gen: v5e
topology: v5e:2x2
jax: 0.10.0
libtpu: 0.0.40
codegen_flags: <defaults>
</compile_context>

<pallas_src>
import functools

import jax
import jax.numpy as jnp
from jax.experimental import pallas as pl
from jax.experimental.pallas import tpu as pltpu


# ---------------------------------------------------------------------------
# Pallas kernel 1: fused (pre-activation -> MXU matmul -> +bias -> post-activation).
# Implements both Conv2d(4,2,1) and ConvTranspose2d(4,2,1) after the JAX-side
# space-to-depth / im2col re-layout done in the wrappers below.
# ---------------------------------------------------------------------------
def matmul_bias_act_kernel(p_ref, w_ref, b_ref, o_ref, *, pre_act, post_act):
    # p_ref: (1, M, K)     bf16  im2col patches of one batch element (M = out pixels)
    # w_ref: (K, Cout)     bf16  flattened conv taps
    # b_ref: (1, Cout)     f32
    # o_ref: (1, M, Cout)  f32
    x = p_ref[0]
    if pre_act == "leaky":            # LeakyReLU(0.2) fused onto the conv input
        x = jnp.where(x > 0, x, 0.2 * x)
    elif pre_act == "relu":           # ReLU fused onto the conv input
        x = jnp.maximum(x, 0.0)
    acc = jnp.dot(x, w_ref[...], preferred_element_type=jnp.float32)
    acc = acc + b_ref[...]
    if post_act == "tanh":
        acc = jnp.tanh(acc)
    o_ref[0] = acc


def fused_conv_matmul(patches, w_flat, bias, pre_act, post_act):
    # patches: (N, M, K) bf16 ; w_flat: (K, Cout) bf16 ; bias: (Cout,) f32
    N, M, K = patches.shape
    Cout = w_flat.shape[1]
    b2 = bias.reshape(1, Cout).astype(jnp.float32)
    kern = functools.partial(matmul_bias_act_kernel,
                             pre_act=pre_act, post_act=post_act)
    return pl.pallas_call(
        kern,
        out_shape=jax.ShapeDtypeStruct((N, M, Cout), jnp.float32),
        grid=(N,),
        in_specs=[
            pl.BlockSpec((1, M, K), lambda n: (n, 0, 0)),
            pl.BlockSpec((K, Cout), lambda n: (0, 0)),
            pl.BlockSpec((1, Cout), lambda n: (0, 0)),
        ],
        out_specs=pl.BlockSpec((1, M, Cout), lambda n: (n, 0, 0)),
        compiler_params=pltpu.CompilerParams(
            dimension_semantics=("parallel",)),
    )(patches, w_flat, b2)


# ---------------------------------------------------------------------------
# Pallas kernel 2: BatchNorm2d forward (training-mode batch statistics, affine, eps=1e-5).
# Operates on the tensor flattened to (N*H*W, C) so the reduction is a clean axis-0 reduce.
# ---------------------------------------------------------------------------
def batchnorm_kernel(x_ref, g_ref, b_ref, o_ref):
    x = x_ref[...]                                   # (M, C) f32
    mean = jnp.mean(x, axis=0, keepdims=True)
    xc = x - mean
    var = jnp.mean(xc * xc, axis=0, keepdims=True)   # biased variance (PyTorch forward)
    inv = jax.lax.rsqrt(var + 1e-5)
    o_ref[...] = xc * inv * g_ref[...] + b_ref[...]


def batchnorm2d(x, gamma, beta):
    # TODO(synk): running_mean/running_var buffer updates (momentum) are not tracked;
    # forward uses batch statistics (PyTorch training-mode default).
    N, H, W, C = x.shape
    out = pl.pallas_call(
        batchnorm_kernel,
        out_shape=jax.ShapeDtypeStruct((N * H * W, C), jnp.float32),
        in_specs=[pl.BlockSpec(memory_space=pltpu.MemorySpace.VMEM)] * 3,
        out_specs=pl.BlockSpec(memory_space=pltpu.MemorySpace.VMEM),
    )(x.reshape(N * H * W, C), gamma.reshape(1, C), beta.reshape(1, C))
    return out.reshape(N, H, W, C)


# ---------------------------------------------------------------------------
# JAX data-movement glue (pad / space-to-depth / im2col / depth-to-space / crop)
# ---------------------------------------------------------------------------
def _space_to_depth(x):
    # (N, 2A, 2B, K) -> (N, A, B, 4K); depth index = (2*iy + ix)*K + k
    N, H, W, K = x.shape
    x = x.reshape(N, H // 2, 2, W // 2, 2, K).transpose(0, 1, 3, 2, 4, 5)
    return x.reshape(N, H // 2, W // 2, 4 * K)


def _depth_to_space(x):
    # inverse of _space_to_depth: (N, A, B, 4K) -> (N, 2A, 2B, K)
    N, A, B, K4 = x.shape
    K = K4 // 4
    x = x.reshape(N, A, B, 2, 2, K).transpose(0, 1, 3, 2, 4, 5)
    return x.reshape(N, 2 * A, 2 * B, K)


def _im2col_2x2(x):
    # x: (N, R+1, C+1, K) -> (N, R*C, 4K); tap order t = 2*dy + dx
    N, Rp1, Cp1, K = x.shape
    R, C = Rp1 - 1, Cp1 - 1
    taps = [x[:, dy:dy + R, dx:dx + C, :] for dy in (0, 1) for dx in (0, 1)]
    return jnp.concatenate(taps, axis=-1).reshape(N, R * C, 4 * K)


# ---------------------------------------------------------------------------
# Conv2d(Cin, Cout, kernel_size=4, stride=2, padding=1)  [+ fused input activation]
# Rewritten as: pad(1) + space-to-depth  =>  2x2 stride-1 conv  =>  single im2col matmul.
# ---------------------------------------------------------------------------
def conv_down(x, w, b, pre_act):
    # x: (N, H, W, Cin) f32 (H, W even); w: (Cout, Cin, 4, 4) PyTorch layout; b: (Cout,)
    N, H, W, Cin = x.shape
    Cout = w.shape[0]
    xp = jnp.pad(x, ((0, 0), (1, 1), (1, 1), (0, 0)))
    s2d = _space_to_depth(xp).astype(jnp.bfloat16)          # (N, H/2+1, W/2+1, 4Cin)
    patches = _im2col_2x2(s2d)                              # (N, (H/2)*(W/2), 16Cin)
    # tap (by,bx) of the equivalent 2x2 conv uses w[co, ci, 2by+iy, 2bx+ix]
    w6 = w.reshape(Cout, Cin, 2, 2, 2, 2)                   # (co, ci, by, iy, bx, ix)
    w_flat = (w6.transpose(2, 4, 3, 5, 1, 0)                # (by, bx, iy, ix, ci, co)
                .reshape(16 * Cin, Cout).astype(jnp.bfloat16))
    out = fused_conv_matmul(patches, w_flat, b, pre_act, None)
    return out.reshape(N, H // 2, W // 2, Cout)


# ---------------------------------------------------------------------------
# ConvTranspose2d(Cin, Cout, kernel_size=4, stride=2, padding=1)
# [+ fused input activation and optional fused Tanh]
# Adjoint trick: 2x2 stride-1 conv over the 1-padded input producing 4*Cout "phase"
# channels, then depth-to-space and crop of the padding ring.
# ---------------------------------------------------------------------------
def conv_transpose_up(x, w, b, pre_act, post_act):
    # x: (N, Hi, Wi, Cin) f32; w: (Cin, Cout, 4, 4) PyTorch ConvTranspose2d layout; b: (Cout,)
    N, Hi, Wi, Cin = x.shape
    Cout = w.shape[1]
    xp = jnp.pad(x, ((0, 0), (1, 1), (1, 1), (0, 0))).astype(jnp.bfloat16)
    patches = _im2col_2x2(xp)                               # (N, (Hi+1)*(Wi+1), 4Cin)
    # output phase (iy,ix) at tap (by',bx') uses w[ci, co, 2*(1-by')+iy, 2*(1-bx')+ix]
    w6 = w.reshape(Cin, Cout, 2, 2, 2, 2)                   # (ci, co, by, iy, bx, ix)
    w6 = w6.transpose(2, 4, 0, 3, 5, 1)                     # (by, bx, ci, iy, ix, co)
    w6 = w6[::-1, ::-1]                                     # tap flip: by'=1-by, bx'=1-bx
    w_flat = w6.reshape(4 * Cin, 4 * Cout).astype(jnp.bfloat16)
    b4 = jnp.tile(b, 4)                                     # bias replicated per phase
    out = fused_conv_matmul(patches, w_flat, b4, pre_act, post_act)
    out = out.reshape(N, Hi + 1, Wi + 1, 4 * Cout)
    full = _depth_to_space(out)                             # (N, 2Hi+2, 2Wi+2, Cout)
    return full[:, 1:-1, 1:-1, :]                           # crop the padding ring


# ---------------------------------------------------------------------------
# UnetSkipConnectionBlock: parameters + forward (norm_layer = BatchNorm2d => use_bias=False)
# ---------------------------------------------------------------------------
def init_unet_block(key, outer_nc, inner_nc, input_nc=None, submodule=None,
                    outermost=False, innermost=False):
    if input_nc is None:
        input_nc = outer_nc
    k_dw, k_uw, k_ub = jax.random.split(key, 3)
    p = {"outermost": outermost, "innermost": innermost, "submodule": submodule}
    # downconv = Conv2d(input_nc, inner_nc, 4, 2, 1, bias=use_bias=False)
    p["down_w"] = 0.02 * jax.random.normal(k_dw, (inner_nc, input_nc, 4, 4), jnp.float32)
    p["down_b"] = jnp.zeros((inner_nc,), jnp.float32)
    up_in = inner_nc if innermost else 2 * inner_nc
    # upconv = ConvTranspose2d(up_in, outer_nc, 4, 2, 1, bias = True iff outermost)
    p["up_w"] = 0.02 * jax.random.normal(k_uw, (up_in, outer_nc, 4, 4), jnp.float32)
    p["up_b"] = (0.02 * jax.random.normal(k_ub, (outer_nc,), jnp.float32)
                 if outermost else jnp.zeros((outer_nc,), jnp.float32))
    if not outermost and not innermost:                     # downnorm
        p["down_gamma"] = jnp.ones((inner_nc,), jnp.float32)
        p["down_beta"] = jnp.zeros((inner_nc,), jnp.float32)
    if not outermost:                                       # upnorm
        p["up_gamma"] = jnp.ones((outer_nc,), jnp.float32)
        p["up_beta"] = jnp.zeros((outer_nc,), jnp.float32)
    return p


def unet_block_apply(p, x):
    """Forward of one UnetSkipConnectionBlock on NHWC input x."""
    if p["outermost"]:
        h = conv_down(x, p["down_w"], p["down_b"], pre_act=None)            # [downconv]
        h = unet_block_apply(p["submodule"], h)
        h = conv_transpose_up(h, p["up_w"], p["up_b"],
                              pre_act="relu", post_act="tanh")              # [relu, upconv, tanh]
        return h                                                            # no skip concat
    if p["innermost"]:
        h = conv_down(x, p["down_w"], p["down_b"], pre_act="leaky")         # [lrelu, downconv]
        h = conv_transpose_up(h, p["up_w"], p["up_b"],
                              pre_act="relu", post_act=None)                # [relu, upconv]
        h = batchnorm2d(h, p["up_gamma"], p["up_beta"])                     # upnorm
        return jnp.concatenate([x, h], axis=-1)                             # skip connection
    # intermediate block
    h = conv_down(x, p["down_w"], p["down_b"], pre_act="leaky")             # [lrelu, downconv]
    h = batchnorm2d(h, p["down_gamma"], p["down_beta"])                     # downnorm
    h = unet_block_apply(p["submodule"], h)
    h = conv_transpose_up(h, p["up_w"], p["up_b"],
                          pre_act="relu", post_act=None)                    # [relu, upconv]
    h = batchnorm2d(h, p["up_gamma"], p["up_beta"])                         # upnorm
    # TODO(synk): use_dropout=True branch (nn.Dropout(0.5)) treated as identity (eval semantics).
    return jnp.concatenate([x, h], axis=-1)                                 # skip connection


def unet_forward(params, x_nchw):
    x = jnp.transpose(x_nchw, (0, 2, 3, 1)).astype(jnp.float32)   # NCHW -> NHWC
    y = unet_block_apply(params, x)
    return jnp.transpose(y, (0, 3, 1, 2))                         # NHWC -> NCHW


if __name__ == "__main__":
    key = jax.random.PRNGKey(0)
    k_in, k_mid, k_out, k_x = jax.random.split(key, 4)
    # 3-level nested U-Net built from UnetSkipConnectionBlocks (ngf=16):
    #   innermost(32->64) inside intermediate(16->32) inside outermost(4->16->4).
    inner = init_unet_block(k_in, outer_nc=32, inner_nc=64, innermost=True)
    mid = init_unet_block(k_mid, outer_nc=16, inner_nc=32, submodule=inner)
    outer = init_unet_block(k_out, outer_nc=4, inner_nc=16, input_nc=4,
                            submodule=mid, outermost=True)

    x = jax.random.normal(k_x, (2, 4, 16, 16), jnp.float32)       # NCHW like PyTorch

    fwd = jax.jit(lambda inp: unet_forward(outer, inp))           # static block structure
    y = fwd(x)
    jax.block_until_ready(y)

    assert y.shape == (2, 4, 16, 16) and y.dtype == jnp.float32
    assert bool(jnp.all(jnp.isfinite(y)))
    assert bool(jnp.all(jnp.abs(y) <= 1.0 + 1e-5))                # outermost ends in Tanh
    print("KERNEL_OK")
</pallas_src>

<mosaic_0001>
module attributes {stable_mosaic.version = 11 : i64} {
  func.func @matmul_bias_act_kernel(%arg0: i32, %arg1: memref<1x64x64xbf16, #tpu.memory_space<vmem>>, %arg2: memref<64x16xbf16, #tpu.memory_space<vmem>>, %arg3: memref<1x16xf32, #tpu.memory_space<vmem>>, %arg4: memref<1x64x16xf32, #tpu.memory_space<vmem>>) attributes {dimension_semantics = [#tpu.dimension_semantics<parallel>], iteration_bounds = array<i64: 2>, scalar_prefetch = 0 : i64, scratch_operands = 0 : i64, tpu.core_type = #tpu.core_type<tc>, window_params = [{transform_indices = @transform_0, window_bounds = array<i64: 1, 64, 64>}, {pipeline_mode = #tpu.pipeline_mode<synchronous>, transform_indices = @transform_1, window_bounds = array<i64: 64, 16>}, {pipeline_mode = #tpu.pipeline_mode<synchronous>, transform_indices = @transform_2, window_bounds = array<i64: 1, 16>}, {transform_indices = @transform_3, window_bounds = array<i64: 1, 64, 16>}]} {
    %c0 = arith.constant 0 : index
    %c0_0 = arith.constant 0 : index
    %c0_1 = arith.constant 0 : index
    %0 = vector.load %arg1[%c0, %c0_0, %c0_1] : memref<1x64x64xbf16, #tpu.memory_space<vmem>>, vector<1x64x64xbf16>
    %1 = vector.shape_cast %0 : vector<1x64x64xbf16> to vector<64x64xbf16>
    %c0_2 = arith.constant 0 : index
    %c0_3 = arith.constant 0 : index
    %2 = vector.load %arg2[%c0_2, %c0_3] : memref<64x16xbf16, #tpu.memory_space<vmem>>, vector<64x16xbf16>
    %cst = arith.constant dense<0.000000e+00> : vector<64x16xf32>
    %3 = tpu.matmul %1, %2, %cst {dimension_numbers = #tpu.dot_dimension_numbers<[1], [0], [0], [1], [0, 0, 1, 1], [], []>} : vector<64x64xbf16>, vector<64x16xbf16>, vector<64x16xf32> -> vector<64x16xf32>
    %c0_4 = arith.constant 0 : index
    %c0_5 = arith.constant 0 : index
    %4 = vector.load %arg3[%c0_4, %c0_5] : memref<1x16xf32, #tpu.memory_space<vmem>>, vector<1x16xf32>
    %5 = vector.broadcast %4 : vector<1x16xf32> to vector<64x16xf32>
    %6 = arith.addf %3, %5 : vector<64x16xf32>
    %c0_6 = arith.constant 0 : index
    %c0_7 = arith.constant 0 : index
    %c0_8 = arith.constant 0 : index
    %7 = vector.load %arg4[%c0_6, %c0_7, %c0_8] : memref<1x64x16xf32, #tpu.memory_space<vmem>>, vector<1x64x16xf32>
    %8 = vector.shape_cast %7 : vector<1x64x16xf32> to vector<64x16xf32>
    %9 = vector.shape_cast %6 : vector<64x16xf32> to vector<1x64x16xf32>
    tpu.vector_store %arg4[%c0_6, %c0_7, %c0_8], %9 {strides = array<i32>} : memref<1x64x16xf32, #tpu.memory_space<vmem>>, vector<1x64x16xf32>,
    return
  }
  func.func @transform_0(%arg0: i32) -> (i32, i32, i32) {
    %c0_i32 = arith.constant 0 : i32
    %c0_i32_0 = arith.constant 0 : i32
    %c0_i32_1 = arith.constant 0 : i32
    return %arg0, %c0_i32, %c0_i32_0 : i32, i32, i32
  }
  func.func @transform_1(%arg0: i32) -> (i32, i32) {
    %c0_i32 = arith.constant 0 : i32
    %c0_i32_0 = arith.constant 0 : i32
    %c0_i32_1 = arith.constant 0 : i32
    return %c0_i32, %c0_i32_0 : i32, i32
  }
  func.func @transform_2(%arg0: i32) -> (i32, i32) {
    %c0_i32 = arith.constant 0 : i32
    %c0_i32_0 = arith.constant 0 : i32
    %c0_i32_1 = arith.constant 0 : i32
    return %c0_i32, %c0_i32_0 : i32, i32
  }
  func.func @transform_3(%arg0: i32) -> (i32, i32, i32) {
    %c0_i32 = arith.constant 0 : i32
    %c0_i32_0 = arith.constant 0 : i32
    %c0_i32_1 = arith.constant 0 : i32
    return %arg0, %c0_i32, %c0_i32_0 : i32, i32, i32
  }
}

module attributes {stable_mosaic.version = 11 : i64} {
  func.func @batchnorm_kernel(%arg0: memref<32x32xf32, #tpu.memory_space<vmem>>, %arg1: memref<1x32xf32, #tpu.memory_space<vmem>>, %arg2: memref<1x32xf32, #tpu.memory_space<vmem>>, %arg3: memref<32x32xf32, #tpu.memory_space<vmem>>) attributes {dimension_semantics = [], scalar_prefetch = 0 : i64, scratch_operands = 0 : i64, tpu.core_type = #tpu.core_type<tc>} {
    %c0 = arith.constant 0 : index
    %c0_0 = arith.constant 0 : index
    %0 = vector.load %arg0[%c0, %c0_0] : memref<32x32xf32, #tpu.memory_space<vmem>>, vector<32x32xf32>
    %cst = arith.constant dense<0.000000e+00> : vector<32xf32>
    %1 = vector.multi_reduction <add>, %0, %cst [0] : vector<32x32xf32> to vector<32xf32>
    %2 = vector.shape_cast %1 : vector<32xf32> to vector<1x32xf32>
    %cst_1 = arith.constant 3.200000e+01 : f32
    %3 = vector.broadcast %cst_1 : f32 to vector<1x32xf32>
    %4 = arith.divf %2, %3 : vector<1x32xf32>
    %5 = vector.broadcast %4 : vector<1x32xf32> to vector<32x32xf32>
    %6 = arith.subf %0, %5 : vector<32x32xf32>
    %7 = arith.mulf %6, %6 : vector<32x32xf32>
    %cst_2 = arith.constant dense<0.000000e+00> : vector<32xf32>
    %8 = vector.multi_reduction <add>, %7, %cst_2 [0] : vector<32x32xf32> to vector<32xf32>
    %9 = vector.shape_cast %8 : vector<32xf32> to vector<1x32xf32>
    %cst_3 = arith.constant 3.200000e+01 : f32
    %10 = vector.broadcast %cst_3 : f32 to vector<1x32xf32>
    %11 = arith.divf %9, %10 : vector<1x32xf32>
    %cst_4 = arith.constant 9.99999974E-6 : f32
    %12 = vector.broadcast %cst_4 : f32 to vector<1x32xf32>
    %13 = arith.addf %11, %12 : vector<1x32xf32>
    %14 = math.rsqrt %13 : vector<1x32xf32>
    %15 = vector.broadcast %14 : vector<1x32xf32> to vector<32x32xf32>
    %16 = arith.mulf %6, %15 : vector<32x32xf32>
    %c0_5 = arith.constant 0 : index
    %c0_6 = arith.constant 0 : index
    %17 = vector.load %arg1[%c0_5, %c0_6] : memref<1x32xf32, #tpu.memory_space<vmem>>, vector<1x32xf32>
    %18 = vector.broadcast %17 : vector<1x32xf32> to vector<32x32xf32>
    %19 = arith.mulf %16, %18 : vector<32x32xf32>
    %c0_7 = arith.constant 0 : index
    %c0_8 = arith.constant 0 : index
    %20 = vector.load %arg2[%c0_7, %c0_8] : memref<1x32xf32, #tpu.memory_space<vmem>>, vector<1x32xf32>
    %21 = vector.broadcast %20 : vector<1x32xf32> to vector<32x32xf32>
    %22 = arith.addf %19, %21 : vector<32x32xf32>
    %c0_9 = arith.constant 0 : index
    %c0_10 = arith.constant 0 : index
    %23 = vector.load %arg3[%c0_9, %c0_10] : memref<32x32xf32, #tpu.memory_space<vmem>>, vector<32x32xf32>
    tpu.vector_store %arg3[%c0_9, %c0_10], %22 {strides = array<i32>} : memref<32x32xf32, #tpu.memory_space<vmem>>, vector<32x32xf32>,
    return
  }
}

module attributes {stable_mosaic.version = 11 : i64} {
  func.func @matmul_bias_act_kernel(%arg0: i32, %arg1: memref<1x16x256xbf16, #tpu.memory_space<vmem>>, %arg2: memref<256x32xbf16, #tpu.memory_space<vmem>>, %arg3: memref<1x32xf32, #tpu.memory_space<vmem>>, %arg4: memref<1x16x32xf32, #tpu.memory_space<vmem>>) attributes {dimension_semantics = [#tpu.dimension_semantics<parallel>], iteration_bounds = array<i64: 2>, scalar_prefetch = 0 : i64, scratch_operands = 0 : i64, tpu.core_type = #tpu.core_type<tc>, window_params = [{transform_indices = @transform_0, window_bounds = array<i64: 1, 16, 256>}, {pipeline_mode = #tpu.pipeline_mode<synchronous>, transform_indices = @transform_1, window_bounds = array<i64: 256, 32>}, {pipeline_mode = #tpu.pipeline_mode<synchronous>, transform_indices = @transform_2, window_bounds = array<i64: 1, 32>}, {transform_indices = @transform_3, window_bounds = array<i64: 1, 16, 32>}]} {
    %c0 = arith.constant 0 : index
    %c0_0 = arith.constant 0 : index
    %c0_1 = arith.constant 0 : index
    %0 = vector.load %arg1[%c0, %c0_0, %c0_1] : memref<1x16x256xbf16, #tpu.memory_space<vmem>>, vector<1x16x256xbf16>
    %1 = vector.shape_cast %0 : vector<1x16x256xbf16> to vector<16x256xbf16>
    %cst = arith.constant 0.000000e+00 : bf16
    %2 = vector.broadcast %cst : bf16 to vector<16x256xbf16>
    %3 = arith.cmpf ogt, %1, %2 : vector<16x256xbf16>
    %cst_2 = arith.constant 2.001950e-01 : bf16
    %4 = vector.broadcast %cst_2 : bf16 to vector<16x256xbf16>
    %5 = arith.mulf %4, %1 : vector<16x256xbf16>
    %6 = arith.select %3, %1, %5 : vector<16x256xi1>, vector<16x256xbf16>
    %c0_3 = arith.constant 0 : index
    %c0_4 = arith.constant 0 : index
    %7 = vector.load %arg2[%c0_3, %c0_4] : memref<256x32xbf16, #tpu.memory_space<vmem>>, vector<256x32xbf16>
    %cst_5 = arith.constant dense<0.000000e+00> : vector<16x32xf32>
    %8 = tpu.matmul %6, %7, %cst_5 {dimension_numbers = #tpu.dot_dimension_numbers<[1], [0], [0], [1], [0, 0, 1, 1], [], []>} : vector<16x256xbf16>, vector<256x32xbf16>, vector<16x32xf32> -> vector<16x32xf32>
    %c0_6 = arith.constant 0 : index
    %c0_7 = arith.constant 0 : index
    %9 = vector.load %arg3[%c0_6, %c0_7] : memref<1x32xf32, #tpu.memory_space<vmem>>, vector<1x32xf32>
    %10 = vector.broadcast %9 : vector<1x32xf32> to vector<16x32xf32>
    %11 = arith.addf %8, %10 : vector<16x32xf32>
    %c0_8 = arith.constant 0 : index
    %c0_9 = arith.constant 0 : index
    %c0_10 = arith.constant 0 : index
    %12 = vector.load %arg4[%c0_8, %c0_9, %c0_10] : memref<1x16x32xf32, #tpu.memory_space<vmem>>, vector<1x16x32xf32>
    %13 = vector.shape_cast %12 : vector<1x16x32xf32> to vector<16x32xf32>
    %14 = vector.shape_cast %11 : vector<16x32xf32> to vector<1x16x32xf32>
    tpu.vector_store %arg4[%c0_8, %c0_9, %c0_10], %14 {strides = array<i32>} : memref<1x16x32xf32, #tpu.memory_space<vmem>>, vector<1x16x32xf32>,
    return
  }
  func.func @transform_0(%arg0: i32) -> (i32, i32, i32) {
    %c0_i32 = arith.constant 0 : i32
    %c0_i32_0 = arith.constant 0 : i32
    %c0_i32_1 = arith.constant 0 : i32
    return %arg0, %c0_i32, %c0_i32_0 : i32, i32, i32
  }
  func.func @transform_1(%arg0: i32) -> (i32, i32) {
    %c0_i32 = arith.constant 0 : i32
    %c0_i32_0 = arith.constant 0 : i32
    %c0_i32_1 = arith.constant 0 : i32
    return %c0_i32, %c0_i32_0 : i32, i32
  }
  func.func @transform_2(%arg0: i32) -> (i32, i32) {
    %c0_i32 = arith.constant 0 : i32
    %c0_i32_0 = arith.constant 0 : i32
    %c0_i32_1 = arith.constant 0 : i32
    return %c0_i32, %c0_i32_0 : i32, i32
  }
  func.func @transform_3(%arg0: i32) -> (i32, i32, i32) {
    %c0_i32 = arith.constant 0 : i32
    %c0_i32_0 = arith.constant 0 : i32
    %c0_i32_1 = arith.constant 0 : i32
    return %arg0, %c0_i32, %c0_i32_0 : i32, i32, i32
  }
}

module attributes {stable_mosaic.version = 11 : i64} {
  func.func @matmul_bias_act_kernel(%arg0: i32, %arg1: memref<1x4x512xbf16, #tpu.memory_space<vmem>>, %arg2: memref<512x64xbf16, #tpu.memory_space<vmem>>, %arg3: memref<1x64xf32, #tpu.memory_space<vmem>>, %arg4: memref<1x4x64xf32, #tpu.memory_space<vmem>>) attributes {dimension_semantics = [#tpu.dimension_semantics<parallel>], iteration_bounds = array<i64: 2>, scalar_prefetch = 0 : i64, scratch_operands = 0 : i64, tpu.core_type = #tpu.core_type<tc>, window_params = [{transform_indices = @transform_0, window_bounds = array<i64: 1, 4, 512>}, {pipeline_mode = #tpu.pipeline_mode<synchronous>, transform_indices = @transform_1, window_bounds = array<i64: 512, 64>}, {pipeline_mode = #tpu.pipeline_mode<synchronous>, transform_indices = @transform_2, window_bounds = array<i64: 1, 64>}, {transform_indices = @transform_3, window_bounds = array<i64: 1, 4, 64>}]} {
    %c0 = arith.constant 0 : index
    %c0_0 = arith.constant 0 : index
    %c0_1 = arith.constant 0 : index
    %0 = vector.load %arg1[%c0, %c0_0, %c0_1] : memref<1x4x512xbf16, #tpu.memory_space<vmem>>, vector<1x4x512xbf16>
    %1 = vector.shape_cast %0 : vector<1x4x512xbf16> to vector<4x512xbf16>
    %cst = arith.constant 0.000000e+00 : bf16
    %2 = vector.broadcast %cst : bf16 to vector<4x512xbf16>
    %3 = arith.cmpf ogt, %1, %2 : vector<4x512xbf16>
    %cst_2 = arith.constant 2.001950e-01 : bf16
    %4 = vector.broadcast %cst_2 : bf16 to vector<4x512xbf16>
    %5 = arith.mulf %4, %1 : vector<4x512xbf16>
    %6 = arith.select %3, %1, %5 : vector<4x512xi1>, vector<4x512xbf16>
    %c0_3 = arith.constant 0 : index
    %c0_4 = arith.constant 0 : index
    %7 = vector.load %arg2[%c0_3, %c0_4] : memref<512x64xbf16, #tpu.memory_space<vmem>>, vector<512x64xbf16>
    %cst_5 = arith.constant dense<0.000000e+00> : vector<4x64xf32>
    %8 = tpu.matmul %6, %7, %cst_5 {dimension_numbers = #tpu.dot_dimension_numbers<[1], [0], [0], [1], [0, 0, 1, 1], [], []>} : vector<4x512xbf16>, vector<512x64xbf16>, vector<4x64xf32> -> vector<4x64xf32>
    %c0_6 = arith.constant 0 : index
    %c0_7 = arith.constant 0 : index
    %9 = vector.load %arg3[%c0_6, %c0_7] : memref<1x64xf32, #tpu.memory_space<vmem>>, vector<1x64xf32>
    %10 = vector.broadcast %9 : vector<1x64xf32> to vector<4x64xf32>
    %11 = arith.addf %8, %10 : vector<4x64xf32>
    %c0_8 = arith.constant 0 : index
    %c0_9 = arith.constant 0 : index
    %c0_10 = arith.constant 0 : index
    %12 = vector.load %arg4[%c0_8, %c0_9, %c0_10] : memref<1x4x64xf32, #tpu.memory_space<vmem>>, vector<1x4x64xf32>
    %13 = vector.shape_cast %12 : vector<1x4x64xf32> to vector<4x64xf32>
    %14 = vector.shape_cast %11 : vector<4x64xf32> to vector<1x4x64xf32>
    tpu.vector_store %arg4[%c0_8, %c0_9, %c0_10], %14 {strides = array<i32>} : memref<1x4x64xf32, #tpu.memory_space<vmem>>, vector<1x4x64xf32>,
    return
  }
  func.func @transform_0(%arg0: i32) -> (i32, i32, i32) {
    %c0_i32 = arith.constant 0 : i32
    %c0_i32_0 = arith.constant 0 : i32
    %c0_i32_1 = arith.constant 0 : i32
    return %arg0, %c0_i32, %c0_i32_0 : i32, i32, i32
  }
  func.func @transform_1(%arg0: i32) -> (i32, i32) {
    %c0_i32 = arith.constant 0 : i32
    %c0_i32_0 = arith.constant 0 : i32
    %c0_i32_1 = arith.constant 0 : i32
    return %c0_i32, %c0_i32_0 : i32, i32
  }
  func.func @transform_2(%arg0: i32) -> (i32, i32) {
    %c0_i32 = arith.constant 0 : i32
    %c0_i32_0 = arith.constant 0 : i32
    %c0_i32_1 = arith.constant 0 : i32
    return %c0_i32, %c0_i32_0 : i32, i32
  }
  func.func @transform_3(%arg0: i32) -> (i32, i32, i32) {
    %c0_i32 = arith.constant 0 : i32
    %c0_i32_0 = arith.constant 0 : i32
    %c0_i32_1 = arith.constant 0 : i32
    return %arg0, %c0_i32, %c0_i32_0 : i32, i32, i32
  }
}

module attributes {stable_mosaic.version = 11 : i64} {
  func.func @matmul_bias_act_kernel(%arg0: i32, %arg1: memref<1x9x256xbf16, #tpu.memory_space<vmem>>, %arg2: memref<256x128xbf16, #tpu.memory_space<vmem>>, %arg3: memref<1x128xf32, #tpu.memory_space<vmem>>, %arg4: memref<1x9x128xf32, #tpu.memory_space<vmem>>) attributes {dimension_semantics = [#tpu.dimension_semantics<parallel>], iteration_bounds = array<i64: 2>, scalar_prefetch = 0 : i64, scratch_operands = 0 : i64, tpu.core_type = #tpu.core_type<tc>, window_params = [{transform_indices = @transform_0, window_bounds = array<i64: 1, 9, 256>}, {pipeline_mode = #tpu.pipeline_mode<synchronous>, transform_indices = @transform_1, window_bounds = array<i64: 256, 128>}, {pipeline_mode = #tpu.pipeline_mode<synchronous>, transform_indices = @transform_2, window_bounds = array<i64: 1, 128>}, {transform_indices = @transform_3, window_bounds = array<i64: 1, 9, 128>}]} {
    %c0 = arith.constant 0 : index
    %c0_0 = arith.constant 0 : index
    %c0_1 = arith.constant 0 : index
    %0 = vector.load %arg1[%c0, %c0_0, %c0_1] : memref<1x9x256xbf16, #tpu.memory_space<vmem>>, vector<1x9x256xbf16>
    %1 = vector.shape_cast %0 : vector<1x9x256xbf16> to vector<9x256xbf16>
    %cst = arith.constant 0.000000e+00 : bf16
    %2 = vector.broadcast %cst : bf16 to vector<9x256xbf16>
    %3 = arith.maximumf %1, %2 : vector<9x256xbf16>
    %c0_2 = arith.constant 0 : index
    %c0_3 = arith.constant 0 : index
    %4 = vector.load %arg2[%c0_2, %c0_3] : memref<256x128xbf16, #tpu.memory_space<vmem>>, vector<256x128xbf16>
    %cst_4 = arith.constant dense<0.000000e+00> : vector<9x128xf32>
    %5 = tpu.matmul %3, %4, %cst_4 {dimension_numbers = #tpu.dot_dimension_numbers<[1], [0], [0], [1], [0, 0, 1, 1], [], []>} : vector<9x256xbf16>, vector<256x128xbf16>, vector<9x128xf32> -> vector<9x128xf32>
    %c0_5 = arith.constant 0 : index
    %c0_6 = arith.constant 0 : index
    %6 = vector.load %arg3[%c0_5, %c0_6] : memref<1x128xf32, #tpu.memory_space<vmem>>, vector<1x128xf32>
    %7 = vector.broadcast %6 : vector<1x128xf32> to vector<9x128xf32>
    %8 = arith.addf %5, %7 : vector<9x128xf32>
    %c0_7 = arith.constant 0 : index
    %c0_8 = arith.constant 0 : index
    %c0_9 = arith.constant 0 : index
    %9 = vector.load %arg4[%c0_7, %c0_8, %c0_9] : memref<1x9x128xf32, #tpu.memory_space<vmem>>, vector<1x9x128xf32>
    %10 = vector.shape_cast %9 : vector<1x9x128xf32> to vector<9x128xf32>
    %11 = vector.shape_cast %8 : vector<9x128xf32> to vector<1x9x128xf32>
    tpu.vector_store %arg4[%c0_7, %c0_8, %c0_9], %11 {strides = array<i32>} : memref<1x9x128xf32, #tpu.memory_space<vmem>>, vector<1x9x128xf32>,
    return
  }
  func.func @transform_0(%arg0: i32) -> (i32, i32, i32) {
    %c0_i32 = arith.constant 0 : i32
    %c0_i32_0 = arith.constant 0 : i32
    %c0_i32_1 = arith.constant 0 : i32
    return %arg0, %c0_i32, %c0_i32_0 : i32, i32, i32
  }
  func.func @transform_1(%arg0: i32) -> (i32, i32) {
    %c0_i32 = arith.constant 0 : i32
    %c0_i32_0 = arith.constant 0 : i32
    %c0_i32_1 = arith.constant 0 : i32
    return %c0_i32, %c0_i32_0 : i32, i32
  }
  func.func @transform_2(%arg0: i32) -> (i32, i32) {
    %c0_i32 = arith.constant 0 : i32
    %c0_i32_0 = arith.constant 0 : i32
    %c0_i32_1 = arith.constant 0 : i32
    return %c0_i32, %c0_i32_0 : i32, i32
  }
  func.func @transform_3(%arg0: i32) -> (i32, i32, i32) {
    %c0_i32 = arith.constant 0 : i32
    %c0_i32_0 = arith.constant 0 : i32
    %c0_i32_1 = arith.constant 0 : i32
    return %arg0, %c0_i32, %c0_i32_0 : i32, i32, i32
  }
}

module attributes {stable_mosaic.version = 11 : i64} {
  func.func @matmul_bias_act_kernel(%arg0: i32, %arg1: memref<1x25x256xbf16, #tpu.memory_space<vmem>>, %arg2: memref<256x64xbf16, #tpu.memory_space<vmem>>, %arg3: memref<1x64xf32, #tpu.memory_space<vmem>>, %arg4: memref<1x25x64xf32, #tpu.memory_space<vmem>>) attributes {dimension_semantics = [#tpu.dimension_semantics<parallel>], iteration_bounds = array<i64: 2>, scalar_prefetch = 0 : i64, scratch_operands = 0 : i64, tpu.core_type = #tpu.core_type<tc>, window_params = [{transform_indices = @transform_0, window_bounds = array<i64: 1, 25, 256>}, {pipeline_mode = #tpu.pipeline_mode<synchronous>, transform_indices = @transform_1, window_bounds = array<i64: 256, 64>}, {pipeline_mode = #tpu.pipeline_mode<synchronous>, transform_indices = @transform_2, window_bounds = array<i64: 1, 64>}, {transform_indices = @transform_3, window_bounds = array<i64: 1, 25, 64>}]} {
    %c0 = arith.constant 0 : index
    %c0_0 = arith.constant 0 : index
    %c0_1 = arith.constant 0 : index
    %0 = vector.load %arg1[%c0, %c0_0, %c0_1] : memref<1x25x256xbf16, #tpu.memory_space<vmem>>, vector<1x25x256xbf16>
    %1 = vector.shape_cast %0 : vector<1x25x256xbf16> to vector<25x256xbf16>
    %cst = arith.constant 0.000000e+00 : bf16
    %2 = vector.broadcast %cst : bf16 to vector<25x256xbf16>
    %3 = arith.maximumf %1, %2 : vector<25x256xbf16>
    %c0_2 = arith.constant 0 : index
    %c0_3 = arith.constant 0 : index
    %4 = vector.load %arg2[%c0_2, %c0_3] : memref<256x64xbf16, #tpu.memory_space<vmem>>, vector<256x64xbf16>
    %cst_4 = arith.constant dense<0.000000e+00> : vector<25x64xf32>
    %5 = tpu.matmul %3, %4, %cst_4 {dimension_numbers = #tpu.dot_dimension_numbers<[1], [0], [0], [1], [0, 0, 1, 1], [], []>} : vector<25x256xbf16>, vector<256x64xbf16>, vector<25x64xf32> -> vector<25x64xf32>
    %c0_5 = arith.constant 0 : index
    %c0_6 = arith.constant 0 : index
    %6 = vector.load %arg3[%c0_5, %c0_6] : memref<1x64xf32, #tpu.memory_space<vmem>>, vector<1x64xf32>
    %7 = vector.broadcast %6 : vector<1x64xf32> to vector<25x64xf32>
    %8 = arith.addf %5, %7 : vector<25x64xf32>
    %c0_7 = arith.constant 0 : index
    %c0_8 = arith.constant 0 : index
    %c0_9 = arith.constant 0 : index
    %9 = vector.load %arg4[%c0_7, %c0_8, %c0_9] : memref<1x25x64xf32, #tpu.memory_space<vmem>>, vector<1x25x64xf32>
    %10 = vector.shape_cast %9 : vector<1x25x64xf32> to vector<25x64xf32>
    %11 = vector.shape_cast %8 : vector<25x64xf32> to vector<1x25x64xf32>
    tpu.vector_store %arg4[%c0_7, %c0_8, %c0_9], %11 {strides = array<i32>} : memref<1x25x64xf32, #tpu.memory_space<vmem>>, vector<1x25x64xf32>,
    return
  }
  func.func @transform_0(%arg0: i32) -> (i32, i32, i32) {
    %c0_i32 = arith.constant 0 : i32
    %c0_i32_0 = arith.constant 0 : i32
    %c0_i32_1 = arith.constant 0 : i32
    return %arg0, %c0_i32, %c0_i32_0 : i32, i32, i32
  }
  func.func @transform_1(%arg0: i32) -> (i32, i32) {
    %c0_i32 = arith.constant 0 : i32
    %c0_i32_0 = arith.constant 0 : i32
    %c0_i32_1 = arith.constant 0 : i32
    return %c0_i32, %c0_i32_0 : i32, i32
  }
  func.func @transform_2(%arg0: i32) -> (i32, i32) {
    %c0_i32 = arith.constant 0 : i32
    %c0_i32_0 = arith.constant 0 : i32
    %c0_i32_1 = arith.constant 0 : i32
    return %c0_i32, %c0_i32_0 : i32, i32
  }
  func.func @transform_3(%arg0: i32) -> (i32, i32, i32) {
    %c0_i32 = arith.constant 0 : i32
    %c0_i32_0 = arith.constant 0 : i32
    %c0_i32_1 = arith.constant 0 : i32
    return %arg0, %c0_i32, %c0_i32_0 : i32, i32, i32
  }
}

module attributes {stable_mosaic.version = 11 : i64} {
  func.func @batchnorm_kernel(%arg0: memref<128x16xf32, #tpu.memory_space<vmem>>, %arg1: memref<1x16xf32, #tpu.memory_space<vmem>>, %arg2: memref<1x16xf32, #tpu.memory_space<vmem>>, %arg3: memref<128x16xf32, #tpu.memory_space<vmem>>) attributes {dimension_semantics = [], scalar_prefetch = 0 : i64, scratch_operands = 0 : i64, tpu.core_type = #tpu.core_type<tc>} {
    %c0 = arith.constant 0 : index
    %c0_0 = arith.constant 0 : index
    %0 = vector.load %arg0[%c0, %c0_0] : memref<128x16xf32, #tpu.memory_space<vmem>>, vector<128x16xf32>
    %cst = arith.constant dense<0.000000e+00> : vector<16xf32>
    %1 = vector.multi_reduction <add>, %0, %cst [0] : vector<128x16xf32> to vector<16xf32>
    %2 = vector.shape_cast %1 : vector<16xf32> to vector<1x16xf32>
    %cst_1 = arith.constant 1.280000e+02 : f32
    %3 = vector.broadcast %cst_1 : f32 to vector<1x16xf32>
    %4 = arith.divf %2, %3 : vector<1x16xf32>
    %5 = vector.broadcast %4 : vector<1x16xf32> to vector<128x16xf32>
    %6 = arith.subf %0, %5 : vector<128x16xf32>
    %7 = arith.mulf %6, %6 : vector<128x16xf32>
    %cst_2 = arith.constant dense<0.000000e+00> : vector<16xf32>
    %8 = vector.multi_reduction <add>, %7, %cst_2 [0] : vector<128x16xf32> to vector<16xf32>
    %9 = vector.shape_cast %8 : vector<16xf32> to vector<1x16xf32>
    %cst_3 = arith.constant 1.280000e+02 : f32
    %10 = vector.broadcast %cst_3 : f32 to vector<1x16xf32>
    %11 = arith.divf %9, %10 : vector<1x16xf32>
    %cst_4 = arith.constant 9.99999974E-6 : f32
    %12 = vector.broadcast %cst_4 : f32 to vector<1x16xf32>
    %13 = arith.addf %11, %12 : vector<1x16xf32>
    %14 = math.rsqrt %13 : vector<1x16xf32>
    %15 = vector.broadcast %14 : vector<1x16xf32> to vector<128x16xf32>
    %16 = arith.mulf %6, %15 : vector<128x16xf32>
    %c0_5 = arith.constant 0 : index
    %c0_6 = arith.constant 0 : index
    %17 = vector.load %arg1[%c0_5, %c0_6] : memref<1x16xf32, #tpu.memory_space<vmem>>, vector<1x16xf32>
    %18 = vector.broadcast %17 : vector<1x16xf32> to vector<128x16xf32>
    %19 = arith.mulf %16, %18 : vector<128x16xf32>
    %c0_7 = arith.constant 0 : index
    %c0_8 = arith.constant 0 : index
    %20 = vector.load %arg2[%c0_7, %c0_8] : memref<1x16xf32, #tpu.memory_space<vmem>>, vector<1x16xf32>
    %21 = vector.broadcast %20 : vector<1x16xf32> to vector<128x16xf32>
    %22 = arith.addf %19, %21 : vector<128x16xf32>
    %c0_9 = arith.constant 0 : index
    %c0_10 = arith.constant 0 : index
    %23 = vector.load %arg3[%c0_9, %c0_10] : memref<128x16xf32, #tpu.memory_space<vmem>>, vector<128x16xf32>
    tpu.vector_store %arg3[%c0_9, %c0_10], %22 {strides = array<i32>} : memref<128x16xf32, #tpu.memory_space<vmem>>, vector<128x16xf32>,
    return
  }
}

module attributes {stable_mosaic.version = 11 : i64} {
  func.func @matmul_bias_act_kernel(%arg0: i32, %arg1: memref<1x81x128xbf16, #tpu.memory_space<vmem>>, %arg2: memref<128x16xbf16, #tpu.memory_space<vmem>>, %arg3: memref<1x16xf32, #tpu.memory_space<vmem>>, %arg4: memref<1x81x16xf32, #tpu.memory_space<vmem>>) attributes {dimension_semantics = [#tpu.dimension_semantics<parallel>], iteration_bounds = array<i64: 2>, scalar_prefetch = 0 : i64, scratch_operands = 0 : i64, tpu.core_type = #tpu.core_type<tc>, window_params = [{transform_indices = @transform_0, window_bounds = array<i64: 1, 81, 128>}, {pipeline_mode = #tpu.pipeline_mode<synchronous>, transform_indices = @transform_1, window_bounds = array<i64: 128, 16>}, {pipeline_mode = #tpu.pipeline_mode<synchronous>, transform_indices = @transform_2, window_bounds = array<i64: 1, 16>}, {transform_indices = @transform_3, window_bounds = array<i64: 1, 81, 16>}]} {
    %c0 = arith.constant 0 : index
    %c0_0 = arith.constant 0 : index
    %c0_1 = arith.constant 0 : index
    %0 = vector.load %arg1[%c0, %c0_0, %c0_1] : memref<1x81x128xbf16, #tpu.memory_space<vmem>>, vector<1x81x128xbf16>
    %1 = vector.shape_cast %0 : vector<1x81x128xbf16> to vector<81x128xbf16>
    %cst = arith.constant 0.000000e+00 : bf16
    %2 = vector.broadcast %cst : bf16 to vector<81x128xbf16>
    %3 = arith.maximumf %1, %2 : vector<81x128xbf16>
    %c0_2 = arith.constant 0 : index
    %c0_3 = arith.constant 0 : index
    %4 = vector.load %arg2[%c0_2, %c0_3] : memref<128x16xbf16, #tpu.memory_space<vmem>>, vector<128x16xbf16>
    %cst_4 = arith.constant dense<0.000000e+00> : vector<81x16xf32>
    %5 = tpu.matmul %3, %4, %cst_4 {dimension_numbers = #tpu.dot_dimension_numbers<[1], [0], [0], [1], [0, 0, 1, 1], [], []>} : vector<81x128xbf16>, vector<128x16xbf16>, vector<81x16xf32> -> vector<81x16xf32>
    %c0_5 = arith.constant 0 : index
    %c0_6 = arith.constant 0 : index
    %6 = vector.load %arg3[%c0_5, %c0_6] : memref<1x16xf32, #tpu.memory_space<vmem>>, vector<1x16xf32>
    %7 = vector.broadcast %6 : vector<1x16xf32> to vector<81x16xf32>
    %8 = arith.addf %5, %7 : vector<81x16xf32>
    %9 = math.tanh %8 : vector<81x16xf32>
    %c0_7 = arith.constant 0 : index
    %c0_8 = arith.constant 0 : index
    %c0_9 = arith.constant 0 : index
    %10 = vector.load %arg4[%c0_7, %c0_8, %c0_9] : memref<1x81x16xf32, #tpu.memory_space<vmem>>, vector<1x81x16xf32>
    %11 = vector.shape_cast %10 : vector<1x81x16xf32> to vector<81x16xf32>
    %12 = vector.shape_cast %9 : vector<81x16xf32> to vector<1x81x16xf32>
    tpu.vector_store %arg4[%c0_7, %c0_8, %c0_9], %12 {strides = array<i32>} : memref<1x81x16xf32, #tpu.memory_space<vmem>>, vector<1x81x16xf32>,
    return
  }
  func.func @transform_0(%arg0: i32) -> (i32, i32, i32) {
    %c0_i32 = arith.constant 0 : i32
    %c0_i32_0 = arith.constant 0 : i32
    %c0_i32_1 = arith.constant 0 : i32
    return %arg0, %c0_i32, %c0_i32_0 : i32, i32, i32
  }
  func.func @transform_1(%arg0: i32) -> (i32, i32) {
    %c0_i32 = arith.constant 0 : i32
    %c0_i32_0 = arith.constant 0 : i32
    %c0_i32_1 = arith.constant 0 : i32
    return %c0_i32, %c0_i32_0 : i32, i32
  }
  func.func @transform_2(%arg0: i32) -> (i32, i32) {
    %c0_i32 = arith.constant 0 : i32
    %c0_i32_0 = arith.constant 0 : i32
    %c0_i32_1 = arith.constant 0 : i32
    return %c0_i32, %c0_i32_0 : i32, i32
  }
  func.func @transform_3(%arg0: i32) -> (i32, i32, i32) {
    %c0_i32 = arith.constant 0 : i32
    %c0_i32_0 = arith.constant 0 : i32
    %c0_i32_1 = arith.constant 0 : i32
    return %arg0, %c0_i32, %c0_i32_0 : i32, i32, i32
  }
}

</mosaic_0001>

<llo_original>
// kernel: tile.9
$region0: #{tile.9}
  %s0 = inlined_call_operand.vmem [shape: f32[4,4], index: 0, kind: input, shape index: {}]
  %s1 = inlined_call_operand.vmem [shape: f32[1,16], index: 1, kind: output, shape index: {}]
  $region1: #{tile.9} parent=0
    #allocation0 [shape = 'u8[4096]{0}', space=vmem, size = 0x1000, scoped, tag = 'scoped mem for output reshape']
    #allocation1 [shape = 'u8[4096]{0}', space=vmem, size = 0x1000, scoped, tag = 'scoped mem for input reshape']
    %s3 = ssub.s32 16, 1
    %v4 = vld [vmem:[%s0] sm:%s3]
    %5 = vst [vmem:[#allocation1] sm:%s3] %v4
    %v6 = vld [vmem:[#allocation1] sm:$0x1]
    %vm7 = vcmask 31744
    %8 = vst.msk [vmem:[#allocation0] sm:$0x1] %vm7, %v6
    %s9 = scalar_lea.vmem [#allocation1], 3
    %v10 = vld [vmem:[%s9] sm:$0x1]
    %11 = vrot.lane.b32.xlu0 %v10, 12
    %v12 = vpop.permute.xlu0 %11
    %vm13 = vcmask 130144
    %14 = vst.msk [vmem:[#allocation0] sm:$0x1] %vm13, %v12
    %s15 = scalar_lea.vmem [#allocation1], 2
    %v16 = vld [vmem:[%s15] sm:$0x1]
    %17 = vrot.lane.b32.xlu0 %v16, 8
    %v18 = vpop.permute.xlu0 %17
    %vm19 = vcmask 97344
    %20 = vst.msk [vmem:[#allocation0] sm:$0x1] %vm19, %v18
    %s21 = scalar_lea.vmem [#allocation1], 1
    %v22 = vld [vmem:[%s21] sm:$0x1]
    %23 = vrot.lane.b32.xlu0 %v22, 4
    %v24 = vpop.permute.xlu0 %23
    %vm25 = vcmask 64544
    %26 = vst.msk [vmem:[#allocation0] sm:$0x1] %vm25, %v24
    %s28 = ssub.s32 2, 1
    %v29 = vld [vmem:[#allocation0] sm:%s28]
    %s31 = ssub.s32 2, 1
    %32 = vst [vmem:[%s1] sm:%s31] %v29

// kernel: tile.8
$region0: #{tile.8}
  #allocation0 [shape = 's32[1]{0}', space=sflag, size = 0x4, scoped, tag = 'scoped memory for tile.8']
  %s0 = inlined_call_operand.vmem [shape: f32[4], index: 0, kind: input, shape index: {}]
  %s1 = inlined_call_operand.vmem [shape: f32[4,4], index: 1, kind: output, shape index: {}]
  // Predicated region
  $region2: #{tile.8} parent=0 // pred_check
    _
  $region3: #{tile.8} parent=0 // pred_check_branch
    %3 = sbr.rel (0) target = $region5
  $region4: #{tile.8} parent=0 // pred_region
    _
  $region5: #{tile.8} parent=0 // pred_fallthru
    _
  %v4 = vld [vmem:[%s0] ss:$0 sm:$0xff]
  %5 = vst [vmem:[%s1] sm:$0xf] %v4

// kernel: _lambda_.9
$region0: #{_lambda_.9}
  #allocation0 [shape = 'u32[]', space=smem, size = 0x4, offset = 0x4, fixed_abs, tag = 'smem constant byte address 0x4 - core index']
  #allocation1 [shape = 'u32[72,128]{1,0:T(1,128)}', space=vmem, size = 0x9000, scoped, tag = 'internal scratch']
  %s0 = inlined_call_operand.vmem [shape: bf16[2,64,64], index: 0, kind: input, shape index: {}]
  %s1 = inlined_call_operand.vmem [shape: bf16[64,16], index: 1, kind: input, shape index: {}]
  %s2 = inlined_call_operand.vmem [shape: f32[1,16], index: 2, kind: input, shape index: {}]
  %s3 = inlined_call_operand.vmem [shape: f32[2,64,16], index: 3, kind: output, shape index: {}]
  %s4 = sld [smem:[#allocation0]]
  $region45: #{_lambda_.9} parent=0
    _
  %s6 = ssub.s32 1, %s4
  %s7 = scalar_select 0, %s6, %s4
  loop: start=0, step=1, limit=4
  $region2: #{_lambda_.9} parent=0 // loop_pre_header
    _
  $region3: #{_lambda_.9} parent=0 // loop_header
    %s9 = sphi 0, %s13
    %p10 = scmp.ge.s32.totalorder %s9, 4
    %s19 = sphi 0, %s21
    %s22 = sphi 0, %s19
    %s23 = sphi 0, %s22
    %s39 = sphi 0, %s23
    %s43 = sphi 0, %s43
    %s45 = sphi 0, %s43
    %s46 = sphi 0, %s45
    %s60 = sphi 0, %s46
    %s64 = sphi 0, %s64
    %s66 = sphi 0, %s64
    %s67 = sphi 0, %s66
    %s81 = sphi 0, %s67
    %s87 = sphi 0, %s89
    %s90 = sphi 0, %s87
    %s91 = sphi 0, %s90
    %s107 = sphi 0, %s91
  $region4: #{_lambda_.9} parent=0 // loop_header_branch
    %12 = sbr.rel (%p10) target = $region8
  $region5: #{_lambda_.9} parent=0 // loop_body
    %s14 = ssub.s32 %s9, 1
    %s15 = ssub.s32 %s9, 2
    %s16 = sadd.s32 %s9, 1
    %s17 = ssub.s32 %s9, %s16
    %p18 = scmp.eq.s32.totalorder %s17, 0
    %s20 = sadd.s32 %s19, 1
    %s21 = scalar_select %p18, %s19, %s20
    %p24 = pneg %p18
    %p25 = scmp.eq.s32.totalorder %s9, 1
    %p26 = por %p24, %p25
    %p27 = scmp.ne.s32.totalorder %s19, %s22
    %p28 = scmp.eq.s32.totalorder %s9, 0
    %p29 = por %p27, %p28
    %p30 = scmp.ne.s32.totalorder %s19, %s22
    %p31 = scmp.eq.s32.totalorder %s14, 1
    %p32 = por %p30, %p31
    %p33 = scmp.ne.s32.totalorder %s22, %s23
    %p34 = scmp.eq.s32.totalorder %s14, 0
    %p35 = por %p33, %p34
    %p36 = scmp.ne.s32.totalorder %s22, %s23
    %p37 = scmp.eq.s32.totalorder %s15, 1
    %p38 = por %p36, %p37
    %p40 = scmp.ne.s32.totalorder %s23, %s39
    %p41 = scmp.eq.s32.totalorder %s15, 0
    %p42 = por %p40, %p41
    %s44 = sadd.s32 %s43, 1
    %p47 = scmp.eq.s32.totalorder %s9, 1
    %p48 = scmp.ne.s32.totalorder %s43, %s45
    %p49 = scmp.eq.s32.totalorder %s9, 0
    %p50 = por %p48, %p49
    %p51 = scmp.ne.s32.totalorder %s43, %s45
    %p52 = scmp.eq.s32.totalorder %s14, 1
    %p53 = por %p51, %p52
    %p54 = scmp.ne.s32.totalorder %s45, %s46
    %p55 = scmp.eq.s32.totalorder %s14, 0
    %p56 = por %p54, %p55
    %p57 = scmp.ne.s32.totalorder %s45, %s46
    %p58 = scmp.eq.s32.totalorder %s15, 1
    %p59 = por %p57, %p58
    %p61 = scmp.ne.s32.totalorder %s46, %s60
    %p62 = scmp.eq.s32.totalorder %s15, 0
    %p63 = por %p61, %p62
    %s65 = sadd.s32 %s64, 1
    %p68 = scmp.eq.s32.totalorder %s9, 1
    %p69 = scmp.ne.s32.totalorder %s64, %s66
    %p70 = scmp.eq.s32.totalorder %s9, 0
    %p71 = por %p69, %p70
    %p72 = scmp.ne.s32.totalorder %s64, %s66
    %p73 = scmp.eq.s32.totalorder %s14, 1
    %p74 = por %p72, %p73
    %p75 = scmp.ne.s32.totalorder %s66, %s67
    %p76 = scmp.eq.s32.totalorder %s14, 0
    %p77 = por %p75, %p76
    %p78 = scmp.ne.s32.totalorder %s66, %s67
    %p79 = scmp.eq.s32.totalorder %s15, 1
    %p80 = por %p78, %p79
    %p82 = scmp.ne.s32.totalorder %s67, %s81
    %p83 = scmp.eq.s32.totalorder %s15, 0
    %p84 = por %p82, %p83
    %s85 = ssub.s32 %s9, %s16
    %p86 = scmp.eq.s32.totalorder %s85, 0
    %s88 = sadd.s32 %s87, 1
    %s89 = scalar_select %p86, %s87, %s88
    %p92 = pneg %p86
    %p93 = scmp.eq.s32.totalorder %s9, 1
    %p94 = por %p92, %p93
    %p95 = scmp.ne.s32.totalorder %s87, %s90
    %p96 = scmp.eq.s32.totalorder %s9, 0
    %p97 = por %p95, %p96
    %p98 = scmp.ne.s32.totalorder %s87, %s90
    %p99 = scmp.eq.s32.totalorder %s14, 1
    %p100 = por %p98, %p99
    %p101 = scmp.ne.s32.totalorder %s90, %s91
    %p102 = scmp.eq.s32.totalorder %s14, 0
    %p103 = por %p101, %p102
    %p104 = scmp.ne.s32.totalorder %s90, %s91
    %p105 = scmp.eq.s32.totalorder %s15, 1
    %p106 = por %p104, %p105
    %p108 = scmp.ne.s32.totalorder %s91, %s107
    %p109 = scmp.eq.s32.totalorder %s15, 0
    %p110 = por %p108, %p109
    %p111 = scmp.le.s32.totalorder 1, %s9
    %p112 = scmp.lt.s32.totalorder %s9, 3
    %p113 = pnand %p111, %p112
    %p114 = pneg %p113
    // Predicated region
    $region9: #{_lambda_.9} parent=5 // pred_check
      _
    $region10: #{_lambda_.9} parent=5 // pred_check_branch
      %116 = sbr.rel (%p113) target = $region12
    $region11: #{_lambda_.9} parent=5 // pred_region
      %s117 = ssub.s32 %s9, 1
      // Predicated region
      $region13: #{_lambda_.9} parent=11 // pred_check
        %p118 = pneg %p56
      $region14: #{_lambda_.9} parent=11 // pred_check_branch
        %120 = sbr.rel (%p118) target = $region16
      $region15: #{_lambda_.9} parent=11 // pred_region
        _
      $region16: #{_lambda_.9} parent=11 // pred_fallthru
        _
      // Predicated region
      $region17: #{_lambda_.9} parent=11 // pred_check
        %p121 = pneg %p77
      $region18: #{_lambda_.9} parent=11 // pred_check_branch
        %123 = sbr.rel (%p121) target = $region20
      $region19: #{_lambda_.9} parent=11 // pred_region
        _
      $region20: #{_lambda_.9} parent=11 // pred_fallthru
        _
    $region12: #{_lambda_.9} parent=5 // pred_fallthru
      _
    %p124 = scmp.lt.s32.totalorder %s9, 2
    // Predicated region
    $region21: #{_lambda_.9} parent=5 // pred_check
      %p125 = pneg %p124
    $region22: #{_lambda_.9} parent=5 // pred_check_branch
      %127 = sbr.rel (%p125) target = $region24
    $region23: #{_lambda_.9} parent=5 // pred_region
      // Predicated region
      $region25: #{_lambda_.9} parent=23 // pred_check
        %p128 = pneg %p29
      $region26: #{_lambda_.9} parent=23 // pred_check_branch
        %130 = sbr.rel (%p128) target = $region28
      $region27: #{_lambda_.9} parent=23 // pred_region
        %p131 = scmp.lt.s32.totalorder %s9, 1
        %s132 = scalar_select %p131, %s9, 1
        %s133 = smul.addr %s132, 8
        %s134 = smul.addr %s133, 4
        %s135 = scalar_lea.vmem %s0, %s134
      $region28: #{_lambda_.9} parent=23 // pred_fallthru
        _
    $region24: #{_lambda_.9} parent=5 // pred_fallthru
      _
    %p136 = scmp.le.s32.totalorder 1, %s9
    %p137 = scmp.lt.s32.totalorder %s9, 3
    %p138 = pnand %p136, %p137
    %p139 = pneg %p138
    // Predicated region
    $region29: #{_lambda_.9} parent=5 // pred_check
      _
    $region30: #{_lambda_.9} parent=5 // pred_check_branch
      %141 = sbr.rel (%p138) target = $region32
    $region31: #{_lambda_.9} parent=5 // pred_region
      %s142 = ssub.s32 %s9, 1
      %p143 = scmp.lt.s32.totalorder %s14, 1
      %s144 = scalar_select %p143, %s14, 1
      %s145 = smul.addr %s144, 8
      %s146 = smul.addr %s145, 4
      %s147 = scalar_lea.vmem %s0, %s146
      %p148 = pneg %p35
      %p149 = pneg %p32
      %p150 = pneg %p56
      %p151 = pneg %p53
      %p152 = pneg %p77
      %p153 = pneg %p74
      %p154 = pneg %p103
      %p155 = pneg %p100
      %p156 = scmp.lt.s32.totalorder %s14, 1
      %s157 = scalar_select %p156, %s14, 1
      %s158 = smul.addr %s157, 8
      %s159 = smul.addr %s158, 8
      %s160 = scalar_lea.vmem %s3, %s159
      %p161 = scmp.lt.s32.totalorder %s14, 1
      %s162 = scalar_select %p161, %s14, 1
      %s163 = smul.addr %s162, 8
      %s164 = smul.addr %s163, 4
      %s165 = scalar_lea.vmem %s0, %s164
      %p166 = scmp.lt.s32.totalorder %s14, 1
      %s167 = scalar_select %p166, %s14, 1
      %s168 = smul.addr %s167, 8
      %s169 = smul.addr %s168, 8
      %s170 = scalar_lea.vmem %s3, %s169
      %v172 = vld [vmem:[%s165] sm:$0xf]
      %v173 = vld [vmem:[%s165 + $0x4] sm:$0xf]
      %v174 = vld [vmem:[%s165 + $0x8] sm:$0xf]
      %v175 = vld [vmem:[%s165 + $0xc] sm:$0xf]
      %v176 = vld [vmem:[%s165 + $0x10] sm:$0xf]
      %v177 = vld [vmem:[%s165 + $0x14] sm:$0xf]
      %v178 = vld [vmem:[%s165 + $0x18] sm:$0xf]
      %v179 = vld [vmem:[%s165 + $0x1c] sm:$0xf]
      %v180 = vld [vmem:[%s1] sm:$0xf]
      %v181 = vld [vmem:[%s1 + $0x4] sm:$0xf]
      %v182 = vld [vmem:[%s1 + $0x8] sm:$0xf]
      %v183 = vld [vmem:[%s1 + $0xc] sm:$0xf]
      %v184 = vld [vmem:[%s1 + $0x10] sm:$0xf]
      %v185 = vld [vmem:[%s1 + $0x14] sm:$0xf]
      %v186 = vld [vmem:[%s1 + $0x18] sm:$0xf]
      %v187 = vld [vmem:[%s1 + $0x1c] sm:$0xf]
      %v188 = vld [vmem:[%s2] sm:$0x1]
      %v190 = vperm.slane %v188, 0
      %v200 = vunpack.c.l.b16 %v172
      %v201 = vunpack.c.l.b16 %v173
      %v202 = vunpack.c.l.b16 %v174
      %v203 = vunpack.c.l.b16 %v175
      %v204 = vunpack.c.l.b16 %v176
      %v205 = vunpack.c.l.b16 %v177
      %v206 = vunpack.c.l.b16 %v178
      %v207 = vunpack.c.l.b16 %v179
      %v208 = vpack.c.b16 %v201, %v200
      %v209 = vpack.c.b16 %v203, %v202
      %v210 = vpack.c.b16 %v205, %v204
      %v211 = vpack.c.b16 %v207, %v206
      %v220 = vunpack.c.l.b16 %v180
      %v221 = vunpack.c.l.b16 %v181
      %v222 = vunpack.c.l.b16 %v182
      %v223 = vunpack.c.l.b16 %v183
      %v224 = vunpack.c.l.b16 %v184
      %v225 = vunpack.c.l.b16 %v185
      %v226 = vunpack.c.l.b16 %v186
      %v227 = vunpack.c.l.b16 %v187
      %v228 = vpack.c.b16 %v221, %v220
      %v229 = vpack.c.b16 %v223, %v222
      %v230 = vpack.c.b16 %v225, %v224
      %v231 = vpack.c.b16 %v227, %v226
      %vm236 = vcmask 523264
      %v238 = vsel %vm236, %v208, 0
      %v241 = vsel %vm236, %v209, 0
      %v244 = vsel %vm236, %v210, 0
      %v247 = vsel %vm236, %v211, 0
      %249 = vmatpush.bf16.msra.mxu0 0
      %250 = vmatpush.bf16.msra.mxu0 0
      %251 = vmatpush.bf16.msra.mxu0 0
      %252 = vmatpush.bf16.msra.mxu0 0
      %253 = vmatpush.bf16.msra.mxu0 %v231
      %254 = vmatpush.bf16.msra.mxu0 %v230
      %255 = vmatpush.bf16.msra.mxu0 %v229
      %256 = vmatpush.bf16.msra.mxu0 %v228
      %257 = vmatmul.bf16.gmra.mxu0 %v238
      %v258 = vpop.f32.mrf.mxu0
      %v259 = vadd.f32 %v190, %v258
      %v260 = vpop.f32.mrf.mxu0
      %v261 = vadd.f32 %v190, %v260
      %262 = vmatmul.bf16.gmra.mxu0 %v241
      %v263 = vpop.f32.mrf.mxu0
      %v264 = vadd.f32 %v190, %v263
      %v265 = vpop.f32.mrf.mxu0
      %v266 = vadd.f32 %v190, %v265
      %267 = vmatmul.bf16.gmra.mxu0 %v244
      %v268 = vpop.f32.mrf.mxu0
      %v269 = vadd.f32 %v190, %v268
      %v270 = vpop.f32.mrf.mxu0
      %v271 = vadd.f32 %v190, %v270
      %272 = vmatmul.bf16.gmra.mxu0 %v247
      %v273 = vpop.f32.mrf.mxu0
      %v274 = vadd.f32 %v190, %v273
      %v275 = vpop.f32.mrf.mxu0
      %v276 = vadd.f32 %v190, %v275
      %277 = vdwg.mxu0
      %vm278 = vcmask 130048
      %279 = vst.msk [vmem:[%s170] sm:$0xff] %vm278, %v259
      %280 = vst.msk [vmem:[%s170 + $0x8] sm:$0xff] %vm278, %v261
      %281 = vst.msk [vmem:[%s170 + $0x10] sm:$0xff] %vm278, %v264
      %282 = vst.msk [vmem:[%s170 + $0x18] sm:$0xff] %vm278, %v266
      %283 = vst.msk [vmem:[%s170 + $0x20] sm:$0xff] %vm278, %v269
      %284 = vst.msk [vmem:[%s170 + $0x28] sm:$0xff] %vm278, %v271
      %285 = vst.msk [vmem:[%s170 + $0x30] sm:$0xff] %vm278, %v274
      %286 = vst.msk [vmem:[%s170 + $0x38] sm:$0xff] %vm278, %v276
      %p287 = scmp.lt.s32.totalorder %s14, 1
      %s288 = scalar_select %p287, %s14, 1
      %s289 = smul.addr %s288, 8
      %s290 = smul.addr %s289, 8
      %s291 = scalar_lea.vmem %s3, %s290
      // Predicated region
      $region33: #{_lambda_.9} parent=31 // pred_check
        %p292 = pneg %p100
      $region34: #{_lambda_.9} parent=31 // pred_check_branch
        %294 = sbr.rel (%p292) target = $region36
      $region35: #{_lambda_.9} parent=31 // pred_region
        _
      $region36: #{_lambda_.9} parent=31 // pred_fallthru
        _
    $region32: #{_lambda_.9} parent=5 // pred_fallthru
      _
    %p295 = scmp.le.s32.totalorder 2, %s9
    // Predicated region
    $region37: #{_lambda_.9} parent=5 // pred_check
      %p296 = pneg %p295
    $region38: #{_lambda_.9} parent=5 // pred_check_branch
      %298 = sbr.rel (%p296) target = $region40
    $region39: #{_lambda_.9} parent=5 // pred_region
      %s299 = ssub.s32 %s9, 2
      // Predicated region
      $region41: #{_lambda_.9} parent=39 // pred_check
        %p300 = pneg %p106
      $region42: #{_lambda_.9} parent=39 // pred_check_branch
        %302 = sbr.rel (%p300) target = $region44
      $region43: #{_lambda_.9} parent=39 // pred_region
        %p303 = scmp.lt.s32.totalorder %s15, 1
        %s304 = scalar_select %p303, %s15, 1
        %s305 = smul.addr %s304, 8
        %s306 = smul.addr %s305, 8
        %s307 = scalar_lea.vmem %s3, %s306
      $region44: #{_lambda_.9} parent=39 // pred_fallthru
        _
    $region40: #{_lambda_.9} parent=5 // pred_fallthru
      _
  $region6: #{_lambda_.9} parent=0 // loop_footer
    %s13 = sadd.s32 1, %s9
  $region7: #{_lambda_.9} parent=0 // loop_footer_branch
    %8 = sbr.rel target = $region3
  $region8: #{_lambda_.9} parent=0 // loop_exit
    _

// kernel: _lambda_.11
$region0: #{_lambda_.11}
  #allocation0 [shape = 'u32[]', space=smem, size = 0x4, offset = 0x4, fixed_abs, tag = 'smem constant byte address 0x4 - core index']
  #allocation1 [shape = 'u32[72,128]{1,0:T(1,128)}', space=vmem, size = 0x9000, scoped, tag = 'internal scratch']
  %s0 = inlined_call_operand.vmem [shape: f32[32,32], index: 0, kind: input, shape index: {}]
  %s1 = inlined_call_operand.vmem [shape: f32[1,32], index: 1, kind: input, shape index: {}]
  %s2 = inlined_call_operand.vmem [shape: f32[1,32], index: 2, kind: input, shape index: {}]
  %s3 = inlined_call_operand.vmem [shape: f32[32,32], index: 3, kind: output, shape index: {}]
  %s4 = sld [smem:[#allocation0]]
  $region22: #{_lambda_.11} parent=0
    _
  %s6 = ssub.s32 1, %s4
  %s7 = scalar_select 0, %s6, %s4
  // Predicated region
  $region2: #{_lambda_.11} parent=0 // pred_check
    _
  $region3: #{_lambda_.11} parent=0 // pred_check_branch
    %9 = sbr.rel (0) target = $region5
  $region4: #{_lambda_.11} parent=0 // pred_region
    _
  $region5: #{_lambda_.11} parent=0 // pred_fallthru
    _
  // Predicated region
  $region6: #{_lambda_.11} parent=0 // pred_check
    _
  $region7: #{_lambda_.11} parent=0 // pred_check_branch
    %11 = sbr.rel (0) target = $region9
  $region8: #{_lambda_.11} parent=0 // pred_region
    _
  $region9: #{_lambda_.11} parent=0 // pred_fallthru
    _
  // Predicated region
  $region10: #{_lambda_.11} parent=0 // pred_check
    _
  $region11: #{_lambda_.11} parent=0 // pred_check_branch
    %13 = sbr.rel (0) target = $region13
  $region12: #{_lambda_.11} parent=0 // pred_region
    _
  $region13: #{_lambda_.11} parent=0 // pred_fallthru
    _
  %v14 = vld [vmem:[%s0] sm:$0xff]
  %v15 = vld [vmem:[%s0 + $0x8] sm:$0xff]
  %v16 = vld [vmem:[%s0 + $0x10] sm:$0xff]
  %v17 = vld [vmem:[%s0 + $0x18] sm:$0xff]
  %vm18 = vcmask 261120
  %v19 = vsel %vm18, %v14, 0.0
  %v20 = vsel %vm18, %v15, 0.0
  %v21 = vadd.f32 %v19, %v20
  %v22 = vsel %vm18, %v16, 0.0
  %v23 = vadd.f32 %v21, %v22
  %v24 = vsel %vm18, %v17, 0.0
  %v25 = vadd.f32 %v23, %v24
  %v26 = vrot.slane %v25, 4
  %v27 = vadd.f32 %v25, %v26
  %v28 = vrot.slane %v27, 2
  %v29 = vadd.f32 %v27, %v28
  %v30 = vrot.slane %v29, 1
  %v31 = vadd.f32 %v29, %v30
  %v32 = vrcp.pop 32.0
  %v33 = vmul.f32 32.0, %v32
  %v34 = vsub.f32 1.0, %v33
  %v35 = vmul.f32 %v32, %v34
  %v36 = vadd.f32 %v32, %v35
  %vm37 = vweird.f32 %v32
  %v38 = vsel %vm37, %v32, %v36
  %v39 = vmul.f32 %v31, %v38
  %v40 = vsub.f32 %v14, %v39
  %v41 = vsub.f32 %v15, %v39
  %v42 = vsub.f32 %v16, %v39
  %v43 = vsub.f32 %v17, %v39
  %v44 = vmul.f32 %v40, %v40
  %v45 = vmul.f32 %v41, %v41
  %v46 = vmul.f32 %v42, %v42
  %v47 = vmul.f32 %v43, %v43
  %v48 = vsel %vm18, %v44, 0.0
  %v49 = vsel %vm18, %v45, 0.0
  %v50 = vadd.f32 %v48, %v49
  %v51 = vsel %vm18, %v46, 0.0
  %v52 = vadd.f32 %v50, %v51
  %v53 = vsel %vm18, %v47, 0.0
  %v54 = vadd.f32 %v52, %v53
  %v55 = vrot.slane %v54, 4
  %v56 = vadd.f32 %v54, %v55
  %v57 = vrot.slane %v56, 2
  %v58 = vadd.f32 %v56, %v57
  %v59 = vrot.slane %v58, 1
  %v60 = vadd.f32 %v58, %v59
  %v61 = vmul.f32 %v60, %v38
  %v62 = vadd.f32 %v61, 1e-05
  %v63 = vrsqrt.pop %v62
  %v64 = vmul.f32 %v63, %v62
  %v65 = vmul.f32 %v64, %v63
  %v66 = vmul.f32 0.5, %v65
  %v67 = vsub.f32 1.5, %v66
  %v68 = vmul.f32 %v63, %v67
  %vm69 = vweird.f32 %v62
  %vm70 = vweird.f32 %v63
  %vm71 = vmor %vm69, %vm70
  %v72 = vsel %vm71, %v63, %v68
  %v73 = vmul.f32 %v40, %v72
  %v74 = vmul.f32 %v41, %v72
  %v75 = vmul.f32 %v42, %v72
  %v76 = vmul.f32 %v43, %v72
  %v77 = vld [vmem:[%s1] sm:$0x1]
  %v79 = vperm.slane %v77, 0
  %v81 = vmul.f32 %v73, %v79
  %v82 = vmul.f32 %v74, %v79
  %v83 = vmul.f32 %v75, %v79
  %v84 = vmul.f32 %v76, %v79
  %v85 = vld [vmem:[%s2] sm:$0x1]
  %v87 = vperm.slane %v85, 0
  %v89 = vadd.f32 %v81, %v87
  %v90 = vadd.f32 %v82, %v87
  %v91 = vadd.f32 %v83, %v87
  %v92 = vadd.f32 %v84, %v87
  %93 = vst.msk [vmem:[%s3] sm:$0xff] %vm18, %v89
  %94 = vst.msk [vmem:[%s3 + $0x8] sm:$0xff] %vm18, %v90
  %95 = vst.msk [vmem:[%s3 + $0x10] sm:$0xff] %vm18, %v91
  %96 = vst.msk [vmem:[%s3 + $0x18] sm:$0xff] %vm18, %v92
  // Predicated region
  $region14: #{_lambda_.11} parent=0 // pred_check
    _
  $region15: #{_lambda_.11} parent=0 // pred_check_branch
    %98 = sbr.rel (0) target = $region17
  $region16: #{_lambda_.11} parent=0 // pred_region
    _
  $region17: #{_lambda_.11} parent=0 // pred_fallthru
    _
  // Predicated region
  $region18: #{_lambda_.11} parent=0 // pred_check
    _
  $region19: #{_lambda_.11} parent=0 // pred_check_branch
    %100 = sbr.rel (0) target = $region21
  $region20: #{_lambda_.11} parent=0 // pred_region
    _
  $region21: #{_lambda_.11} parent=0 // pred_fallthru
    _

// kernel: _lambda_.10
$region0: #{_lambda_.10}
  #allocation0 [shape = 'u32[]', space=smem, size = 0x4, offset = 0x4, fixed_abs, tag = 'smem constant byte address 0x4 - core index']
  #allocation1 [shape = 'u32[72,128]{1,0:T(1,128)}', space=vmem, size = 0x9000, scoped, tag = 'internal scratch']
  %s0 = inlined_call_operand.vmem [shape: bf16[2,16,256], index: 0, kind: input, shape index: {}]
  %s1 = inlined_call_operand.vmem [shape: bf16[256,32], index: 1, kind: input, shape index: {}]
  %s2 = inlined_call_operand.vmem [shape: f32[1,32], index: 2, kind: input, shape index: {}]
  %s3 = inlined_call_operand.vmem [shape: f32[2,16,32], index: 3, kind: output, shape index: {}]
  %s4 = sld [smem:[#allocation0]]
  $region45: #{_lambda_.10} parent=0
    _
  %s6 = ssub.s32 1, %s4
  %s7 = scalar_select 0, %s6, %s4
  loop: start=0, step=1, limit=4
  $region2: #{_lambda_.10} parent=0 // loop_pre_header
    _
  $region3: #{_lambda_.10} parent=0 // loop_header
    %s9 = sphi 0, %s13
    %p10 = scmp.ge.s32.totalorder %s9, 4
    %s19 = sphi 0, %s21
    %s22 = sphi 0, %s19
    %s23 = sphi 0, %s22
    %s39 = sphi 0, %s23
    %s43 = sphi 0, %s43
    %s45 = sphi 0, %s43
    %s46 = sphi 0, %s45
    %s60 = sphi 0, %s46
    %s64 = sphi 0, %s64
    %s66 = sphi 0, %s64
    %s67 = sphi 0, %s66
    %s81 = sphi 0, %s67
    %s87 = sphi 0, %s89
    %s90 = sphi 0, %s87
    %s91 = sphi 0, %s90
    %s107 = sphi 0, %s91
  $region4: #{_lambda_.10} parent=0 // loop_header_branch
    %12 = sbr.rel (%p10) target = $region8
  $region5: #{_lambda_.10} parent=0 // loop_body
    %s14 = ssub.s32 %s9, 1
    %s15 = ssub.s32 %s9, 2
    %s16 = sadd.s32 %s9, 1
    %s17 = ssub.s32 %s9, %s16
    %p18 = scmp.eq.s32.totalorder %s17, 0
    %s20 = sadd.s32 %s19, 1
    %s21 = scalar_select %p18, %s19, %s20
    %p24 = pneg %p18
    %p25 = scmp.eq.s32.totalorder %s9, 1
    %p26 = por %p24, %p25
    %p27 = scmp.ne.s32.totalorder %s19, %s22
    %p28 = scmp.eq.s32.totalorder %s9, 0
    %p29 = por %p27, %p28
    %p30 = scmp.ne.s32.totalorder %s19, %s22
    %p31 = scmp.eq.s32.totalorder %s14, 1
    %p32 = por %p30, %p31
    %p33 = scmp.ne.s32.totalorder %s22, %s23
    %p34 = scmp.eq.s32.totalorder %s14, 0
    %p35 = por %p33, %p34
    %p36 = scmp.ne.s32.totalorder %s22, %s23
    %p37 = scmp.eq.s32.totalorder %s15, 1
    %p38 = por %p36, %p37
    %p40 = scmp.ne.s32.totalorder %s23, %s39
    %p41 = scmp.eq.s32.totalorder %s15, 0
    %p42 = por %p40, %p41
    %s44 = sadd.s32 %s43, 1
    %p47 = scmp.eq.s32.totalorder %s9, 1
    %p48 = scmp.ne.s32.totalorder %s43, %s45
    %p49 = scmp.eq.s32.totalorder %s9, 0
    %p50 = por %p48, %p49
    %p51 = scmp.ne.s32.totalorder %s43, %s45
    %p52 = scmp.eq.s32.totalorder %s14, 1
    %p53 = por %p51, %p52
    %p54 = scmp.ne.s32.totalorder %s45, %s46
    %p55 = scmp.eq.s32.totalorder %s14, 0
    %p56 = por %p54, %p55
    %p57 = scmp.ne.s32.totalorder %s45, %s46
    %p58 = scmp.eq.s32.totalorder %s15, 1
    %p59 = por %p57, %p58
    %p61 = scmp.ne.s32.totalorder %s46, %s60
    %p62 = scmp.eq.s32.totalorder %s15, 0
    %p63 = por %p61, %p62
    %s65 = sadd.s32 %s64, 1
    %p68 = scmp.eq.s32.totalorder %s9, 1
    %p69 = scmp.ne.s32.totalorder %s64, %s66
    %p70 = scmp.eq.s32.totalorder %s9, 0
    %p71 = por %p69, %p70
    %p72 = scmp.ne.s32.totalorder %s64, %s66
    %p73 = scmp.eq.s32.totalorder %s14, 1
    %p74 = por %p72, %p73
    %p75 = scmp.ne.s32.totalorder %s66, %s67
    %p76 = scmp.eq.s32.totalorder %s14, 0
    %p77 = por %p75, %p76
    %p78 = scmp.ne.s32.totalorder %s66, %s67
    %p79 = scmp.eq.s32.totalorder %s15, 1
    %p80 = por %p78, %p79
    %p82 = scmp.ne.s32.totalorder %s67, %s81
    %p83 = scmp.eq.s32.totalorder %s15, 0
    %p84 = por %p82, %p83
    %s85 = ssub.s32 %s9, %s16
    %p86 = scmp.eq.s32.totalorder %s85, 0
    %s88 = sadd.s32 %s87, 1
    %s89 = scalar_select %p86, %s87, %s88
    %p92 = pneg %p86
    %p93 = scmp.eq.s32.totalorder %s9, 1
    %p94 = por %p92, %p93
    %p95 = scmp.ne.s32.totalorder %s87, %s90
    %p96 = scmp.eq.s32.totalorder %s9, 0
    %p97 = por %p95, %p96
    %p98 = scmp.ne.s32.totalorder %s87, %s90
    %p99 = scmp.eq.s32.totalorder %s14, 1
    %p100 = por %p98, %p99
    %p101 = scmp.ne.s32.totalorder %s90, %s91
    %p102 = scmp.eq.s32.totalorder %s14, 0
    %p103 = por %p101, %p102
    %p104 = scmp.ne.s32.totalorder %s90, %s91
    %p105 = scmp.eq.s32.totalorder %s15, 1
    %p106 = por %p104, %p105
    %p108 = scmp.ne.s32.totalorder %s91, %s107
    %p109 = scmp.eq.s32.totalorder %s15, 0
    %p110 = por %p108, %p109
    %p111 = scmp.le.s32.totalorder 1, %s9
    %p112 = scmp.lt.s32.totalorder %s9, 3
    %p113 = pnand %p111, %p112
    %p114 = pneg %p113
    // Predicated region
    $region9: #{_lambda_.10} parent=5 // pred_check
      _
    $region10: #{_lambda_.10} parent=5 // pred_check_branch
      %116 = sbr.rel (%p113) target = $region12
    $region11: #{_lambda_.10} parent=5 // pred_region
      %s117 = ssub.s32 %s9, 1
      // Predicated region
      $region13: #{_lambda_.10} parent=11 // pred_check
        %p118 = pneg %p56
      $region14: #{_lambda_.10} parent=11 // pred_check_branch
        %120 = sbr.rel (%p118) target = $region16
      $region15: #{_lambda_.10} parent=11 // pred_region
        _
      $region16: #{_lambda_.10} parent=11 // pred_fallthru
        _
      // Predicated region
      $region17: #{_lambda_.10} parent=11 // pred_check
        %p121 = pneg %p77
      $region18: #{_lambda_.10} parent=11 // pred_check_branch
        %123 = sbr.rel (%p121) target = $region20
      $region19: #{_lambda_.10} parent=11 // pred_region
        _
      $region20: #{_lambda_.10} parent=11 // pred_fallthru
        _
    $region12: #{_lambda_.10} parent=5 // pred_fallthru
      _
    %p124 = scmp.lt.s32.totalorder %s9, 2
    // Predicated region
    $region21: #{_lambda_.10} parent=5 // pred_check
      %p125 = pneg %p124
    $region22: #{_lambda_.10} parent=5 // pred_check_branch
      %127 = sbr.rel (%p125) target = $region24
    $region23: #{_lambda_.10} parent=5 // pred_region
      // Predicated region
      $region25: #{_lambda_.10} parent=23 // pred_check
        %p128 = pneg %p29
      $region26: #{_lambda_.10} parent=23 // pred_check_branch
        %130 = sbr.rel (%p128) target = $region28
      $region27: #{_lambda_.10} parent=23 // pred_region
        %p131 = scmp.lt.s32.totalorder %s9, 1
        %s132 = scalar_select %p131, %s9, 1
        %s133 = smul.addr %s132, 4
        %s134 = smul.addr %s133, 4
        %s135 = scalar_lea.vmem %s0, %s134
      $region28: #{_lambda_.10} parent=23 // pred_fallthru
        _
    $region24: #{_lambda_.10} parent=5 // pred_fallthru
      _
    %p136 = scmp.le.s32.totalorder 1, %s9
    %p137 = scmp.lt.s32.totalorder %s9, 3
    %p138 = pnand %p136, %p137
    %p139 = pneg %p138
    // Predicated region
    $region29: #{_lambda_.10} parent=5 // pred_check
      _
    $region30: #{_lambda_.10} parent=5 // pred_check_branch
      %141 = sbr.rel (%p138) target = $region32
    $region31: #{_lambda_.10} parent=5 // pred_region
      %s142 = ssub.s32 %s9, 1
      %p143 = scmp.lt.s32.totalorder %s14, 1
      %s144 = scalar_select %p143, %s14, 1
      %s145 = smul.addr %s144, 4
      %s146 = smul.addr %s145, 4
      %s147 = scalar_lea.vmem %s0, %s146
      %p148 = pneg %p35
      %p149 = pneg %p32
      %p150 = pneg %p56
      %p151 = pneg %p53
      %p152 = pneg %p77
      %p153 = pneg %p74
      %p154 = pneg %p103
      %p155 = pneg %p100
      %p156 = scmp.lt.s32.totalorder %s14, 1
      %s157 = scalar_select %p156, %s14, 1
      %s158 = smul.addr %s157, 2
      %s159 = smul.addr %s158, 8
      %s160 = scalar_lea.vmem %s3, %s159
      %p161 = scmp.lt.s32.totalorder %s14, 1
      %s162 = scalar_select %p161, %s14, 1
      %s163 = smul.addr %s162, 4
      %s164 = smul.addr %s163, 4
      %s165 = scalar_lea.vmem %s0, %s164
      %p166 = scmp.lt.s32.totalorder %s14, 1
      %s167 = scalar_select %p166, %s14, 1
      %s168 = smul.addr %s167, 2
      %s169 = smul.addr %s168, 8
      %s170 = scalar_lea.vmem %s3, %s169
      %v171 = vld [vmem:[%s165] sm:$0xff]
      %v172 = vld [vmem:[%s165 + $0x8] sm:$0xff]
      %v173 = vunpack.c.l.bf16 %v171
      %v174 = vunpack.c.h.bf16 %v171
      %v175 = vunpack.c.l.bf16 %v172
      %v176 = vunpack.c.h.bf16 %v172
      %vm177 = vcmp.gt.f32.partialorder %v173, 0.0
      %vm178 = vcmp.gt.f32.partialorder %v174, 0.0
      %vm179 = vcmp.gt.f32.partialorder %v175, 0.0
      %vm180 = vcmp.gt.f32.partialorder %v176, 0.0
      %v181 = vmul.f32 %v173, 0.20019531
      %v182 = vmul.f32 %v174, 0.20019531
      %v183 = vmul.f32 %v175, 0.20019531
      %v184 = vmul.f32 %v176, 0.20019531
      %v185 = vpack.c.bf16 %v182, %v181
      %v186 = vpack.c.bf16 %v184, %v183
      %vm187 = vmpackc.low %vm178, %vm177
      %vm188 = vmpackc.low %vm180, %vm179
      %v189 = vsel %vm187, %v171, %v185
      %v190 = vsel %vm188, %v172, %v186
      %v191 = vld [vmem:[%s1] sm:$0xf]
      %v192 = vld [vmem:[%s1 + $0x4] sm:$0xf]
      %v193 = vld [vmem:[%s1 + $0x8] sm:$0xf]
      %v194 = vld [vmem:[%s1 + $0xc] sm:$0xf]
      %v195 = vld [vmem:[%s1 + $0x10] sm:$0xf]
      %v196 = vld [vmem:[%s1 + $0x14] sm:$0xf]
      %v197 = vld [vmem:[%s1 + $0x18] sm:$0xf]
      %v198 = vld [vmem:[%s1 + $0x1c] sm:$0xf]
      %v199 = vld [vmem:[%s1 + $0x20] sm:$0xf]
      %v200 = vld [vmem:[%s1 + $0x24] sm:$0xf]
      %v201 = vld [vmem:[%s1 + $0x28] sm:$0xf]
      %v202 = vld [vmem:[%s1 + $0x2c] sm:$0xf]
      %v203 = vld [vmem:[%s1 + $0x30] sm:$0xf]
      %v204 = vld [vmem:[%s1 + $0x34] sm:$0xf]
      %v205 = vld [vmem:[%s1 + $0x38] sm:$0xf]
      %v206 = vld [vmem:[%s1 + $0x3c] sm:$0xf]
      %v207 = vld [vmem:[%s1 + $0x40] sm:$0xf]
      %v208 = vld [vmem:[%s1 + $0x44] sm:$0xf]
      %v209 = vld [vmem:[%s1 + $0x48] sm:$0xf]
      %v210 = vld [vmem:[%s1 + $0x4c] sm:$0xf]
      %v211 = vld [vmem:[%s1 + $0x50] sm:$0xf]
      %v212 = vld [vmem:[%s1 + $0x54] sm:$0xf]
      %v213 = vld [vmem:[%s1 + $0x58] sm:$0xf]
      %v214 = vld [vmem:[%s1 + $0x5c] sm:$0xf]
      %v215 = vld [vmem:[%s1 + $0x60] sm:$0xf]
      %v216 = vld [vmem:[%s1 + $0x64] sm:$0xf]
      %v217 = vld [vmem:[%s1 + $0x68] sm:$0xf]
      %v218 = vld [vmem:[%s1 + $0x6c] sm:$0xf]
      %v219 = vld [vmem:[%s1 + $0x70] sm:$0xf]
      %v220 = vld [vmem:[%s1 + $0x74] sm:$0xf]
      %v221 = vld [vmem:[%s1 + $0x78] sm:$0xf]
      %v222 = vld [vmem:[%s1 + $0x7c] sm:$0xf]
      %v223 = vld [vmem:[%s2] sm:$0x1]
      %v225 = vperm.slane %v223, 0
      %v229 = vunpack.c.l.b16 %v189
      %v230 = vunpack.c.h.b16 %v189
      %v231 = vunpack.c.l.b16 %v190
      %v232 = vunpack.c.h.b16 %v190
      %v233 = vpack.c.b16 %v231, %v229
      %v234 = vpack.c.b16 %v232, %v230
      %v269 = vunpack.c.l.b16 %v191
      %v270 = vunpack.c.l.b16 %v192
      %v271 = vunpack.c.l.b16 %v193
      %v272 = vunpack.c.l.b16 %v194
      %v273 = vunpack.c.l.b16 %v195
      %v274 = vunpack.c.l.b16 %v196
      %v275 = vunpack.c.l.b16 %v197
      %v276 = vunpack.c.l.b16 %v198
      %v277 = vunpack.c.l.b16 %v199
      %v278 = vunpack.c.l.b16 %v200
      %v279 = vunpack.c.l.b16 %v201
      %v280 = vunpack.c.l.b16 %v202
      %v281 = vunpack.c.l.b16 %v203
      %v282 = vunpack.c.l.b16 %v204
      %v283 = vunpack.c.l.b16 %v205
      %v284 = vunpack.c.l.b16 %v206
      %v285 = vunpack.c.l.b16 %v207
      %v286 = vunpack.c.l.b16 %v208
      %v287 = vunpack.c.l.b16 %v209
      %v288 = vunpack.c.l.b16 %v210
      %v289 = vunpack.c.l.b16 %v211
      %v290 = vunpack.c.l.b16 %v212
      %v291 = vunpack.c.l.b16 %v213
      %v292 = vunpack.c.l.b16 %v214
      %v293 = vunpack.c.l.b16 %v215
      %v294 = vunpack.c.l.b16 %v216
      %v295 = vunpack.c.l.b16 %v217
      %v296 = vunpack.c.l.b16 %v218
      %v297 = vunpack.c.l.b16 %v219
      %v298 = vunpack.c.l.b16 %v220
      %v299 = vunpack.c.l.b16 %v221
      %v300 = vunpack.c.l.b16 %v222
      %v301 = vpack.c.b16 %v270, %v269
      %v302 = vpack.c.b16 %v272, %v271
      %v303 = vpack.c.b16 %v274, %v273
      %v304 = vpack.c.b16 %v276, %v275
      %v305 = vpack.c.b16 %v278, %v277
      %v306 = vpack.c.b16 %v280, %v279
      %v307 = vpack.c.b16 %v282, %v281
      %v308 = vpack.c.b16 %v284, %v283
      %v309 = vpack.c.b16 %v286, %v285
      %v310 = vpack.c.b16 %v288, %v287
      %v311 = vpack.c.b16 %v290, %v289
      %v312 = vpack.c.b16 %v292, %v291
      %v313 = vpack.c.b16 %v294, %v293
      %v314 = vpack.c.b16 %v296, %v295
      %v315 = vpack.c.b16 %v298, %v297
      %v316 = vpack.c.b16 %v300, %v299
      %333 = vmatpush.bf16.msra.mxu0 %v308
      %334 = vmatpush.bf16.msra.mxu0 %v307
      %335 = vmatpush.bf16.msra.mxu0 %v306
      %336 = vmatpush.bf16.msra.mxu0 %v305
      %337 = vmatpush.bf16.msra.mxu0 %v304
      %338 = vmatpush.bf16.msra.mxu0 %v303
      %339 = vmatpush.bf16.msra.mxu0 %v302
      %340 = vmatpush.bf16.msra.mxu0 %v301
      %341 = vmatmul.bf16.gmra.mxu0 %v233
      %v342 = vpop.f32.mrf.mxu0
      %v343 = vadd.f32 %v225, %v342
      %v344 = vpop.f32.mrf.mxu0
      %v345 = vadd.f32 %v225, %v344
      %346 = vdwg.mxu0
      %347 = vmatpush.bf16.msra.mxu0 %v316
      %348 = vmatpush.bf16.msra.mxu0 %v315
      %349 = vmatpush.bf16.msra.mxu0 %v314
      %350 = vmatpush.bf16.msra.mxu0 %v313
      %351 = vmatpush.bf16.msra.mxu0 %v312
      %352 = vmatpush.bf16.msra.mxu0 %v311
      %353 = vmatpush.bf16.msra.mxu0 %v310
      %354 = vmatpush.bf16.msra.mxu0 %v309
      %355 = vmatmul.bf16.gmra.mxu0 %v234
      %v356 = vpop.f32.mrf.mxu0
      %v357 = vadd.f32 %v343, %v356
      %v358 = vpop.f32.mrf.mxu0
      %v359 = vadd.f32 %v345, %v358
      %360 = vdwg.mxu0
      %vm361 = vcmask 261120
      %362 = vst.msk [vmem:[%s170] sm:$0xff] %vm361, %v357
      %363 = vst.msk [vmem:[%s170 + $0x8] sm:$0xff] %vm361, %v359
      %p364 = scmp.lt.s32.totalorder %s14, 1
      %s365 = scalar_select %p364, %s14, 1
      %s366 = smul.addr %s365, 2
      %s367 = smul.addr %s366, 8
      %s368 = scalar_lea.vmem %s3, %s367
      // Predicated region
      $region33: #{_lambda_.10} parent=31 // pred_check
        %p369 = pneg %p100
      $region34: #{_lambda_.10} parent=31 // pred_check_branch
        %371 = sbr.rel (%p369) target = $region36
      $region35: #{_lambda_.10} parent=31 // pred_region
        _
      $region36: #{_lambda_.10} parent=31 // pred_fallthru
        _
    $region32: #{_lambda_.10} parent=5 // pred_fallthru
      _
    %p372 = scmp.le.s32.totalorder 2, %s9
    // Predicated region
    $region37: #{_lambda_.10} parent=5 // pred_check
      %p373 = pneg %p372
    $region38: #{_lambda_.10} parent=5 // pred_check_branch
      %375 = sbr.rel (%p373) target = $region40
    $region39: #{_lambda_.10} parent=5 // pred_region
      %s376 = ssub.s32 %s9, 2
      // Predicated region
      $region41: #{_lambda_.10} parent=39 // pred_check
        %p377 = pneg %p106
      $region42: #{_lambda_.10} parent=39 // pred_check_branch
        %379 = sbr.rel (%p377) target = $region44
      $region43: #{_lambda_.10} parent=39 // pred_region
        %p380 = scmp.lt.s32.totalorder %s15, 1
        %s381 = scalar_select %p380, %s15, 1
        %s382 = smul.addr %s381, 2
        %s383 = smul.addr %s382, 8
        %s384 = scalar_lea.vmem %s3, %s383
      $region44: #{_lambda_.10} parent=39 // pred_fallthru
        _
    $region40: #{_lambda_.10} parent=5 // pred_fallthru
      _
  $region6: #{_lambda_.10} parent=0 // loop_footer
    %s13 = sadd.s32 1, %s9
  $region7: #{_lambda_.10} parent=0 // loop_footer_branch
    %8 = sbr.rel target = $region3
  $region8: #{_lambda_.10} parent=0 // loop_exit
    _

// kernel: tile.5
$region0: #{tile.5}
  #allocation0 [shape = 's32[1]{0}', space=sflag, size = 0x4, scoped, tag = 'scoped memory for tile.5']
  %s0 = inlined_call_operand.<no memory space> [shape: f32[], index: 0, kind: input, shape index: {}]
  %s1 = inlined_call_operand.vmem [shape: f32[1,128], index: 1, kind: output, shape index: {}]
  %v2 = vstv %s0
  %3 = vst [vmem:[%s1] sm:$0x1] %v2

// kernel: _lambda_.12
$region0: #{_lambda_.12}
  #allocation0 [shape = 'u32[]', space=smem, size = 0x4, offset = 0x4, fixed_abs, tag = 'smem constant byte address 0x4 - core index']
  #allocation1 [shape = 'u32[72,128]{1,0:T(1,128)}', space=vmem, size = 0x9000, scoped, tag = 'internal scratch']
  %s0 = inlined_call_operand.vmem [shape: bf16[2,4,512], index: 0, kind: input, shape index: {}]
  %s1 = inlined_call_operand.vmem [shape: bf16[512,64], index: 1, kind: input, shape index: {}]
  %s2 = inlined_call_operand.vmem [shape: f32[1,64], index: 2, kind: input, shape index: {}]
  %s3 = inlined_call_operand.vmem [shape: f32[2,4,64], index: 3, kind: output, shape index: {}]
  %s4 = sld [smem:[#allocation0]]
  $region45: #{_lambda_.12} parent=0
    _
  %s6 = ssub.s32 1, %s4
  %s7 = scalar_select 0, %s6, %s4
  loop: start=0, step=1, limit=4
  $region2: #{_lambda_.12} parent=0 // loop_pre_header
    _
  $region3: #{_lambda_.12} parent=0 // loop_header
    %s9 = sphi 0, %s13
    %p10 = scmp.ge.s32.totalorder %s9, 4
    %s19 = sphi 0, %s21
    %s22 = sphi 0, %s19
    %s23 = sphi 0, %s22
    %s39 = sphi 0, %s23
    %s43 = sphi 0, %s43
    %s45 = sphi 0, %s43
    %s46 = sphi 0, %s45
    %s60 = sphi 0, %s46
    %s64 = sphi 0, %s64
    %s66 = sphi 0, %s64
    %s67 = sphi 0, %s66
    %s81 = sphi 0, %s67
    %s87 = sphi 0, %s89
    %s90 = sphi 0, %s87
    %s91 = sphi 0, %s90
    %s107 = sphi 0, %s91
  $region4: #{_lambda_.12} parent=0 // loop_header_branch
    %12 = sbr.rel (%p10) target = $region8
  $region5: #{_lambda_.12} parent=0 // loop_body
    %s14 = ssub.s32 %s9, 1
    %s15 = ssub.s32 %s9, 2
    %s16 = sadd.s32 %s9, 1
    %s17 = ssub.s32 %s9, %s16
    %p18 = scmp.eq.s32.totalorder %s17, 0
    %s20 = sadd.s32 %s19, 1
    %s21 = scalar_select %p18, %s19, %s20
    %p24 = pneg %p18
    %p25 = scmp.eq.s32.totalorder %s9, 1
    %p26 = por %p24, %p25
    %p27 = scmp.ne.s32.totalorder %s19, %s22
    %p28 = scmp.eq.s32.totalorder %s9, 0
    %p29 = por %p27, %p28
    %p30 = scmp.ne.s32.totalorder %s19, %s22
    %p31 = scmp.eq.s32.totalorder %s14, 1
    %p32 = por %p30, %p31
    %p33 = scmp.ne.s32.totalorder %s22, %s23
    %p34 = scmp.eq.s32.totalorder %s14, 0
    %p35 = por %p33, %p34
    %p36 = scmp.ne.s32.totalorder %s22, %s23
    %p37 = scmp.eq.s32.totalorder %s15, 1
    %p38 = por %p36, %p37
    %p40 = scmp.ne.s32.totalorder %s23, %s39
    %p41 = scmp.eq.s32.totalorder %s15, 0
    %p42 = por %p40, %p41
    %s44 = sadd.s32 %s43, 1
    %p47 = scmp.eq.s32.totalorder %s9, 1
    %p48 = scmp.ne.s32.totalorder %s43, %s45
    %p49 = scmp.eq.s32.totalorder %s9, 0
    %p50 = por %p48, %p49
    %p51 = scmp.ne.s32.totalorder %s43, %s45
    %p52 = scmp.eq.s32.totalorder %s14, 1
    %p53 = por %p51, %p52
    %p54 = scmp.ne.s32.totalorder %s45, %s46
    %p55 = scmp.eq.s32.totalorder %s14, 0
    %p56 = por %p54, %p55
    %p57 = scmp.ne.s32.totalorder %s45, %s46
    %p58 = scmp.eq.s32.totalorder %s15, 1
    %p59 = por %p57, %p58
    %p61 = scmp.ne.s32.totalorder %s46, %s60
    %p62 = scmp.eq.s32.totalorder %s15, 0
    %p63 = por %p61, %p62
    %s65 = sadd.s32 %s64, 1
    %p68 = scmp.eq.s32.totalorder %s9, 1
    %p69 = scmp.ne.s32.totalorder %s64, %s66
    %p70 = scmp.eq.s32.totalorder %s9, 0
    %p71 = por %p69, %p70
    %p72 = scmp.ne.s32.totalorder %s64, %s66
    %p73 = scmp.eq.s32.totalorder %s14, 1
    %p74 = por %p72, %p73
    %p75 = scmp.ne.s32.totalorder %s66, %s67
    %p76 = scmp.eq.s32.totalorder %s14, 0
    %p77 = por %p75, %p76
    %p78 = scmp.ne.s32.totalorder %s66, %s67
    %p79 = scmp.eq.s32.totalorder %s15, 1
    %p80 = por %p78, %p79
    %p82 = scmp.ne.s32.totalorder %s67, %s81
    %p83 = scmp.eq.s32.totalorder %s15, 0
    %p84 = por %p82, %p83
    %s85 = ssub.s32 %s9, %s16
    %p86 = scmp.eq.s32.totalorder %s85, 0
    %s88 = sadd.s32 %s87, 1
    %s89 = scalar_select %p86, %s87, %s88
    %p92 = pneg %p86
    %p93 = scmp.eq.s32.totalorder %s9, 1
    %p94 = por %p92, %p93
    %p95 = scmp.ne.s32.totalorder %s87, %s90
    %p96 = scmp.eq.s32.totalorder %s9, 0
    %p97 = por %p95, %p96
    %p98 = scmp.ne.s32.totalorder %s87, %s90
    %p99 = scmp.eq.s32.totalorder %s14, 1
    %p100 = por %p98, %p99
    %p101 = scmp.ne.s32.totalorder %s90, %s91
    %p102 = scmp.eq.s32.totalorder %s14, 0
    %p103 = por %p101, %p102
    %p104 = scmp.ne.s32.totalorder %s90, %s91
    %p105 = scmp.eq.s32.totalorder %s15, 1
    %p106 = por %p104, %p105
    %p108 = scmp.ne.s32.totalorder %s91, %s107
    %p109 = scmp.eq.s32.totalorder %s15, 0
    %p110 = por %p108, %p109
    %p111 = scmp.le.s32.totalorder 1, %s9
    %p112 = scmp.lt.s32.totalorder %s9, 3
    %p113 = pnand %p111, %p112
    %p114 = pneg %p113
    // Predicated region
    $region9: #{_lambda_.12} parent=5 // pred_check
      _
    $region10: #{_lambda_.12} parent=5 // pred_check_branch
      %116 = sbr.rel (%p113) target = $region12
    $region11: #{_lambda_.12} parent=5 // pred_region
      %s117 = ssub.s32 %s9, 1
      // Predicated region
      $region13: #{_lambda_.12} parent=11 // pred_check
        %p118 = pneg %p56
      $region14: #{_lambda_.12} parent=11 // pred_check_branch
        %120 = sbr.rel (%p118) target = $region16
      $region15: #{_lambda_.12} parent=11 // pred_region
        _
      $region16: #{_lambda_.12} parent=11 // pred_fallthru
        _
      // Predicated region
      $region17: #{_lambda_.12} parent=11 // pred_check
        %p121 = pneg %p77
      $region18: #{_lambda_.12} parent=11 // pred_check_branch
        %123 = sbr.rel (%p121) target = $region20
      $region19: #{_lambda_.12} parent=11 // pred_region
        _
      $region20: #{_lambda_.12} parent=11 // pred_fallthru
        _
    $region12: #{_lambda_.12} parent=5 // pred_fallthru
      _
    %p124 = scmp.lt.s32.totalorder %s9, 2
    // Predicated region
    $region21: #{_lambda_.12} parent=5 // pred_check
      %p125 = pneg %p124
    $region22: #{_lambda_.12} parent=5 // pred_check_branch
      %127 = sbr.rel (%p125) target = $region24
    $region23: #{_lambda_.12} parent=5 // pred_region
      // Predicated region
      $region25: #{_lambda_.12} parent=23 // pred_check
        %p128 = pneg %p29
      $region26: #{_lambda_.12} parent=23 // pred_check_branch
        %130 = sbr.rel (%p128) target = $region28
      $region27: #{_lambda_.12} parent=23 // pred_region
        %p131 = scmp.lt.s32.totalorder %s9, 1
        %s132 = scalar_select %p131, %s9, 1
        %s133 = smul.addr %s132, 4
        %s134 = smul.addr %s133, 2
        %s135 = scalar_lea.vmem %s0, %s134
      $region28: #{_lambda_.12} parent=23 // pred_fallthru
        _
    $region24: #{_lambda_.12} parent=5 // pred_fallthru
      _
    %p136 = scmp.le.s32.totalorder 1, %s9
    %p137 = scmp.lt.s32.totalorder %s9, 3
    %p138 = pnand %p136, %p137
    %p139 = pneg %p138
    // Predicated region
    $region29: #{_lambda_.12} parent=5 // pred_check
      _
    $region30: #{_lambda_.12} parent=5 // pred_check_branch
      %141 = sbr.rel (%p138) target = $region32
    $region31: #{_lambda_.12} parent=5 // pred_region
      %s142 = ssub.s32 %s9, 1
      %p143 = scmp.lt.s32.totalorder %s14, 1
      %s144 = scalar_select %p143, %s14, 1
      %s145 = smul.addr %s144, 4
      %s146 = smul.addr %s145, 2
      %s147 = scalar_lea.vmem %s0, %s146
      %p148 = pneg %p35
      %p149 = pneg %p32
      %p150 = pneg %p56
      %p151 = pneg %p53
      %p152 = pneg %p77
      %p153 = pneg %p74
      %p154 = pneg %p103
      %p155 = pneg %p100
      %p156 = scmp.lt.s32.totalorder %s14, 1
      %s157 = scalar_select %p156, %s14, 1
      %s158 = smul.addr %s157, 4
      %s159 = scalar_lea.vmem %s3, %s158
      %p160 = scmp.lt.s32.totalorder %s14, 1
      %s161 = scalar_select %p160, %s14, 1
      %s162 = smul.addr %s161, 4
      %s163 = smul.addr %s162, 2
      %s164 = scalar_lea.vmem %s0, %s163
      %p165 = scmp.lt.s32.totalorder %s14, 1
      %s166 = scalar_select %p165, %s14, 1
      %s167 = smul.addr %s166, 4
      %s168 = scalar_lea.vmem %s3, %s167
      %v170 = vld [vmem:[%s164] sm:$0xff]
      %v171 = vunpack.c.l.bf16 %v170
      %v172 = vunpack.c.h.bf16 %v170
      %vm173 = vcmp.gt.f32.partialorder %v171, 0.0
      %vm174 = vcmp.gt.f32.partialorder %v172, 0.0
      %v175 = vmul.f32 %v171, 0.20019531
      %v176 = vmul.f32 %v172, 0.20019531
      %179 = vst [vmem:[#allocation1] ss:$2 sm:$0xff] %v175
      %s180 = scalar_lea.vmem [#allocation1], 16
      %181 = vst [vmem:[%s180] ss:$2 sm:$0xff] %v176
      %v182 = vld.sshfl [vmem:[#allocation1] sm:$0xff pattern:$0x75316420]
      %v183 = vld.sshfl [vmem:[#allocation1 + $0x8] sm:$0xff pattern:$0x75316420]
      %v184 = vld.sshfl [vmem:[#allocation1 + $0x10] sm:$0xff pattern:$0x75316420]
      %v185 = vld.sshfl [vmem:[#allocation1 + $0x18] sm:$0xff pattern:$0x75316420]
      %v190 = vpack.c.bf16 %v183, %v182
      %v191 = vpack.c.bf16 %v185, %v184
      %v192 = vsel %vm173, 1, 0
      %v193 = vsel %vm174, 1, 0
      %v194 = vpack.c.b16 %v193, %v192
      %v195 = vunpack.c.l.b16 %v194
      %v196 = vunpack.c.h.b16 %v194
      %v197 = vunpack.c.l.b16 0
      %v198 = vunpack.c.h.b16 0
      %vm199 = vcmp.ne.s32.totalorder %v195, %v197
      %vm200 = vcmp.ne.s32.totalorder %v196, %v198
      %vm201 = vmpackc.low %vm200, %vm199
      %v204 = vrot.slane %v190, 2
      %v205 = vrot.slane %v191, 4
      %v206 = vrot.slane %v191, 6
      %vm207 = vcmask 1041408
      %v210 = vsel %vm207, %v190, %v204
      %vm211 = vcmask 1045508
      %v214 = vsel %vm211, %v205, %v206
      %vm215 = vcmask 1043456
      %v216 = vsel %vm215, %v210, %v214
      %v218 = vsel %vm201, %v170, %v216
      %v219 = vld [vmem:[%s1] sm:$0xf]
      %v220 = vld [vmem:[%s1 + $0x4] sm:$0xf]
      %v221 = vld [vmem:[%s1 + $0x8] sm:$0xf]
      %v222 = vld [vmem:[%s1 + $0xc] sm:$0xf]
      %v223 = vld [vmem:[%s1 + $0x10] sm:$0xf]
      %v224 = vld [vmem:[%s1 + $0x14] sm:$0xf]
      %v225 = vld [vmem:[%s1 + $0x18] sm:$0xf]
      %v226 = vld [vmem:[%s1 + $0x1c] sm:$0xf]
      %v227 = vld [vmem:[%s1 + $0x20] sm:$0xf]
      %v228 = vld [vmem:[%s1 + $0x24] sm:$0xf]
      %v229 = vld [vmem:[%s1 + $0x28] sm:$0xf]
      %v230 = vld [vmem:[%s1 + $0x2c] sm:$0xf]
      %v231 = vld [vmem:[%s1 + $0x30] sm:$0xf]
      %v232 = vld [vmem:[%s1 + $0x34] sm:$0xf]
      %v233 = vld [vmem:[%s1 + $0x38] sm:$0xf]
      %v234 = vld [vmem:[%s1 + $0x3c] sm:$0xf]
      %v235 = vld [vmem:[%s1 + $0x40] sm:$0xf]
      %v236 = vld [vmem:[%s1 + $0x44] sm:$0xf]
      %v237 = vld [vmem:[%s1 + $0x48] sm:$0xf]
      %v238 = vld [vmem:[%s1 + $0x4c] sm:$0xf]
      %v239 = vld [vmem:[%s1 + $0x50] sm:$0xf]
      %v240 = vld [vmem:[%s1 + $0x54] sm:$0xf]
      %v241 = vld [vmem:[%s1 + $0x58] sm:$0xf]
      %v242 = vld [vmem:[%s1 + $0x5c] sm:$0xf]
      %v243 = vld [vmem:[%s1 + $0x60] sm:$0xf]
      %v244 = vld [vmem:[%s1 + $0x64] sm:$0xf]
      %v245 = vld [vmem:[%s1 + $0x68] sm:$0xf]
      %v246 = vld [vmem:[%s1 + $0x6c] sm:$0xf]
      %v247 = vld [vmem:[%s1 + $0x70] sm:$0xf]
      %v248 = vld [vmem:[%s1 + $0x74] sm:$0xf]
      %v249 = vld [vmem:[%s1 + $0x78] sm:$0xf]
      %v250 = vld [vmem:[%s1 + $0x7c] sm:$0xf]
      %v251 = vld [vmem:[%s1 + $0x80] sm:$0xf]
      %v252 = vld [vmem:[%s1 + $0x84] sm:$0xf]
      %v253 = vld [vmem:[%s1 + $0x88] sm:$0xf]
      %v254 = vld [vmem:[%s1 + $0x8c] sm:$0xf]
      %v255 = vld [vmem:[%s1 + $0x90] sm:$0xf]
      %v256 = vld [vmem:[%s1 + $0x94] sm:$0xf]
      %v257 = vld [vmem:[%s1 + $0x98] sm:$0xf]
      %v258 = vld [vmem:[%s1 + $0x9c] sm:$0xf]
      %v259 = vld [vmem:[%s1 + $0xa0] sm:$0xf]
      %v260 = vld [vmem:[%s1 + $0xa4] sm:$0xf]
      %v261 = vld [vmem:[%s1 + $0xa8] sm:$0xf]
      %v262 = vld [vmem:[%s1 + $0xac] sm:$0xf]
      %v263 = vld [vmem:[%s1 + $0xb0] sm:$0xf]
      %v264 = vld [vmem:[%s1 + $0xb4] sm:$0xf]
      %v265 = vld [vmem:[%s1 + $0xb8] sm:$0xf]
      %v266 = vld [vmem:[%s1 + $0xbc] sm:$0xf]
      %v267 = vld [vmem:[%s1 + $0xc0] sm:$0xf]
      %v268 = vld [vmem:[%s1 + $0xc4] sm:$0xf]
      %v269 = vld [vmem:[%s1 + $0xc8] sm:$0xf]
      %v270 = vld [vmem:[%s1 + $0xcc] sm:$0xf]
      %v271 = vld [vmem:[%s1 + $0xd0] sm:$0xf]
      %v272 = vld [vmem:[%s1 + $0xd4] sm:$0xf]
      %v273 = vld [vmem:[%s1 + $0xd8] sm:$0xf]
      %v274 = vld [vmem:[%s1 + $0xdc] sm:$0xf]
      %v275 = vld [vmem:[%s1 + $0xe0] sm:$0xf]
      %v276 = vld [vmem:[%s1 + $0xe4] sm:$0xf]
      %v277 = vld [vmem:[%s1 + $0xe8] sm:$0xf]
      %v278 = vld [vmem:[%s1 + $0xec] sm:$0xf]
      %v279 = vld [vmem:[%s1 + $0xf0] sm:$0xf]
      %v280 = vld [vmem:[%s1 + $0xf4] sm:$0xf]
      %v281 = vld [vmem:[%s1 + $0xf8] sm:$0xf]
      %v282 = vld [vmem:[%s1 + $0xfc] sm:$0xf]
      %v283 = vld [vmem:[%s2] sm:$0x1]
      %v285 = vperm.slane %v283, 0
      %288 = vst [vmem:[#allocation1] ss:$4 sm:$0xff] %v218
      %v289 = vld.sshfl [vmem:[#allocation1] sm:$0xff pattern:$0x73625140]
      %v290 = vld.sshfl [vmem:[#allocation1 + $0x8] sm:$0xff pattern:$0x73625140]
      %v291 = vld.sshfl [vmem:[#allocation1 + $0x10] sm:$0xff pattern:$0x73625140]
      %v292 = vld.sshfl [vmem:[#allocation1 + $0x18] sm:$0xff pattern:$0x73625140]
      %v361 = vunpack.c.l.b16 %v219
      %v362 = vunpack.c.l.b16 %v220
      %v363 = vunpack.c.l.b16 %v221
      %v364 = vunpack.c.l.b16 %v222
      %v365 = vunpack.c.l.b16 %v223
      %v366 = vunpack.c.l.b16 %v224
      %v367 = vunpack.c.l.b16 %v225
      %v368 = vunpack.c.l.b16 %v226
      %v369 = vunpack.c.l.b16 %v227
      %v370 = vunpack.c.l.b16 %v228
      %v371 = vunpack.c.l.b16 %v229
      %v372 = vunpack.c.l.b16 %v230
      %v373 = vunpack.c.l.b16 %v231
      %v374 = vunpack.c.l.b16 %v232
      %v375 = vunpack.c.l.b16 %v233
      %v376 = vunpack.c.l.b16 %v234
      %v377 = vunpack.c.l.b16 %v235
      %v378 = vunpack.c.l.b16 %v236
      %v379 = vunpack.c.l.b16 %v237
      %v380 = vunpack.c.l.b16 %v238
      %v381 = vunpack.c.l.b16 %v239
      %v382 = vunpack.c.l.b16 %v240
      %v383 = vunpack.c.l.b16 %v241
      %v384 = vunpack.c.l.b16 %v242
      %v385 = vunpack.c.l.b16 %v243
      %v386 = vunpack.c.l.b16 %v244
      %v387 = vunpack.c.l.b16 %v245
      %v388 = vunpack.c.l.b16 %v246
      %v389 = vunpack.c.l.b16 %v247
      %v390 = vunpack.c.l.b16 %v248
      %v391 = vunpack.c.l.b16 %v249
      %v392 = vunpack.c.l.b16 %v250
      %v393 = vunpack.c.l.b16 %v251
      %v394 = vunpack.c.l.b16 %v252
      %v395 = vunpack.c.l.b16 %v253
      %v396 = vunpack.c.l.b16 %v254
      %v397 = vunpack.c.l.b16 %v255
      %v398 = vunpack.c.l.b16 %v256
      %v399 = vunpack.c.l.b16 %v257
      %v400 = vunpack.c.l.b16 %v258
      %v401 = vunpack.c.l.b16 %v259
      %v402 = vunpack.c.l.b16 %v260
      %v403 = vunpack.c.l.b16 %v261
      %v404 = vunpack.c.l.b16 %v262
      %v405 = vunpack.c.l.b16 %v263
      %v406 = vunpack.c.l.b16 %v264
      %v407 = vunpack.c.l.b16 %v265
      %v408 = vunpack.c.l.b16 %v266
      %v409 = vunpack.c.l.b16 %v267
      %v410 = vunpack.c.l.b16 %v268
      %v411 = vunpack.c.l.b16 %v269
      %v412 = vunpack.c.l.b16 %v270
      %v413 = vunpack.c.l.b16 %v271
      %v414 = vunpack.c.l.b16 %v272
      %v415 = vunpack.c.l.b16 %v273
      %v416 = vunpack.c.l.b16 %v274
      %v417 = vunpack.c.l.b16 %v275
      %v418 = vunpack.c.l.b16 %v276
      %v419 = vunpack.c.l.b16 %v277
      %v420 = vunpack.c.l.b16 %v278
      %v421 = vunpack.c.l.b16 %v279
      %v422 = vunpack.c.l.b16 %v280
      %v423 = vunpack.c.l.b16 %v281
      %v424 = vunpack.c.l.b16 %v282
      %v425 = vpack.c.b16 %v362, %v361
      %v426 = vpack.c.b16 %v364, %v363
      %v427 = vpack.c.b16 %v366, %v365
      %v428 = vpack.c.b16 %v368, %v367
      %v429 = vpack.c.b16 %v370, %v369
      %v430 = vpack.c.b16 %v372, %v371
      %v431 = vpack.c.b16 %v374, %v373
      %v432 = vpack.c.b16 %v376, %v375
      %v433 = vpack.c.b16 %v378, %v377
      %v434 = vpack.c.b16 %v380, %v379
      %v435 = vpack.c.b16 %v382, %v381
      %v436 = vpack.c.b16 %v384, %v383
      %v437 = vpack.c.b16 %v386, %v385
      %v438 = vpack.c.b16 %v388, %v387
      %v439 = vpack.c.b16 %v390, %v389
      %v440 = vpack.c.b16 %v392, %v391
      %v441 = vpack.c.b16 %v394, %v393
      %v442 = vpack.c.b16 %v396, %v395
      %v443 = vpack.c.b16 %v398, %v397
      %v444 = vpack.c.b16 %v400, %v399
      %v445 = vpack.c.b16 %v402, %v401
      %v446 = vpack.c.b16 %v404, %v403
      %v447 = vpack.c.b16 %v406, %v405
      %v448 = vpack.c.b16 %v408, %v407
      %v449 = vpack.c.b16 %v410, %v409
      %v450 = vpack.c.b16 %v412, %v411
      %v451 = vpack.c.b16 %v414, %v413
      %v452 = vpack.c.b16 %v416, %v415
      %v453 = vpack.c.b16 %v418, %v417
      %v454 = vpack.c.b16 %v420, %v419
      %v455 = vpack.c.b16 %v422, %v421
      %v456 = vpack.c.b16 %v424, %v423
      %489 = vmatpush.bf16.msra.mxu0 %v432
      %490 = vmatpush.bf16.msra.mxu0 %v431
      %491 = vmatpush.bf16.msra.mxu0 %v430
      %492 = vmatpush.bf16.msra.mxu0 %v429
      %493 = vmatpush.bf16.msra.mxu0 %v428
      %494 = vmatpush.bf16.msra.mxu0 %v427
      %495 = vmatpush.bf16.msra.mxu0 %v426
      %496 = vmatpush.bf16.msra.mxu0 %v425
      %497 = vmatmul.bf16.gmra.mxu0 %v289
      %v498 = vpop.f32.mrf.mxu0
      %v499 = vadd.f32 %v285, %v498
      %v500 = vpop.f32.mrf.mxu0
      %501 = vdwg.mxu0
      %502 = vmatpush.bf16.msra.mxu0 %v440
      %503 = vmatpush.bf16.msra.mxu0 %v439
      %504 = vmatpush.bf16.msra.mxu0 %v438
      %505 = vmatpush.bf16.msra.mxu0 %v437
      %506 = vmatpush.bf16.msra.mxu0 %v436
      %507 = vmatpush.bf16.msra.mxu0 %v435
      %508 = vmatpush.bf16.msra.mxu0 %v434
      %509 = vmatpush.bf16.msra.mxu0 %v433
      %510 = vmatmul.bf16.gmra.mxu0 %v290
      %v511 = vpop.f32.mrf.mxu0
      %v512 = vadd.f32 %v499, %v511
      %v513 = vpop.f32.mrf.mxu0
      %514 = vdwg.mxu0
      %515 = vmatpush.bf16.msra.mxu0 %v448
      %516 = vmatpush.bf16.msra.mxu0 %v447
      %517 = vmatpush.bf16.msra.mxu0 %v446
      %518 = vmatpush.bf16.msra.mxu0 %v445
      %519 = vmatpush.bf16.msra.mxu0 %v444
      %520 = vmatpush.bf16.msra.mxu0 %v443
      %521 = vmatpush.bf16.msra.mxu0 %v442
      %522 = vmatpush.bf16.msra.mxu0 %v441
      %523 = vmatmul.bf16.gmra.mxu0 %v291
      %v524 = vpop.f32.mrf.mxu0
      %v525 = vadd.f32 %v512, %v524
      %v526 = vpop.f32.mrf.mxu0
      %527 = vdwg.mxu0
      %528 = vmatpush.bf16.msra.mxu0 %v456
      %529 = vmatpush.bf16.msra.mxu0 %v455
      %530 = vmatpush.bf16.msra.mxu0 %v454
      %531 = vmatpush.bf16.msra.mxu0 %v453
      %532 = vmatpush.bf16.msra.mxu0 %v452
      %533 = vmatpush.bf16.msra.mxu0 %v451
      %534 = vmatpush.bf16.msra.mxu0 %v450
      %535 = vmatpush.bf16.msra.mxu0 %v449
      %536 = vmatmul.bf16.gmra.mxu0 %v292
      %v537 = vpop.f32.mrf.mxu0
      %v538 = vadd.f32 %v525, %v537
      %v539 = vpop.f32.mrf.mxu0
      %540 = vdwg.mxu0
      %vm541 = vcmask 519168
      %542 = vst.msk [vmem:[%s168] sm:$0xf] %vm541, %v538
      %p543 = scmp.lt.s32.totalorder %s14, 1
      %s544 = scalar_select %p543, %s14, 1
      %s545 = smul.addr %s544, 4
      %s546 = scalar_lea.vmem %s3, %s545
      // Predicated region
      $region33: #{_lambda_.12} parent=31 // pred_check
        %p547 = pneg %p100
      $region34: #{_lambda_.12} parent=31 // pred_check_branch
        %549 = sbr.rel (%p547) target = $region36
      $region35: #{_lambda_.12} parent=31 // pred_region
        _
      $region36: #{_lambda_.12} parent=31 // pred_fallthru
        _
    $region32: #{_lambda_.12} parent=5 // pred_fallthru
      _
    %p550 = scmp.le.s32.totalorder 2, %s9
    // Predicated region
    $region37: #{_lambda_.12} parent=5 // pred_check
      %p551 = pneg %p550
    $region38: #{_lambda_.12} parent=5 // pred_check_branch
      %553 = sbr.rel (%p551) target = $region40
    $region39: #{_lambda_.12} parent=5 // pred_region
      %s554 = ssub.s32 %s9, 2
      // Predicated region
      $region41: #{_lambda_.12} parent=39 // pred_check
        %p555 = pneg %p106
      $region42: #{_lambda_.12} parent=39 // pred_check_branch
        %557 = sbr.rel (%p555) target = $region44
      $region43: #{_lambda_.12} parent=39 // pred_region
        %p558 = scmp.lt.s32.totalorder %s15, 1
        %s559 = scalar_select %p558, %s15, 1
        %s560 = smul.addr %s559, 4
        %s561 = scalar_lea.vmem %s3, %s560
      $region44: #{_lambda_.12} parent=39 // pred_fallthru
        _
    $region40: #{_lambda_.12} parent=5 // pred_fallthru
      _
  $region6: #{_lambda_.12} parent=0 // loop_footer
    %s13 = sadd.s32 1, %s9
  $region7: #{_lambda_.12} parent=0 // loop_footer_branch
    %8 = sbr.rel target = $region3
  $region8: #{_lambda_.12} parent=0 // loop_exit
    _

// kernel: _lambda_.13
$region0: #{_lambda_.13}
  #allocation0 [shape = 'u32[]', space=smem, size = 0x4, offset = 0x4, fixed_abs, tag = 'smem constant byte address 0x4 - core index']
  #allocation1 [shape = 'u32[72,128]{1,0:T(1,128)}', space=vmem, size = 0x9000, scoped, tag = 'internal scratch']
  %s0 = inlined_call_operand.vmem [shape: bf16[2,9,256], index: 0, kind: input, shape index: {}]
  %s1 = inlined_call_operand.vmem [shape: bf16[256,128], index: 1, kind: input, shape index: {}]
  %s2 = inlined_call_operand.vmem [shape: f32[1,128], index: 2, kind: input, shape index: {}]
  %s3 = inlined_call_operand.vmem [shape: f32[2,9,128], index: 3, kind: output, shape index: {}]
  %s4 = sld [smem:[#allocation0]]
  $region45: #{_lambda_.13} parent=0
    _
  %s6 = ssub.s32 1, %s4
  %s7 = scalar_select 0, %s6, %s4
  loop: start=0, step=1, limit=4
  $region2: #{_lambda_.13} parent=0 // loop_pre_header
    _
  $region3: #{_lambda_.13} parent=0 // loop_header
    %s9 = sphi 0, %s13
    %p10 = scmp.ge.s32.totalorder %s9, 4
    %s19 = sphi 0, %s21
    %s22 = sphi 0, %s19
    %s23 = sphi 0, %s22
    %s39 = sphi 0, %s23
    %s43 = sphi 0, %s43
    %s45 = sphi 0, %s43
    %s46 = sphi 0, %s45
    %s60 = sphi 0, %s46
    %s64 = sphi 0, %s64
    %s66 = sphi 0, %s64
    %s67 = sphi 0, %s66
    %s81 = sphi 0, %s67
    %s87 = sphi 0, %s89
    %s90 = sphi 0, %s87
    %s91 = sphi 0, %s90
    %s107 = sphi 0, %s91
  $region4: #{_lambda_.13} parent=0 // loop_header_branch
    %12 = sbr.rel (%p10) target = $region8
  $region5: #{_lambda_.13} parent=0 // loop_body
    %s14 = ssub.s32 %s9, 1
    %s15 = ssub.s32 %s9, 2
    %s16 = sadd.s32 %s9, 1
    %s17 = ssub.s32 %s9, %s16
    %p18 = scmp.eq.s32.totalorder %s17, 0
    %s20 = sadd.s32 %s19, 1
    %s21 = scalar_select %p18, %s19, %s20
    %p24 = pneg %p18
    %p25 = scmp.eq.s32.totalorder %s9, 1
    %p26 = por %p24, %p25
    %p27 = scmp.ne.s32.totalorder %s19, %s22
    %p28 = scmp.eq.s32.totalorder %s9, 0
    %p29 = por %p27, %p28
    %p30 = scmp.ne.s32.totalorder %s19, %s22
    %p31 = scmp.eq.s32.totalorder %s14, 1
    %p32 = por %p30, %p31
    %p33 = scmp.ne.s32.totalorder %s22, %s23
    %p34 = scmp.eq.s32.totalorder %s14, 0
    %p35 = por %p33, %p34
    %p36 = scmp.ne.s32.totalorder %s22, %s23
    %p37 = scmp.eq.s32.totalorder %s15, 1
    %p38 = por %p36, %p37
    %p40 = scmp.ne.s32.totalorder %s23, %s39
    %p41 = scmp.eq.s32.totalorder %s15, 0
    %p42 = por %p40, %p41
    %s44 = sadd.s32 %s43, 1
    %p47 = scmp.eq.s32.totalorder %s9, 1
    %p48 = scmp.ne.s32.totalorder %s43, %s45
    %p49 = scmp.eq.s32.totalorder %s9, 0
    %p50 = por %p48, %p49
    %p51 = scmp.ne.s32.totalorder %s43, %s45
    %p52 = scmp.eq.s32.totalorder %s14, 1
    %p53 = por %p51, %p52
    %p54 = scmp.ne.s32.totalorder %s45, %s46
    %p55 = scmp.eq.s32.totalorder %s14, 0
    %p56 = por %p54, %p55
    %p57 = scmp.ne.s32.totalorder %s45, %s46
    %p58 = scmp.eq.s32.totalorder %s15, 1
    %p59 = por %p57, %p58
    %p61 = scmp.ne.s32.totalorder %s46, %s60
    %p62 = scmp.eq.s32.totalorder %s15, 0
    %p63 = por %p61, %p62
    %s65 = sadd.s32 %s64, 1
    %p68 = scmp.eq.s32.totalorder %s9, 1
    %p69 = scmp.ne.s32.totalorder %s64, %s66
    %p70 = scmp.eq.s32.totalorder %s9, 0
    %p71 = por %p69, %p70
    %p72 = scmp.ne.s32.totalorder %s64, %s66
    %p73 = scmp.eq.s32.totalorder %s14, 1
    %p74 = por %p72, %p73
    %p75 = scmp.ne.s32.totalorder %s66, %s67
    %p76 = scmp.eq.s32.totalorder %s14, 0
    %p77 = por %p75, %p76
    %p78 = scmp.ne.s32.totalorder %s66, %s67
    %p79 = scmp.eq.s32.totalorder %s15, 1
    %p80 = por %p78, %p79
    %p82 = scmp.ne.s32.totalorder %s67, %s81
    %p83 = scmp.eq.s32.totalorder %s15, 0
    %p84 = por %p82, %p83
    %s85 = ssub.s32 %s9, %s16
    %p86 = scmp.eq.s32.totalorder %s85, 0
    %s88 = sadd.s32 %s87, 1
    %s89 = scalar_select %p86, %s87, %s88
    %p92 = pneg %p86
    %p93 = scmp.eq.s32.totalorder %s9, 1
    %p94 = por %p92, %p93
    %p95 = scmp.ne.s32.totalorder %s87, %s90
    %p96 = scmp.eq.s32.totalorder %s9, 0
    %p97 = por %p95, %p96
    %p98 = scmp.ne.s32.totalorder %s87, %s90
    %p99 = scmp.eq.s32.totalorder %s14, 1
    %p100 = por %p98, %p99
    %p101 = scmp.ne.s32.totalorder %s90, %s91
    %p102 = scmp.eq.s32.totalorder %s14, 0
    %p103 = por %p101, %p102
    %p104 = scmp.ne.s32.totalorder %s90, %s91
    %p105 = scmp.eq.s32.totalorder %s15, 1
    %p106 = por %p104, %p105
    %p108 = scmp.ne.s32.totalorder %s91, %s107
    %p109 = scmp.eq.s32.totalorder %s15, 0
    %p110 = por %p108, %p109
    %p111 = scmp.le.s32.totalorder 1, %s9
    %p112 = scmp.lt.s32.totalorder %s9, 3
    %p113 = pnand %p111, %p112
    %p114 = pneg %p113
    // Predicated region
    $region9: #{_lambda_.13} parent=5 // pred_check
      _
    $region10: #{_lambda_.13} parent=5 // pred_check_branch
      %116 = sbr.rel (%p113) target = $region12
    $region11: #{_lambda_.13} parent=5 // pred_region
      %s117 = ssub.s32 %s9, 1
      // Predicated region
      $region13: #{_lambda_.13} parent=11 // pred_check
        %p118 = pneg %p56
      $region14: #{_lambda_.13} parent=11 // pred_check_branch
        %120 = sbr.rel (%p118) target = $region16
      $region15: #{_lambda_.13} parent=11 // pred_region
        _
      $region16: #{_lambda_.13} parent=11 // pred_fallthru
        _
      // Predicated region
      $region17: #{_lambda_.13} parent=11 // pred_check
        %p121 = pneg %p77
      $region18: #{_lambda_.13} parent=11 // pred_check_branch
        %123 = sbr.rel (%p121) target = $region20
      $region19: #{_lambda_.13} parent=11 // pred_region
        _
      $region20: #{_lambda_.13} parent=11 // pred_fallthru
        _
    $region12: #{_lambda_.13} parent=5 // pred_fallthru
      _
    %p124 = scmp.lt.s32.totalorder %s9, 2
    // Predicated region
    $region21: #{_lambda_.13} parent=5 // pred_check
      %p125 = pneg %p124
    $region22: #{_lambda_.13} parent=5 // pred_check_branch
      %127 = sbr.rel (%p125) target = $region24
    $region23: #{_lambda_.13} parent=5 // pred_region
      // Predicated region
      $region25: #{_lambda_.13} parent=23 // pred_check
        %p128 = pneg %p29
      $region26: #{_lambda_.13} parent=23 // pred_check_branch
        %130 = sbr.rel (%p128) target = $region28
      $region27: #{_lambda_.13} parent=23 // pred_region
        %p131 = scmp.lt.s32.totalorder %s9, 1
        %s132 = scalar_select %p131, %s9, 1
        %s133 = smul.addr %s132, 4
        %s134 = smul.addr %s133, 4
        %s135 = scalar_lea.vmem %s0, %s134
      $region28: #{_lambda_.13} parent=23 // pred_fallthru
        _
    $region24: #{_lambda_.13} parent=5 // pred_fallthru
      _
    %p136 = scmp.le.s32.totalorder 1, %s9
    %p137 = scmp.lt.s32.totalorder %s9, 3
    %p138 = pnand %p136, %p137
    %p139 = pneg %p138
    // Predicated region
    $region29: #{_lambda_.13} parent=5 // pred_check
      _
    $region30: #{_lambda_.13} parent=5 // pred_check_branch
      %141 = sbr.rel (%p138) target = $region32
    $region31: #{_lambda_.13} parent=5 // pred_region
      %s142 = ssub.s32 %s9, 1
      %p143 = scmp.lt.s32.totalorder %s14, 1
      %s144 = scalar_select %p143, %s14, 1
      %s145 = smul.addr %s144, 4
      %s146 = smul.addr %s145, 4
      %s147 = scalar_lea.vmem %s0, %s146
      %p148 = pneg %p35
      %p149 = pneg %p32
      %p150 = pneg %p56
      %p151 = pneg %p53
      %p152 = pneg %p77
      %p153 = pneg %p74
      %p154 = pneg %p103
      %p155 = pneg %p100
      %p156 = scmp.lt.s32.totalorder %s14, 1
      %s157 = scalar_select %p156, %s14, 1
      %s158 = smul.addr %s157, 2
      %s159 = smul.addr %s158, 8
      %s160 = scalar_lea.vmem %s3, %s159
      %p161 = scmp.lt.s32.totalorder %s14, 1
      %s162 = scalar_select %p161, %s14, 1
      %s163 = smul.addr %s162, 4
      %s164 = smul.addr %s163, 4
      %s165 = scalar_lea.vmem %s0, %s164
      %p166 = scmp.lt.s32.totalorder %s14, 1
      %s167 = scalar_select %p166, %s14, 1
      %s168 = smul.addr %s167, 2
      %s169 = smul.addr %s168, 8
      %s170 = scalar_lea.vmem %s3, %s169
      %v171 = vld [vmem:[%s165] sm:$0xff]
      %v172 = vld [vmem:[%s165 + $0x8] sm:$0x11]
      %v173 = vunpack.c.l.bf16 %v171
      %v174 = vunpack.c.h.bf16 %v171
      %v175 = vunpack.c.l.bf16 %v172
      %v176 = vunpack.c.h.bf16 %v172
      %v177 = vmax.f32 %v173, 0.0
      %v178 = vmax.f32 %v174, 0.0
      %v179 = vmax.f32 %v175, 0.0
      %v180 = vmax.f32 %v176, 0.0
      %v181 = vpack.c.bf16 %v179, %v177
      %v182 = vpack.c.bf16 %v180, %v178
      %v183 = vld [vmem:[%s1] sm:$0xf]
      %v184 = vld [vmem:[%s1 + $0x4] sm:$0xf]
      %v185 = vld [vmem:[%s1 + $0x8] sm:$0xf]
      %v186 = vld [vmem:[%s1 + $0xc] sm:$0xf]
      %v187 = vld [vmem:[%s1 + $0x10] sm:$0xf]
      %v188 = vld [vmem:[%s1 + $0x14] sm:$0xf]
      %v189 = vld [vmem:[%s1 + $0x18] sm:$0xf]
      %v190 = vld [vmem:[%s1 + $0x1c] sm:$0xf]
      %v191 = vld [vmem:[%s1 + $0x20] sm:$0xf]
      %v192 = vld [vmem:[%s1 + $0x24] sm:$0xf]
      %v193 = vld [vmem:[%s1 + $0x28] sm:$0xf]
      %v194 = vld [vmem:[%s1 + $0x2c] sm:$0xf]
      %v195 = vld [vmem:[%s1 + $0x30] sm:$0xf]
      %v196 = vld [vmem:[%s1 + $0x34] sm:$0xf]
      %v197 = vld [vmem:[%s1 + $0x38] sm:$0xf]
      %v198 = vld [vmem:[%s1 + $0x3c] sm:$0xf]
      %v199 = vld [vmem:[%s1 + $0x40] sm:$0xf]
      %v200 = vld [vmem:[%s1 + $0x44] sm:$0xf]
      %v201 = vld [vmem:[%s1 + $0x48] sm:$0xf]
      %v202 = vld [vmem:[%s1 + $0x4c] sm:$0xf]
      %v203 = vld [vmem:[%s1 + $0x50] sm:$0xf]
      %v204 = vld [vmem:[%s1 + $0x54] sm:$0xf]
      %v205 = vld [vmem:[%s1 + $0x58] sm:$0xf]
      %v206 = vld [vmem:[%s1 + $0x5c] sm:$0xf]
      %v207 = vld [vmem:[%s1 + $0x60] sm:$0xf]
      %v208 = vld [vmem:[%s1 + $0x64] sm:$0xf]
      %v209 = vld [vmem:[%s1 + $0x68] sm:$0xf]
      %v210 = vld [vmem:[%s1 + $0x6c] sm:$0xf]
      %v211 = vld [vmem:[%s1 + $0x70] sm:$0xf]
      %v212 = vld [vmem:[%s1 + $0x74] sm:$0xf]
      %v213 = vld [vmem:[%s1 + $0x78] sm:$0xf]
      %v214 = vld [vmem:[%s1 + $0x7c] sm:$0xf]
      %v215 = vld [vmem:[%s2] sm:$0x1]
      %v217 = vperm.slane %v215, 0
      %v251 = vunpack.c.l.b16 %v183
      %v252 = vunpack.c.l.b16 %v184
      %v253 = vunpack.c.l.b16 %v185
      %v254 = vunpack.c.l.b16 %v186
      %v255 = vunpack.c.l.b16 %v187
      %v256 = vunpack.c.l.b16 %v188
      %v257 = vunpack.c.l.b16 %v189
      %v258 = vunpack.c.l.b16 %v190
      %v259 = vunpack.c.l.b16 %v191
      %v260 = vunpack.c.l.b16 %v192
      %v261 = vunpack.c.l.b16 %v193
      %v262 = vunpack.c.l.b16 %v194
      %v263 = vunpack.c.l.b16 %v195
      %v264 = vunpack.c.l.b16 %v196
      %v265 = vunpack.c.l.b16 %v197
      %v266 = vunpack.c.l.b16 %v198
      %v267 = vunpack.c.l.b16 %v199
      %v268 = vunpack.c.l.b16 %v200
      %v269 = vunpack.c.l.b16 %v201
      %v270 = vunpack.c.l.b16 %v202
      %v271 = vunpack.c.l.b16 %v203
      %v272 = vunpack.c.l.b16 %v204
      %v273 = vunpack.c.l.b16 %v205
      %v274 = vunpack.c.l.b16 %v206
      %v275 = vunpack.c.l.b16 %v207
      %v276 = vunpack.c.l.b16 %v208
      %v277 = vunpack.c.l.b16 %v209
      %v278 = vunpack.c.l.b16 %v210
      %v279 = vunpack.c.l.b16 %v211
      %v280 = vunpack.c.l.b16 %v212
      %v281 = vunpack.c.l.b16 %v213
      %v282 = vunpack.c.l.b16 %v214
      %v283 = vpack.c.b16 %v252, %v251
      %v284 = vpack.c.b16 %v254, %v253
      %v285 = vpack.c.b16 %v256, %v255
      %v286 = vpack.c.b16 %v258, %v257
      %v287 = vpack.c.b16 %v260, %v259
      %v288 = vpack.c.b16 %v262, %v261
      %v289 = vpack.c.b16 %v264, %v263
      %v290 = vpack.c.b16 %v266, %v265
      %v291 = vpack.c.b16 %v268, %v267
      %v292 = vpack.c.b16 %v270, %v269
      %v293 = vpack.c.b16 %v272, %v271
      %v294 = vpack.c.b16 %v274, %v273
      %v295 = vpack.c.b16 %v276, %v275
      %v296 = vpack.c.b16 %v278, %v277
      %v297 = vpack.c.b16 %v280, %v279
      %v298 = vpack.c.b16 %v282, %v281
      %315 = vmatpush.bf16.msra.mxu0 %v290
      %316 = vmatpush.bf16.msra.mxu0 %v289
      %317 = vmatpush.bf16.msra.mxu0 %v288
      %318 = vmatpush.bf16.msra.mxu0 %v287
      %319 = vmatpush.bf16.msra.mxu0 %v286
      %320 = vmatpush.bf16.msra.mxu0 %v285
      %321 = vmatpush.bf16.msra.mxu0 %v284
      %322 = vmatpush.bf16.msra.mxu0 %v283
      %323 = vmatmul.bf16.gmra.mxu0 %v181
      %v324 = vpop.f32.mrf.mxu0
      %v325 = vadd.f32 %v217, %v324
      %v326 = vpop.f32.mrf.mxu0
      %v327 = vadd.f32 %v217, %v326
      %328 = vdwg.mxu0
      %329 = vmatpush.bf16.msra.mxu0 %v298
      %330 = vmatpush.bf16.msra.mxu0 %v297
      %331 = vmatpush.bf16.msra.mxu0 %v296
      %332 = vmatpush.bf16.msra.mxu0 %v295
      %333 = vmatpush.bf16.msra.mxu0 %v294
      %334 = vmatpush.bf16.msra.mxu0 %v293
      %335 = vmatpush.bf16.msra.mxu0 %v292
      %336 = vmatpush.bf16.msra.mxu0 %v291
      %337 = vmatmul.bf16.gmra.mxu0 %v182
      %v338 = vpop.f32.mrf.mxu0
      %v339 = vadd.f32 %v325, %v338
      %v340 = vpop.f32.mrf.mxu0
      %v341 = vadd.f32 %v327, %v340
      %342 = vdwg.mxu0
      %343 = vst [vmem:[%s170] sm:$0xff] %v339
      %344 = vst [vmem:[%s170 + $0x8] sm:$0x1] %v341
      %p345 = scmp.lt.s32.totalorder %s14, 1
      %s346 = scalar_select %p345, %s14, 1
      %s347 = smul.addr %s346, 2
      %s348 = smul.addr %s347, 8
      %s349 = scalar_lea.vmem %s3, %s348
      // Predicated region
      $region33: #{_lambda_.13} parent=31 // pred_check
        %p350 = pneg %p100
      $region34: #{_lambda_.13} parent=31 // pred_check_branch
        %352 = sbr.rel (%p350) target = $region36
      $region35: #{_lambda_.13} parent=31 // pred_region
        _
      $region36: #{_lambda_.13} parent=31 // pred_fallthru
        _
    $region32: #{_lambda_.13} parent=5 // pred_fallthru
      _
    %p353 = scmp.le.s32.totalorder 2, %s9
    // Predicated region
    $region37: #{_lambda_.13} parent=5 // pred_check
      %p354 = pneg %p353
    $region38: #{_lambda_.13} parent=5 // pred_check_branch
      %356 = sbr.rel (%p354) target = $region40
    $region39: #{_lambda_.13} parent=5 // pred_region
      %s357 = ssub.s32 %s9, 2
      // Predicated region
      $region41: #{_lambda_.13} parent=39 // pred_check
        %p358 = pneg %p106
      $region42: #{_lambda_.13} parent=39 // pred_check_branch
        %360 = sbr.rel (%p358) target = $region44
      $region43: #{_lambda_.13} parent=39 // pred_region
        %p361 = scmp.lt.s32.totalorder %s15, 1
        %s362 = scalar_select %p361, %s15, 1
        %s363 = smul.addr %s362, 2
        %s364 = smul.addr %s363, 8
        %s365 = scalar_lea.vmem %s3, %s364
      $region44: #{_lambda_.13} parent=39 // pred_fallthru
        _
    $region40: #{_lambda_.13} parent=5 // pred_fallthru
      _
  $region6: #{_lambda_.13} parent=0 // loop_footer
    %s13 = sadd.s32 1, %s9
  $region7: #{_lambda_.13} parent=0 // loop_footer_branch
    %8 = sbr.rel target = $region3
  $region8: #{_lambda_.13} parent=0 // loop_exit
    _

// kernel: _lambda_.15
$region0: #{_lambda_.15}
  #allocation0 [shape = 'u32[]', space=smem, size = 0x4, offset = 0x4, fixed_abs, tag = 'smem constant byte address 0x4 - core index']
  #allocation1 [shape = 'u32[72,128]{1,0:T(1,128)}', space=vmem, size = 0x9000, scoped, tag = 'internal scratch']
  %s0 = inlined_call_operand.vmem [shape: bf16[2,25,256], index: 0, kind: input, shape index: {}]
  %s1 = inlined_call_operand.vmem [shape: bf16[256,64], index: 1, kind: input, shape index: {}]
  %s2 = inlined_call_operand.vmem [shape: f32[1,64], index: 2, kind: input, shape index: {}]
  %s3 = inlined_call_operand.vmem [shape: f32[2,25,64], index: 3, kind: output, shape index: {}]
  %s4 = sld [smem:[#allocation0]]
  $region45: #{_lambda_.15} parent=0
    _
  %s6 = ssub.s32 1, %s4
  %s7 = scalar_select 0, %s6, %s4
  loop: start=0, step=1, limit=4
  $region2: #{_lambda_.15} parent=0 // loop_pre_header
    _
  $region3: #{_lambda_.15} parent=0 // loop_header
    %s9 = sphi 0, %s13
    %p10 = scmp.ge.s32.totalorder %s9, 4
    %s19 = sphi 0, %s21
    %s22 = sphi 0, %s19
    %s23 = sphi 0, %s22
    %s39 = sphi 0, %s23
    %s43 = sphi 0, %s43
    %s45 = sphi 0, %s43
    %s46 = sphi 0, %s45
    %s60 = sphi 0, %s46
    %s64 = sphi 0, %s64
    %s66 = sphi 0, %s64
    %s67 = sphi 0, %s66
    %s81 = sphi 0, %s67
    %s87 = sphi 0, %s89
    %s90 = sphi 0, %s87
    %s91 = sphi 0, %s90
    %s107 = sphi 0, %s91
  $region4: #{_lambda_.15} parent=0 // loop_header_branch
    %12 = sbr.rel (%p10) target = $region8
  $region5: #{_lambda_.15} parent=0 // loop_body
    %s14 = ssub.s32 %s9, 1
    %s15 = ssub.s32 %s9, 2
    %s16 = sadd.s32 %s9, 1
    %s17 = ssub.s32 %s9, %s16
    %p18 = scmp.eq.s32.totalorder %s17, 0
    %s20 = sadd.s32 %s19, 1
    %s21 = scalar_select %p18, %s19, %s20
    %p24 = pneg %p18
    %p25 = scmp.eq.s32.totalorder %s9, 1
    %p26 = por %p24, %p25
    %p27 = scmp.ne.s32.totalorder %s19, %s22
    %p28 = scmp.eq.s32.totalorder %s9, 0
    %p29 = por %p27, %p28
    %p30 = scmp.ne.s32.totalorder %s19, %s22
    %p31 = scmp.eq.s32.totalorder %s14, 1
    %p32 = por %p30, %p31
    %p33 = scmp.ne.s32.totalorder %s22, %s23
    %p34 = scmp.eq.s32.totalorder %s14, 0
    %p35 = por %p33, %p34
    %p36 = scmp.ne.s32.totalorder %s22, %s23
    %p37 = scmp.eq.s32.totalorder %s15, 1
    %p38 = por %p36, %p37
    %p40 = scmp.ne.s32.totalorder %s23, %s39
    %p41 = scmp.eq.s32.totalorder %s15, 0
    %p42 = por %p40, %p41
    %s44 = sadd.s32 %s43, 1
    %p47 = scmp.eq.s32.totalorder %s9, 1
    %p48 = scmp.ne.s32.totalorder %s43, %s45
    %p49 = scmp.eq.s32.totalorder %s9, 0
    %p50 = por %p48, %p49
    %p51 = scmp.ne.s32.totalorder %s43, %s45
    %p52 = scmp.eq.s32.totalorder %s14, 1
    %p53 = por %p51, %p52
    %p54 = scmp.ne.s32.totalorder %s45, %s46
    %p55 = scmp.eq.s32.totalorder %s14, 0
    %p56 = por %p54, %p55
    %p57 = scmp.ne.s32.totalorder %s45, %s46
    %p58 = scmp.eq.s32.totalorder %s15, 1
    %p59 = por %p57, %p58
    %p61 = scmp.ne.s32.totalorder %s46, %s60
    %p62 = scmp.eq.s32.totalorder %s15, 0
    %p63 = por %p61, %p62
    %s65 = sadd.s32 %s64, 1
    %p68 = scmp.eq.s32.totalorder %s9, 1
    %p69 = scmp.ne.s32.totalorder %s64, %s66
    %p70 = scmp.eq.s32.totalorder %s9, 0
    %p71 = por %p69, %p70
    %p72 = scmp.ne.s32.totalorder %s64, %s66
    %p73 = scmp.eq.s32.totalorder %s14, 1
    %p74 = por %p72, %p73
    %p75 = scmp.ne.s32.totalorder %s66, %s67
    %p76 = scmp.eq.s32.totalorder %s14, 0
    %p77 = por %p75, %p76
    %p78 = scmp.ne.s32.totalorder %s66, %s67
    %p79 = scmp.eq.s32.totalorder %s15, 1
    %p80 = por %p78, %p79
    %p82 = scmp.ne.s32.totalorder %s67, %s81
    %p83 = scmp.eq.s32.totalorder %s15, 0
    %p84 = por %p82, %p83
    %s85 = ssub.s32 %s9, %s16
    %p86 = scmp.eq.s32.totalorder %s85, 0
    %s88 = sadd.s32 %s87, 1
    %s89 = scalar_select %p86, %s87, %s88
    %p92 = pneg %p86
    %p93 = scmp.eq.s32.totalorder %s9, 1
    %p94 = por %p92, %p93
    %p95 = scmp.ne.s32.totalorder %s87, %s90
    %p96 = scmp.eq.s32.totalorder %s9, 0
    %p97 = por %p95, %p96
    %p98 = scmp.ne.s32.totalorder %s87, %s90
    %p99 = scmp.eq.s32.totalorder %s14, 1
    %p100 = por %p98, %p99
    %p101 = scmp.ne.s32.totalorder %s90, %s91
    %p102 = scmp.eq.s32.totalorder %s14, 0
    %p103 = por %p101, %p102
    %p104 = scmp.ne.s32.totalorder %s90, %s91
    %p105 = scmp.eq.s32.totalorder %s15, 1
    %p106 = por %p104, %p105
    %p108 = scmp.ne.s32.totalorder %s91, %s107
    %p109 = scmp.eq.s32.totalorder %s15, 0
    %p110 = por %p108, %p109
    %p111 = scmp.le.s32.totalorder 1, %s9
    %p112 = scmp.lt.s32.totalorder %s9, 3
    %p113 = pnand %p111, %p112
    %p114 = pneg %p113
    // Predicated region
    $region9: #{_lambda_.15} parent=5 // pred_check
      _
    $region10: #{_lambda_.15} parent=5 // pred_check_branch
      %116 = sbr.rel (%p113) target = $region12
    $region11: #{_lambda_.15} parent=5 // pred_region
      %s117 = ssub.s32 %s9, 1
      // Predicated region
      $region13: #{_lambda_.15} parent=11 // pred_check
        %p118 = pneg %p56
      $region14: #{_lambda_.15} parent=11 // pred_check_branch
        %120 = sbr.rel (%p118) target = $region16
      $region15: #{_lambda_.15} parent=11 // pred_region
        _
      $region16: #{_lambda_.15} parent=11 // pred_fallthru
        _
      // Predicated region
      $region17: #{_lambda_.15} parent=11 // pred_check
        %p121 = pneg %p77
      $region18: #{_lambda_.15} parent=11 // pred_check_branch
        %123 = sbr.rel (%p121) target = $region20
      $region19: #{_lambda_.15} parent=11 // pred_region
        _
      $region20: #{_lambda_.15} parent=11 // pred_fallthru
        _
    $region12: #{_lambda_.15} parent=5 // pred_fallthru
      _
    %p124 = scmp.lt.s32.totalorder %s9, 2
    // Predicated region
    $region21: #{_lambda_.15} parent=5 // pred_check
      %p125 = pneg %p124
    $region22: #{_lambda_.15} parent=5 // pred_check_branch
      %127 = sbr.rel (%p125) target = $region24
    $region23: #{_lambda_.15} parent=5 // pred_region
      // Predicated region
      $region25: #{_lambda_.15} parent=23 // pred_check
        %p128 = pneg %p29
      $region26: #{_lambda_.15} parent=23 // pred_check_branch
        %130 = sbr.rel (%p128) target = $region28
      $region27: #{_lambda_.15} parent=23 // pred_region
        %p131 = scmp.lt.s32.totalorder %s9, 1
        %s132 = scalar_select %p131, %s9, 1
        %s133 = smul.addr %s132, 8
        %s134 = smul.addr %s133, 4
        %s135 = scalar_lea.vmem %s0, %s134
      $region28: #{_lambda_.15} parent=23 // pred_fallthru
        _
    $region24: #{_lambda_.15} parent=5 // pred_fallthru
      _
    %p136 = scmp.le.s32.totalorder 1, %s9
    %p137 = scmp.lt.s32.totalorder %s9, 3
    %p138 = pnand %p136, %p137
    %p139 = pneg %p138
    // Predicated region
    $region29: #{_lambda_.15} parent=5 // pred_check
      _
    $region30: #{_lambda_.15} parent=5 // pred_check_branch
      %141 = sbr.rel (%p138) target = $region32
    $region31: #{_lambda_.15} parent=5 // pred_region
      %s142 = ssub.s32 %s9, 1
      %p143 = scmp.lt.s32.totalorder %s14, 1
      %s144 = scalar_select %p143, %s14, 1
      %s145 = smul.addr %s144, 8
      %s146 = smul.addr %s145, 4
      %s147 = scalar_lea.vmem %s0, %s146
      %p148 = pneg %p35
      %p149 = pneg %p32
      %p150 = pneg %p56
      %p151 = pneg %p53
      %p152 = pneg %p77
      %p153 = pneg %p74
      %p154 = pneg %p103
      %p155 = pneg %p100
      %p156 = scmp.lt.s32.totalorder %s14, 1
      %s157 = scalar_select %p156, %s14, 1
      %s158 = smul.addr %s157, 4
      %s159 = smul.addr %s158, 8
      %s160 = scalar_lea.vmem %s3, %s159
      %p161 = scmp.lt.s32.totalorder %s14, 1
      %s162 = scalar_select %p161, %s14, 1
      %s163 = smul.addr %s162, 8
      %s164 = smul.addr %s163, 4
      %s165 = scalar_lea.vmem %s0, %s164
      %p166 = scmp.lt.s32.totalorder %s14, 1
      %s167 = scalar_select %p166, %s14, 1
      %s168 = smul.addr %s167, 4
      %s169 = smul.addr %s168, 8
      %s170 = scalar_lea.vmem %s3, %s169
      %v171 = vld [vmem:[%s165] sm:$0xff]
      %v172 = vld [vmem:[%s165 + $0x8] sm:$0xff]
      %v173 = vld [vmem:[%s165 + $0x10] sm:$0xff]
      %v174 = vld [vmem:[%s165 + $0x18] sm:$0x11]
      %v175 = vunpack.c.l.bf16 %v171
      %v176 = vunpack.c.h.bf16 %v171
      %v177 = vunpack.c.l.bf16 %v172
      %v178 = vunpack.c.h.bf16 %v172
      %v179 = vunpack.c.l.bf16 %v173
      %v180 = vunpack.c.h.bf16 %v173
      %v181 = vunpack.c.l.bf16 %v174
      %v182 = vunpack.c.h.bf16 %v174
      %v183 = vmax.f32 %v175, 0.0
      %v184 = vmax.f32 %v176, 0.0
      %v185 = vmax.f32 %v177, 0.0
      %v186 = vmax.f32 %v178, 0.0
      %v187 = vmax.f32 %v179, 0.0
      %v188 = vmax.f32 %v180, 0.0
      %v189 = vmax.f32 %v181, 0.0
      %v190 = vmax.f32 %v182, 0.0
      %v191 = vpack.c.bf16 %v185, %v183
      %v192 = vpack.c.bf16 %v186, %v184
      %v193 = vpack.c.bf16 %v189, %v187
      %v194 = vpack.c.bf16 %v190, %v188
      %v195 = vld [vmem:[%s1] sm:$0xf]
      %v196 = vld [vmem:[%s1 + $0x4] sm:$0xf]
      %v197 = vld [vmem:[%s1 + $0x8] sm:$0xf]
      %v198 = vld [vmem:[%s1 + $0xc] sm:$0xf]
      %v199 = vld [vmem:[%s1 + $0x10] sm:$0xf]
      %v200 = vld [vmem:[%s1 + $0x14] sm:$0xf]
      %v201 = vld [vmem:[%s1 + $0x18] sm:$0xf]
      %v202 = vld [vmem:[%s1 + $0x1c] sm:$0xf]
      %v203 = vld [vmem:[%s1 + $0x20] sm:$0xf]
      %v204 = vld [vmem:[%s1 + $0x24] sm:$0xf]
      %v205 = vld [vmem:[%s1 + $0x28] sm:$0xf]
      %v206 = vld [vmem:[%s1 + $0x2c] sm:$0xf]
      %v207 = vld [vmem:[%s1 + $0x30] sm:$0xf]
      %v208 = vld [vmem:[%s1 + $0x34] sm:$0xf]
      %v209 = vld [vmem:[%s1 + $0x38] sm:$0xf]
      %v210 = vld [vmem:[%s1 + $0x3c] sm:$0xf]
      %v211 = vld [vmem:[%s1 + $0x40] sm:$0xf]
      %v212 = vld [vmem:[%s1 + $0x44] sm:$0xf]
      %v213 = vld [vmem:[%s1 + $0x48] sm:$0xf]
      %v214 = vld [vmem:[%s1 + $0x4c] sm:$0xf]
      %v215 = vld [vmem:[%s1 + $0x50] sm:$0xf]
      %v216 = vld [vmem:[%s1 + $0x54] sm:$0xf]
      %v217 = vld [vmem:[%s1 + $0x58] sm:$0xf]
      %v218 = vld [vmem:[%s1 + $0x5c] sm:$0xf]
      %v219 = vld [vmem:[%s1 + $0x60] sm:$0xf]
      %v220 = vld [vmem:[%s1 + $0x64] sm:$0xf]
      %v221 = vld [vmem:[%s1 + $0x68] sm:$0xf]
      %v222 = vld [vmem:[%s1 + $0x6c] sm:$0xf]
      %v223 = vld [vmem:[%s1 + $0x70] sm:$0xf]
      %v224 = vld [vmem:[%s1 + $0x74] sm:$0xf]
      %v225 = vld [vmem:[%s1 + $0x78] sm:$0xf]
      %v226 = vld [vmem:[%s1 + $0x7c] sm:$0xf]
      %v227 = vld [vmem:[%s2] sm:$0x1]
      %v229 = vperm.slane %v227, 0
      %v263 = vunpack.c.l.b16 %v195
      %v264 = vunpack.c.l.b16 %v196
      %v265 = vunpack.c.l.b16 %v197
      %v266 = vunpack.c.l.b16 %v198
      %v267 = vunpack.c.l.b16 %v199
      %v268 = vunpack.c.l.b16 %v200
      %v269 = vunpack.c.l.b16 %v201
      %v270 = vunpack.c.l.b16 %v202
      %v271 = vunpack.c.l.b16 %v203
      %v272 = vunpack.c.l.b16 %v204
      %v273 = vunpack.c.l.b16 %v205
      %v274 = vunpack.c.l.b16 %v206
      %v275 = vunpack.c.l.b16 %v207
      %v276 = vunpack.c.l.b16 %v208
      %v277 = vunpack.c.l.b16 %v209
      %v278 = vunpack.c.l.b16 %v210
      %v279 = vunpack.c.l.b16 %v211
      %v280 = vunpack.c.l.b16 %v212
      %v281 = vunpack.c.l.b16 %v213
      %v282 = vunpack.c.l.b16 %v214
      %v283 = vunpack.c.l.b16 %v215
      %v284 = vunpack.c.l.b16 %v216
      %v285 = vunpack.c.l.b16 %v217
      %v286 = vunpack.c.l.b16 %v218
      %v287 = vunpack.c.l.b16 %v219
      %v288 = vunpack.c.l.b16 %v220
      %v289 = vunpack.c.l.b16 %v221
      %v290 = vunpack.c.l.b16 %v222
      %v291 = vunpack.c.l.b16 %v223
      %v292 = vunpack.c.l.b16 %v224
      %v293 = vunpack.c.l.b16 %v225
      %v294 = vunpack.c.l.b16 %v226
      %v295 = vpack.c.b16 %v264, %v263
      %v296 = vpack.c.b16 %v266, %v265
      %v297 = vpack.c.b16 %v268, %v267
      %v298 = vpack.c.b16 %v270, %v269
      %v299 = vpack.c.b16 %v272, %v271
      %v300 = vpack.c.b16 %v274, %v273
      %v301 = vpack.c.b16 %v276, %v275
      %v302 = vpack.c.b16 %v278, %v277
      %v303 = vpack.c.b16 %v280, %v279
      %v304 = vpack.c.b16 %v282, %v281
      %v305 = vpack.c.b16 %v284, %v283
      %v306 = vpack.c.b16 %v286, %v285
      %v307 = vpack.c.b16 %v288, %v287
      %v308 = vpack.c.b16 %v290, %v289
      %v309 = vpack.c.b16 %v292, %v291
      %v310 = vpack.c.b16 %v294, %v293
      %327 = vmatpush.bf16.msra.mxu0 %v302
      %328 = vmatpush.bf16.msra.mxu0 %v301
      %329 = vmatpush.bf16.msra.mxu0 %v300
      %330 = vmatpush.bf16.msra.mxu0 %v299
      %331 = vmatpush.bf16.msra.mxu0 %v298
      %332 = vmatpush.bf16.msra.mxu0 %v297
      %333 = vmatpush.bf16.msra.mxu0 %v296
      %334 = vmatpush.bf16.msra.mxu0 %v295
      %335 = vmatmul.bf16.gmra.mxu0 %v191
      %v336 = vpop.f32.mrf.mxu0
      %v337 = vadd.f32 %v229, %v336
      %v338 = vpop.f32.mrf.mxu0
      %v339 = vadd.f32 %v229, %v338
      %340 = vmatmul.bf16.gmra.mxu0 %v193
      %v341 = vpop.f32.mrf.mxu0
      %v342 = vadd.f32 %v229, %v341
      %v343 = vpop.f32.mrf.mxu0
      %v344 = vadd.f32 %v229, %v343
      %345 = vdwg.mxu0
      %346 = vmatpush.bf16.msra.mxu0 %v310
      %347 = vmatpush.bf16.msra.mxu0 %v309
      %348 = vmatpush.bf16.msra.mxu0 %v308
      %349 = vmatpush.bf16.msra.mxu0 %v307
      %350 = vmatpush.bf16.msra.mxu0 %v306
      %351 = vmatpush.bf16.msra.mxu0 %v305
      %352 = vmatpush.bf16.msra.mxu0 %v304
      %353 = vmatpush.bf16.msra.mxu0 %v303
      %354 = vmatmul.bf16.gmra.mxu0 %v192
      %v355 = vpop.f32.mrf.mxu0
      %v356 = vadd.f32 %v337, %v355
      %v357 = vpop.f32.mrf.mxu0
      %v358 = vadd.f32 %v339, %v357
      %359 = vmatmul.bf16.gmra.mxu0 %v194
      %v360 = vpop.f32.mrf.mxu0
      %v361 = vadd.f32 %v342, %v360
      %v362 = vpop.f32.mrf.mxu0
      %v363 = vadd.f32 %v344, %v362
      %364 = vdwg.mxu0
      %vm365 = vcmask 523264
      %366 = vst.msk [vmem:[%s170] sm:$0xff] %vm365, %v356
      %367 = vst.msk [vmem:[%s170 + $0x8] sm:$0xff] %vm365, %v358
      %368 = vst.msk [vmem:[%s170 + $0x10] sm:$0xff] %vm365, %v361
      %vm369 = vcmask 516096
      %370 = vst.msk [vmem:[%s170 + $0x18] sm:$0x1] %vm369, %v363
      %p371 = scmp.lt.s32.totalorder %s14, 1
      %s372 = scalar_select %p371, %s14, 1
      %s373 = smul.addr %s372, 4
      %s374 = smul.addr %s373, 8
      %s375 = scalar_lea.vmem %s3, %s374
      // Predicated region
      $region33: #{_lambda_.15} parent=31 // pred_check
        %p376 = pneg %p100
      $region34: #{_lambda_.15} parent=31 // pred_check_branch
        %378 = sbr.rel (%p376) target = $region36
      $region35: #{_lambda_.15} parent=31 // pred_region
        _
      $region36: #{_lambda_.15} parent=31 // pred_fallthru
        _
    $region32: #{_lambda_.15} parent=5 // pred_fallthru
      _
    %p379 = scmp.le.s32.totalorder 2, %s9
    // Predicated region
    $region37: #{_lambda_.15} parent=5 // pred_check
      %p380 = pneg %p379
    $region38: #{_lambda_.15} parent=5 // pred_check_branch
      %382 = sbr.rel (%p380) target = $region40
    $region39: #{_lambda_.15} parent=5 // pred_region
      %s383 = ssub.s32 %s9, 2
      // Predicated region
      $region41: #{_lambda_.15} parent=39 // pred_check
        %p384 = pneg %p106
      $region42: #{_lambda_.15} parent=39 // pred_check_branch
        %386 = sbr.rel (%p384) target = $region44
      $region43: #{_lambda_.15} parent=39 // pred_region
        %p387 = scmp.lt.s32.totalorder %s15, 1
        %s388 = scalar_select %p387, %s15, 1
        %s389 = smul.addr %s388, 4
        %s390 = smul.addr %s389, 8
        %s391 = scalar_lea.vmem %s3, %s390
      $region44: #{_lambda_.15} parent=39 // pred_fallthru
        _
    $region40: #{_lambda_.15} parent=5 // pred_fallthru
      _
  $region6: #{_lambda_.15} parent=0 // loop_footer
    %s13 = sadd.s32 1, %s9
  $region7: #{_lambda_.15} parent=0 // loop_footer_branch
    %8 = sbr.rel target = $region3
  $region8: #{_lambda_.15} parent=0 // loop_exit
    _

// kernel: _lambda_.16
$region0: #{_lambda_.16}
  #allocation0 [shape = 'u32[]', space=smem, size = 0x4, offset = 0x4, fixed_abs, tag = 'smem constant byte address 0x4 - core index']
  #allocation1 [shape = 'u32[72,128]{1,0:T(1,128)}', space=vmem, size = 0x9000, scoped, tag = 'internal scratch']
  %s0 = inlined_call_operand.vmem [shape: f32[128,16], index: 0, kind: input, shape index: {}]
  %s1 = inlined_call_operand.vmem [shape: f32[1,16], index: 1, kind: input, shape index: {}]
  %s2 = inlined_call_operand.vmem [shape: f32[1,16], index: 2, kind: input, shape index: {}]
  %s3 = inlined_call_operand.vmem [shape: f32[128,16], index: 3, kind: output, shape index: {}]
  %s4 = sld [smem:[#allocation0]]
  $region22: #{_lambda_.16} parent=0
    _
  %s6 = ssub.s32 1, %s4
  %s7 = scalar_select 0, %s6, %s4
  // Predicated region
  $region2: #{_lambda_.16} parent=0 // pred_check
    _
  $region3: #{_lambda_.16} parent=0 // pred_check_branch
    %9 = sbr.rel (0) target = $region5
  $region4: #{_lambda_.16} parent=0 // pred_region
    _
  $region5: #{_lambda_.16} parent=0 // pred_fallthru
    _
  // Predicated region
  $region6: #{_lambda_.16} parent=0 // pred_check
    _
  $region7: #{_lambda_.16} parent=0 // pred_check_branch
    %11 = sbr.rel (0) target = $region9
  $region8: #{_lambda_.16} parent=0 // pred_region
    _
  $region9: #{_lambda_.16} parent=0 // pred_fallthru
    _
  // Predicated region
  $region10: #{_lambda_.16} parent=0 // pred_check
    _
  $region11: #{_lambda_.16} parent=0 // pred_check_branch
    %13 = sbr.rel (0) target = $region13
  $region12: #{_lambda_.16} parent=0 // pred_region
    _
  $region13: #{_lambda_.16} parent=0 // pred_fallthru
    _
  %v14 = vld [vmem:[%s0] sm:$0xff]
  %v15 = vld [vmem:[%s0 + $0x8] sm:$0xff]
  %v16 = vld [vmem:[%s0 + $0x10] sm:$0xff]
  %v17 = vld [vmem:[%s0 + $0x18] sm:$0xff]
  %v18 = vld [vmem:[%s0 + $0x20] sm:$0xff]
  %v19 = vld [vmem:[%s0 + $0x28] sm:$0xff]
  %v20 = vld [vmem:[%s0 + $0x30] sm:$0xff]
  %v21 = vld [vmem:[%s0 + $0x38] sm:$0xff]
  %v22 = vld [vmem:[%s0 + $0x40] sm:$0xff]
  %v23 = vld [vmem:[%s0 + $0x48] sm:$0xff]
  %v24 = vld [vmem:[%s0 + $0x50] sm:$0xff]
  %v25 = vld [vmem:[%s0 + $0x58] sm:$0xff]
  %v26 = vld [vmem:[%s0 + $0x60] sm:$0xff]
  %v27 = vld [vmem:[%s0 + $0x68] sm:$0xff]
  %v28 = vld [vmem:[%s0 + $0x70] sm:$0xff]
  %v29 = vld [vmem:[%s0 + $0x78] sm:$0xff]
  %vm30 = vcmask 130048
  %v31 = vsel %vm30, %v14, 0.0
  %v32 = vsel %vm30, %v15, 0.0
  %v33 = vadd.f32 %v31, %v32
  %v34 = vsel %vm30, %v16, 0.0
  %v35 = vadd.f32 %v33, %v34
  %v36 = vsel %vm30, %v17, 0.0
  %v37 = vadd.f32 %v35, %v36
  %v38 = vsel %vm30, %v18, 0.0
  %v39 = vadd.f32 %v37, %v38
  %v40 = vsel %vm30, %v19, 0.0
  %v41 = vadd.f32 %v39, %v40
  %v42 = vsel %vm30, %v20, 0.0
  %v43 = vadd.f32 %v41, %v42
  %v44 = vsel %vm30, %v21, 0.0
  %v45 = vadd.f32 %v43, %v44
  %v46 = vsel %vm30, %v22, 0.0
  %v47 = vadd.f32 %v45, %v46
  %v48 = vsel %vm30, %v23, 0.0
  %v49 = vadd.f32 %v47, %v48
  %v50 = vsel %vm30, %v24, 0.0
  %v51 = vadd.f32 %v49, %v50
  %v52 = vsel %vm30, %v25, 0.0
  %v53 = vadd.f32 %v51, %v52
  %v54 = vsel %vm30, %v26, 0.0
  %v55 = vadd.f32 %v53, %v54
  %v56 = vsel %vm30, %v27, 0.0
  %v57 = vadd.f32 %v55, %v56
  %v58 = vsel %vm30, %v28, 0.0
  %v59 = vadd.f32 %v57, %v58
  %v60 = vsel %vm30, %v29, 0.0
  %v61 = vadd.f32 %v59, %v60
  %v62 = vrot.slane %v61, 4
  %v63 = vadd.f32 %v61, %v62
  %v64 = vrot.slane %v63, 2
  %v65 = vadd.f32 %v63, %v64
  %v66 = vrot.slane %v65, 1
  %v67 = vadd.f32 %v65, %v66
  %v68 = vrcp.pop 128.0
  %v69 = vmul.f32 128.0, %v68
  %v70 = vsub.f32 1.0, %v69
  %v71 = vmul.f32 %v68, %v70
  %v72 = vadd.f32 %v68, %v71
  %vm73 = vweird.f32 %v68
  %v74 = vsel %vm73, %v68, %v72
  %v75 = vmul.f32 %v67, %v74
  %v76 = vsub.f32 %v14, %v75
  %v77 = vsub.f32 %v15, %v75
  %v78 = vsub.f32 %v16, %v75
  %v79 = vsub.f32 %v17, %v75
  %v80 = vsub.f32 %v18, %v75
  %v81 = vsub.f32 %v19, %v75
  %v82 = vsub.f32 %v20, %v75
  %v83 = vsub.f32 %v21, %v75
  %v84 = vsub.f32 %v22, %v75
  %v85 = vsub.f32 %v23, %v75
  %v86 = vsub.f32 %v24, %v75
  %v87 = vsub.f32 %v25, %v75
  %v88 = vsub.f32 %v26, %v75
  %v89 = vsub.f32 %v27, %v75
  %v90 = vsub.f32 %v28, %v75
  %v91 = vsub.f32 %v29, %v75
  %v92 = vmul.f32 %v76, %v76
  %v93 = vmul.f32 %v77, %v77
  %v94 = vmul.f32 %v78, %v78
  %v95 = vmul.f32 %v79, %v79
  %v96 = vmul.f32 %v80, %v80
  %v97 = vmul.f32 %v81, %v81
  %v98 = vmul.f32 %v82, %v82
  %v99 = vmul.f32 %v83, %v83
  %v100 = vmul.f32 %v84, %v84
  %v101 = vmul.f32 %v85, %v85
  %v102 = vmul.f32 %v86, %v86
  %v103 = vmul.f32 %v87, %v87
  %v104 = vmul.f32 %v88, %v88
  %v105 = vmul.f32 %v89, %v89
  %v106 = vmul.f32 %v90, %v90
  %v107 = vmul.f32 %v91, %v91
  %v108 = vsel %vm30, %v92, 0.0
  %v109 = vsel %vm30, %v93, 0.0
  %v110 = vadd.f32 %v108, %v109
  %v111 = vsel %vm30, %v94, 0.0
  %v112 = vadd.f32 %v110, %v111
  %v113 = vsel %vm30, %v95, 0.0
  %v114 = vadd.f32 %v112, %v113
  %v115 = vsel %vm30, %v96, 0.0
  %v116 = vadd.f32 %v114, %v115
  %v117 = vsel %vm30, %v97, 0.0
  %v118 = vadd.f32 %v116, %v117
  %v119 = vsel %vm30, %v98, 0.0
  %v120 = vadd.f32 %v118, %v119
  %v121 = vsel %vm30, %v99, 0.0
  %v122 = vadd.f32 %v120, %v121
  %v123 = vsel %vm30, %v100, 0.0
  %v124 = vadd.f32 %v122, %v123
  %v125 = vsel %vm30, %v101, 0.0
  %v126 = vadd.f32 %v124, %v125
  %v127 = vsel %vm30, %v102, 0.0
  %v128 = vadd.f32 %v126, %v127
  %v129 = vsel %vm30, %v103, 0.0
  %v130 = vadd.f32 %v128, %v129
  %v131 = vsel %vm30, %v104, 0.0
  %v132 = vadd.f32 %v130, %v131
  %v133 = vsel %vm30, %v105, 0.0
  %v134 = vadd.f32 %v132, %v133
  %v135 = vsel %vm30, %v106, 0.0
  %v136 = vadd.f32 %v134, %v135
  %v137 = vsel %vm30, %v107, 0.0
  %v138 = vadd.f32 %v136, %v137
  %v139 = vrot.slane %v138, 4
  %v140 = vadd.f32 %v138, %v139
  %v141 = vrot.slane %v140, 2
  %v142 = vadd.f32 %v140, %v141
  %v143 = vrot.slane %v142, 1
  %v144 = vadd.f32 %v142, %v143
  %v145 = vmul.f32 %v144, %v74
  %v146 = vadd.f32 %v145, 1e-05
  %v147 = vrsqrt.pop %v146
  %v148 = vmul.f32 %v147, %v146
  %v149 = vmul.f32 %v148, %v147
  %v150 = vmul.f32 0.5, %v149
  %v151 = vsub.f32 1.5, %v150
  %v152 = vmul.f32 %v147, %v151
  %vm153 = vweird.f32 %v146
  %vm154 = vweird.f32 %v147
  %vm155 = vmor %vm153, %vm154
  %v156 = vsel %vm155, %v147, %v152
  %v157 = vmul.f32 %v76, %v156
  %v158 = vmul.f32 %v77, %v156
  %v159 = vmul.f32 %v78, %v156
  %v160 = vmul.f32 %v79, %v156
  %v161 = vmul.f32 %v80, %v156
  %v162 = vmul.f32 %v81, %v156
  %v163 = vmul.f32 %v82, %v156
  %v164 = vmul.f32 %v83, %v156
  %v165 = vmul.f32 %v84, %v156
  %v166 = vmul.f32 %v85, %v156
  %v167 = vmul.f32 %v86, %v156
  %v168 = vmul.f32 %v87, %v156
  %v169 = vmul.f32 %v88, %v156
  %v170 = vmul.f32 %v89, %v156
  %v171 = vmul.f32 %v90, %v156
  %v172 = vmul.f32 %v91, %v156
  %v173 = vld [vmem:[%s1] sm:$0x1]
  %v175 = vperm.slane %v173, 0
  %v177 = vmul.f32 %v157, %v175
  %v178 = vmul.f32 %v158, %v175
  %v179 = vmul.f32 %v159, %v175
  %v180 = vmul.f32 %v160, %v175
  %v181 = vmul.f32 %v161, %v175
  %v182 = vmul.f32 %v162, %v175
  %v183 = vmul.f32 %v163, %v175
  %v184 = vmul.f32 %v164, %v175
  %v185 = vmul.f32 %v165, %v175
  %v186 = vmul.f32 %v166, %v175
  %v187 = vmul.f32 %v167, %v175
  %v188 = vmul.f32 %v168, %v175
  %v189 = vmul.f32 %v169, %v175
  %v190 = vmul.f32 %v170, %v175
  %v191 = vmul.f32 %v171, %v175
  %v192 = vmul.f32 %v172, %v175
  %v193 = vld [vmem:[%s2] sm:$0x1]
  %v195 = vperm.slane %v193, 0
  %v197 = vadd.f32 %v177, %v195
  %v198 = vadd.f32 %v178, %v195
  %v199 = vadd.f32 %v179, %v195
  %v200 = vadd.f32 %v180, %v195
  %v201 = vadd.f32 %v181, %v195
  %v202 = vadd.f32 %v182, %v195
  %v203 = vadd.f32 %v183, %v195
  %v204 = vadd.f32 %v184, %v195
  %v205 = vadd.f32 %v185, %v195
  %v206 = vadd.f32 %v186, %v195
  %v207 = vadd.f32 %v187, %v195
  %v208 = vadd.f32 %v188, %v195
  %v209 = vadd.f32 %v189, %v195
  %v210 = vadd.f32 %v190, %v195
  %v211 = vadd.f32 %v191, %v195
  %v212 = vadd.f32 %v192, %v195
  %213 = vst.msk [vmem:[%s3] sm:$0xff] %vm30, %v197
  %214 = vst.msk [vmem:[%s3 + $0x8] sm:$0xff] %vm30, %v198
  %215 = vst.msk [vmem:[%s3 + $0x10] sm:$0xff] %vm30, %v199
  %216 = vst.msk [vmem:[%s3 + $0x18] sm:$0xff] %vm30, %v200
  %217 = vst.msk [vmem:[%s3 + $0x20] sm:$0xff] %vm30, %v201
  %218 = vst.msk [vmem:[%s3 + $0x28] sm:$0xff] %vm30, %v202
  %219 = vst.msk [vmem:[%s3 + $0x30] sm:$0xff] %vm30, %v203
  %220 = vst.msk [vmem:[%s3 + $0x38] sm:$0xff] %vm30, %v204
  %221 = vst.msk [vmem:[%s3 + $0x40] sm:$0xff] %vm30, %v205
  %222 = vst.msk [vmem:[%s3 + $0x48] sm:$0xff] %vm30, %v206
  %223 = vst.msk [vmem:[%s3 + $0x50] sm:$0xff] %vm30, %v207
  %224 = vst.msk [vmem:[%s3 + $0x58] sm:$0xff] %vm30, %v208
  %225 = vst.msk [vmem:[%s3 + $0x60] sm:$0xff] %vm30, %v209
  %226 = vst.msk [vmem:[%s3 + $0x68] sm:$0xff] %vm30, %v210
  %227 = vst.msk [vmem:[%s3 + $0x70] sm:$0xff] %vm30, %v211
  %228 = vst.msk [vmem:[%s3 + $0x78] sm:$0xff] %vm30, %v212
  // Predicated region
  $region14: #{_lambda_.16} parent=0 // pred_check
    _
  $region15: #{_lambda_.16} parent=0 // pred_check_branch
    %230 = sbr.rel (0) target = $region17
  $region16: #{_lambda_.16} parent=0 // pred_region
    _
  $region17: #{_lambda_.16} parent=0 // pred_fallthru
    _
  // Predicated region
  $region18: #{_lambda_.16} parent=0 // pred_check
    _
  $region19: #{_lambda_.16} parent=0 // pred_check_branch
    %232 = sbr.rel (0) target = $region21
  $region20: #{_lambda_.16} parent=0 // pred_region
    _
  $region21: #{_lambda_.16} parent=0 // pred_fallthru
    _

// kernel: _lambda_.17
$region0: #{_lambda_.17}
  #allocation0 [shape = 'u32[]', space=smem, size = 0x4, offset = 0x4, fixed_abs, tag = 'smem constant byte address 0x4 - core index']
  #allocation1 [shape = 'u32[72,128]{1,0:T(1,128)}', space=vmem, size = 0x9000, scoped, tag = 'internal scratch']
  %s0 = inlined_call_operand.vmem [shape: bf16[2,81,128], index: 0, kind: input, shape index: {}]
  %s1 = inlined_call_operand.vmem [shape: bf16[128,16], index: 1, kind: input, shape index: {}]
  %s2 = inlined_call_operand.vmem [shape: f32[1,16], index: 2, kind: input, shape index: {}]
  %s3 = inlined_call_operand.vmem [shape: f32[2,81,16], index: 3, kind: output, shape index: {}]
  %s4 = sld [smem:[#allocation0]]
  $region45: #{_lambda_.17} parent=0
    _
  %s6 = ssub.s32 1, %s4
  %s7 = scalar_select 0, %s6, %s4
  loop: start=0, step=1, limit=4
  $region2: #{_lambda_.17} parent=0 // loop_pre_header
    _
  $region3: #{_lambda_.17} parent=0 // loop_header
    %s9 = sphi 0, %s13
    %p10 = scmp.ge.s32.totalorder %s9, 4
    %s19 = sphi 0, %s21
    %s22 = sphi 0, %s19
    %s23 = sphi 0, %s22
    %s39 = sphi 0, %s23
    %s43 = sphi 0, %s43
    %s45 = sphi 0, %s43
    %s46 = sphi 0, %s45
    %s60 = sphi 0, %s46
    %s64 = sphi 0, %s64
    %s66 = sphi 0, %s64
    %s67 = sphi 0, %s66
    %s81 = sphi 0, %s67
    %s87 = sphi 0, %s89
    %s90 = sphi 0, %s87
    %s91 = sphi 0, %s90
    %s107 = sphi 0, %s91
  $region4: #{_lambda_.17} parent=0 // loop_header_branch
    %12 = sbr.rel (%p10) target = $region8
  $region5: #{_lambda_.17} parent=0 // loop_body
    %s14 = ssub.s32 %s9, 1
    %s15 = ssub.s32 %s9, 2
    %s16 = sadd.s32 %s9, 1
    %s17 = ssub.s32 %s9, %s16
    %p18 = scmp.eq.s32.totalorder %s17, 0
    %s20 = sadd.s32 %s19, 1
    %s21 = scalar_select %p18, %s19, %s20
    %p24 = pneg %p18
    %p25 = scmp.eq.s32.totalorder %s9, 1
    %p26 = por %p24, %p25
    %p27 = scmp.ne.s32.totalorder %s19, %s22
    %p28 = scmp.eq.s32.totalorder %s9, 0
    %p29 = por %p27, %p28
    %p30 = scmp.ne.s32.totalorder %s19, %s22
    %p31 = scmp.eq.s32.totalorder %s14, 1
    %p32 = por %p30, %p31
    %p33 = scmp.ne.s32.totalorder %s22, %s23
    %p34 = scmp.eq.s32.totalorder %s14, 0
    %p35 = por %p33, %p34
    %p36 = scmp.ne.s32.totalorder %s22, %s23
    %p37 = scmp.eq.s32.totalorder %s15, 1
    %p38 = por %p36, %p37
    %p40 = scmp.ne.s32.totalorder %s23, %s39
    %p41 = scmp.eq.s32.totalorder %s15, 0
    %p42 = por %p40, %p41
    %s44 = sadd.s32 %s43, 1
    %p47 = scmp.eq.s32.totalorder %s9, 1
    %p48 = scmp.ne.s32.totalorder %s43, %s45
    %p49 = scmp.eq.s32.totalorder %s9, 0
    %p50 = por %p48, %p49
    %p51 = scmp.ne.s32.totalorder %s43, %s45
    %p52 = scmp.eq.s32.totalorder %s14, 1
    %p53 = por %p51, %p52
    %p54 = scmp.ne.s32.totalorder %s45, %s46
    %p55 = scmp.eq.s32.totalorder %s14, 0
    %p56 = por %p54, %p55
    %p57 = scmp.ne.s32.totalorder %s45, %s46
    %p58 = scmp.eq.s32.totalorder %s15, 1
    %p59 = por %p57, %p58
    %p61 = scmp.ne.s32.totalorder %s46, %s60
    %p62 = scmp.eq.s32.totalorder %s15, 0
    %p63 = por %p61, %p62
    %s65 = sadd.s32 %s64, 1
    %p68 = scmp.eq.s32.totalorder %s9, 1
    %p69 = scmp.ne.s32.totalorder %s64, %s66
    %p70 = scmp.eq.s32.totalorder %s9, 0
    %p71 = por %p69, %p70
    %p72 = scmp.ne.s32.totalorder %s64, %s66
    %p73 = scmp.eq.s32.totalorder %s14, 1
    %p74 = por %p72, %p73
    %p75 = scmp.ne.s32.totalorder %s66, %s67
    %p76 = scmp.eq.s32.totalorder %s14, 0
    %p77 = por %p75, %p76
    %p78 = scmp.ne.s32.totalorder %s66, %s67
    %p79 = scmp.eq.s32.totalorder %s15, 1
    %p80 = por %p78, %p79
    %p82 = scmp.ne.s32.totalorder %s67, %s81
    %p83 = scmp.eq.s32.totalorder %s15, 0
    %p84 = por %p82, %p83
    %s85 = ssub.s32 %s9, %s16
    %p86 = scmp.eq.s32.totalorder %s85, 0
    %s88 = sadd.s32 %s87, 1
    %s89 = scalar_select %p86, %s87, %s88
    %p92 = pneg %p86
    %p93 = scmp.eq.s32.totalorder %s9, 1
    %p94 = por %p92, %p93
    %p95 = scmp.ne.s32.totalorder %s87, %s90
    %p96 = scmp.eq.s32.totalorder %s9, 0
    %p97 = por %p95, %p96
    %p98 = scmp.ne.s32.totalorder %s87, %s90
    %p99 = scmp.eq.s32.totalorder %s14, 1
    %p100 = por %p98, %p99
    %p101 = scmp.ne.s32.totalorder %s90, %s91
    %p102 = scmp.eq.s32.totalorder %s14, 0
    %p103 = por %p101, %p102
    %p104 = scmp.ne.s32.totalorder %s90, %s91
    %p105 = scmp.eq.s32.totalorder %s15, 1
    %p106 = por %p104, %p105
    %p108 = scmp.ne.s32.totalorder %s91, %s107
    %p109 = scmp.eq.s32.totalorder %s15, 0
    %p110 = por %p108, %p109
    %p111 = scmp.le.s32.totalorder 1, %s9
    %p112 = scmp.lt.s32.totalorder %s9, 3
    %p113 = pnand %p111, %p112
    %p114 = pneg %p113
    // Predicated region
    $region9: #{_lambda_.17} parent=5 // pred_check
      _
    $region10: #{_lambda_.17} parent=5 // pred_check_branch
      %116 = sbr.rel (%p113) target = $region12
    $region11: #{_lambda_.17} parent=5 // pred_region
      %s117 = ssub.s32 %s9, 1
      // Predicated region
      $region13: #{_lambda_.17} parent=11 // pred_check
        %p118 = pneg %p56
      $region14: #{_lambda_.17} parent=11 // pred_check_branch
        %120 = sbr.rel (%p118) target = $region16
      $region15: #{_lambda_.17} parent=11 // pred_region
        _
      $region16: #{_lambda_.17} parent=11 // pred_fallthru
        _
      // Predicated region
      $region17: #{_lambda_.17} parent=11 // pred_check
        %p121 = pneg %p77
      $region18: #{_lambda_.17} parent=11 // pred_check_branch
        %123 = sbr.rel (%p121) target = $region20
      $region19: #{_lambda_.17} parent=11 // pred_region
        _
      $region20: #{_lambda_.17} parent=11 // pred_fallthru
        _
    $region12: #{_lambda_.17} parent=5 // pred_fallthru
      _
    %p124 = scmp.lt.s32.totalorder %s9, 2
    // Predicated region
    $region21: #{_lambda_.17} parent=5 // pred_check
      %p125 = pneg %p124
    $region22: #{_lambda_.17} parent=5 // pred_check_branch
      %127 = sbr.rel (%p125) target = $region24
    $region23: #{_lambda_.17} parent=5 // pred_region
      // Predicated region
      $region25: #{_lambda_.17} parent=23 // pred_check
        %p128 = pneg %p29
      $region26: #{_lambda_.17} parent=23 // pred_check_branch
        %130 = sbr.rel (%p128) target = $region28
      $region27: #{_lambda_.17} parent=23 // pred_region
        %p131 = scmp.lt.s32.totalorder %s9, 1
        %s132 = scalar_select %p131, %s9, 1
        %s133 = smul.addr %s132, 11
        %s134 = smul.addr %s133, 4
        %s135 = scalar_lea.vmem %s0, %s134
      $region28: #{_lambda_.17} parent=23 // pred_fallthru
        _
    $region24: #{_lambda_.17} parent=5 // pred_fallthru
      _
    %p136 = scmp.le.s32.totalorder 1, %s9
    %p137 = scmp.lt.s32.totalorder %s9, 3
    %p138 = pnand %p136, %p137
    %p139 = pneg %p138
    // Predicated region
    $region29: #{_lambda_.17} parent=5 // pred_check
      _
    $region30: #{_lambda_.17} parent=5 // pred_check_branch
      %141 = sbr.rel (%p138) target = $region32
    $region31: #{_lambda_.17} parent=5 // pred_region
      %s142 = ssub.s32 %s9, 1
      %p143 = scmp.lt.s32.totalorder %s14, 1
      %s144 = scalar_select %p143, %s14, 1
      %s145 = smul.addr %s144, 11
      %s146 = smul.addr %s145, 4
      %s147 = scalar_lea.vmem %s0, %s146
      %p148 = pneg %p35
      %p149 = pneg %p32
      %p150 = pneg %p56
      %p151 = pneg %p53
      %p152 = pneg %p77
      %p153 = pneg %p74
      %p154 = pneg %p103
      %p155 = pneg %p100
      %p156 = scmp.lt.s32.totalorder %s14, 1
      %s157 = scalar_select %p156, %s14, 1
      %s158 = smul.addr %s157, 11
      %s159 = smul.addr %s158, 8
      %s160 = scalar_lea.vmem %s3, %s159
      %p161 = scmp.lt.s32.totalorder %s14, 1
      %s162 = scalar_select %p161, %s14, 1
      %s163 = smul.addr %s162, 11
      %s164 = smul.addr %s163, 4
      %s165 = scalar_lea.vmem %s0, %s164
      %p166 = scmp.lt.s32.totalorder %s14, 1
      %s167 = scalar_select %p166, %s14, 1
      %s168 = smul.addr %s167, 11
      %s169 = smul.addr %s168, 8
      %s170 = scalar_lea.vmem %s3, %s169
      %v171 = vld [vmem:[%s165] sm:$0xf]
      %v172 = vld [vmem:[%s165 + $0x4] sm:$0xf]
      %v173 = vld [vmem:[%s165 + $0x8] sm:$0xf]
      %v174 = vld [vmem:[%s165 + $0xc] sm:$0xf]
      %v175 = vld [vmem:[%s165 + $0x10] sm:$0xf]
      %v176 = vld [vmem:[%s165 + $0x14] sm:$0xf]
      %v177 = vld [vmem:[%s165 + $0x18] sm:$0xf]
      %v178 = vld [vmem:[%s165 + $0x1c] sm:$0xf]
      %v179 = vld [vmem:[%s165 + $0x20] sm:$0xf]
      %v180 = vld [vmem:[%s165 + $0x24] sm:$0xf]
      %v181 = vld [vmem:[%s165 + $0x28] sm:$0x1]
      %v182 = vunpack.c.l.bf16 %v171
      %v183 = vunpack.c.l.bf16 %v172
      %v184 = vunpack.c.l.bf16 %v173
      %v185 = vunpack.c.l.bf16 %v174
      %v186 = vunpack.c.l.bf16 %v175
      %v187 = vunpack.c.l.bf16 %v176
      %v188 = vunpack.c.l.bf16 %v177
      %v189 = vunpack.c.l.bf16 %v178
      %v190 = vunpack.c.l.bf16 %v179
      %v191 = vunpack.c.l.bf16 %v180
      %v192 = vunpack.c.l.bf16 %v181
      %v193 = vmax.f32 %v182, 0.0
      %v194 = vmax.f32 %v183, 0.0
      %v195 = vmax.f32 %v184, 0.0
      %v196 = vmax.f32 %v185, 0.0
      %v197 = vmax.f32 %v186, 0.0
      %v198 = vmax.f32 %v187, 0.0
      %v199 = vmax.f32 %v188, 0.0
      %v200 = vmax.f32 %v189, 0.0
      %v201 = vmax.f32 %v190, 0.0
      %v202 = vmax.f32 %v191, 0.0
      %v203 = vmax.f32 %v192, 0.0
      %v204 = vpack.c.bf16 %v194, %v193
      %v205 = vpack.c.bf16 %v196, %v195
      %v206 = vpack.c.bf16 %v198, %v197
      %v207 = vpack.c.bf16 %v200, %v199
      %v208 = vpack.c.bf16 %v202, %v201
      %v209 = vpack.c.bf16 %v203, %v203
      %v210 = vld [vmem:[%s1] sm:$0xf]
      %v211 = vld [vmem:[%s1 + $0x4] sm:$0xf]
      %v212 = vld [vmem:[%s1 + $0x8] sm:$0xf]
      %v213 = vld [vmem:[%s1 + $0xc] sm:$0xf]
      %v214 = vld [vmem:[%s1 + $0x10] sm:$0xf]
      %v215 = vld [vmem:[%s1 + $0x14] sm:$0xf]
      %v216 = vld [vmem:[%s1 + $0x18] sm:$0xf]
      %v217 = vld [vmem:[%s1 + $0x1c] sm:$0xf]
      %v218 = vld [vmem:[%s1 + $0x20] sm:$0xf]
      %v219 = vld [vmem:[%s1 + $0x24] sm:$0xf]
      %v220 = vld [vmem:[%s1 + $0x28] sm:$0xf]
      %v221 = vld [vmem:[%s1 + $0x2c] sm:$0xf]
      %v222 = vld [vmem:[%s1 + $0x30] sm:$0xf]
      %v223 = vld [vmem:[%s1 + $0x34] sm:$0xf]
      %v224 = vld [vmem:[%s1 + $0x38] sm:$0xf]
      %v225 = vld [vmem:[%s1 + $0x3c] sm:$0xf]
      %v226 = vld [vmem:[%s2] sm:$0x1]
      %v228 = vperm.slane %v226, 0
      %v246 = vunpack.c.l.b16 %v210
      %v247 = vunpack.c.l.b16 %v211
      %v248 = vunpack.c.l.b16 %v212
      %v249 = vunpack.c.l.b16 %v213
      %v250 = vunpack.c.l.b16 %v214
      %v251 = vunpack.c.l.b16 %v215
      %v252 = vunpack.c.l.b16 %v216
      %v253 = vunpack.c.l.b16 %v217
      %v254 = vunpack.c.l.b16 %v218
      %v255 = vunpack.c.l.b16 %v219
      %v256 = vunpack.c.l.b16 %v220
      %v257 = vunpack.c.l.b16 %v221
      %v258 = vunpack.c.l.b16 %v222
      %v259 = vunpack.c.l.b16 %v223
      %v260 = vunpack.c.l.b16 %v224
      %v261 = vunpack.c.l.b16 %v225
      %v262 = vpack.c.b16 %v247, %v246
      %v263 = vpack.c.b16 %v249, %v248
      %v264 = vpack.c.b16 %v251, %v250
      %v265 = vpack.c.b16 %v253, %v252
      %v266 = vpack.c.b16 %v255, %v254
      %v267 = vpack.c.b16 %v257, %v256
      %v268 = vpack.c.b16 %v259, %v258
      %v269 = vpack.c.b16 %v261, %v260
      %278 = vmatpush.bf16.msra.mxu0 %v269
      %279 = vmatpush.bf16.msra.mxu0 %v268
      %280 = vmatpush.bf16.msra.mxu0 %v267
      %281 = vmatpush.bf16.msra.mxu0 %v266
      %282 = vmatpush.bf16.msra.mxu0 %v265
      %283 = vmatpush.bf16.msra.mxu0 %v264
      %284 = vmatpush.bf16.msra.mxu0 %v263
      %285 = vmatpush.bf16.msra.mxu0 %v262
      %286 = vmatmul.bf16.gmra.mxu0 %v204
      %v287 = vpop.f32.mrf.mxu0
      %v288 = vadd.f32 %v228, %v287
      %v289 = vpop.f32.mrf.mxu0
      %v290 = vadd.f32 %v228, %v289
      %291 = vmatmul.bf16.gmra.mxu0 %v205
      %v292 = vpop.f32.mrf.mxu0
      %v293 = vadd.f32 %v228, %v292
      %v294 = vpop.f32.mrf.mxu0
      %v295 = vadd.f32 %v228, %v294
      %296 = vmatmul.bf16.gmra.mxu0 %v206
      %v297 = vpop.f32.mrf.mxu0
      %v298 = vadd.f32 %v228, %v297
      %v299 = vpop.f32.mrf.mxu0
      %v300 = vadd.f32 %v228, %v299
      %301 = vmatmul.bf16.gmra.mxu0 %v207
      %v302 = vpop.f32.mrf.mxu0
      %v303 = vadd.f32 %v228, %v302
      %v304 = vpop.f32.mrf.mxu0
      %v305 = vadd.f32 %v228, %v304
      %306 = vmatmul.bf16.gmra.mxu0 %v208
      %v307 = vpop.f32.mrf.mxu0
      %v308 = vadd.f32 %v228, %v307
      %v309 = vpop.f32.mrf.mxu0
      %v310 = vadd.f32 %v228, %v309
      %311 = vmatmul.bf16.gmra.mxu0 %v209
      %v312 = vpop.f32.mrf.mxu0
      %v313 = vadd.f32 %v228, %v312
      %v314 = vpop.f32.mrf.mxu0
      %315 = vdwg.mxu0
      %v316 = vtanh.pop %v288
      %v317 = vtanh.pop %v290
      %v318 = vtanh.pop %v293
      %v319 = vtanh.pop %v295
      %v320 = vtanh.pop %v298
      %v321 = vtanh.pop %v300
      %v322 = vtanh.pop %v303
      %v323 = vtanh.pop %v305
      %v324 = vtanh.pop %v308
      %v325 = vtanh.pop %v310
      %v326 = vtanh.pop %v313
      %vm327 = vcmask 130048
      %328 = vst.msk [vmem:[%s170] sm:$0xff] %vm327, %v316
      %329 = vst.msk [vmem:[%s170 + $0x8] sm:$0xff] %vm327, %v317
      %330 = vst.msk [vmem:[%s170 + $0x10] sm:$0xff] %vm327, %v318
      %331 = vst.msk [vmem:[%s170 + $0x18] sm:$0xff] %vm327, %v319
      %332 = vst.msk [vmem:[%s170 + $0x20] sm:$0xff] %vm327, %v320
      %333 = vst.msk [vmem:[%s170 + $0x28] sm:$0xff] %vm327, %v321
      %334 = vst.msk [vmem:[%s170 + $0x30] sm:$0xff] %vm327, %v322
      %335 = vst.msk [vmem:[%s170 + $0x38] sm:$0xff] %vm327, %v323
      %336 = vst.msk [vmem:[%s170 + $0x40] sm:$0xff] %vm327, %v324
      %337 = vst.msk [vmem:[%s170 + $0x48] sm:$0xff] %vm327, %v325
      %vm338 = vcmask 122880
      %339 = vst.msk [vmem:[%s170 + $0x50] sm:$0x1] %vm338, %v326
      %p340 = scmp.lt.s32.totalorder %s14, 1
      %s341 = scalar_select %p340, %s14, 1
      %s342 = smul.addr %s341, 11
      %s343 = smul.addr %s342, 8
      %s344 = scalar_lea.vmem %s3, %s343
      // Predicated region
      $region33: #{_lambda_.17} parent=31 // pred_check
        %p345 = pneg %p100
      $region34: #{_lambda_.17} parent=31 // pred_check_branch
        %347 = sbr.rel (%p345) target = $region36
      $region35: #{_lambda_.17} parent=31 // pred_region
        _
      $region36: #{_lambda_.17} parent=31 // pred_fallthru
        _
    $region32: #{_lambda_.17} parent=5 // pred_fallthru
      _
    %p348 = scmp.le.s32.totalorder 2, %s9
    // Predicated region
    $region37: #{_lambda_.17} parent=5 // pred_check
      %p349 = pneg %p348
    $region38: #{_lambda_.17} parent=5 // pred_check_branch
      %351 = sbr.rel (%p349) target = $region40
    $region39: #{_lambda_.17} parent=5 // pred_region
      %s352 = ssub.s32 %s9, 2
      // Predicated region
      $region41: #{_lambda_.17} parent=39 // pred_check
        %p353 = pneg %p106
      $region42: #{_lambda_.17} parent=39 // pred_check_branch
        %355 = sbr.rel (%p353) target = $region44
      $region43: #{_lambda_.17} parent=39 // pred_region
        %p356 = scmp.lt.s32.totalorder %s15, 1
        %s357 = scalar_select %p356, %s15, 1
        %s358 = smul.addr %s357, 11
        %s359 = smul.addr %s358, 8
        %s360 = scalar_lea.vmem %s3, %s359
      $region44: #{_lambda_.17} parent=39 // pred_fallthru
        _
    $region40: #{_lambda_.17} parent=5 // pred_fallthru
      _
  $region6: #{_lambda_.17} parent=0 // loop_footer
    %s13 = sadd.s32 1, %s9
  $region7: #{_lambda_.17} parent=0 // loop_footer_branch
    %8 = sbr.rel target = $region3
  $region8: #{_lambda_.17} parent=0 // loop_exit
    _

</llo_original>
